<compile_context>
chip_gen: v5e
topology: v5e:2x2
jax: 0.10.0
libtpu: 0.0.40
codegen_flags: <defaults>
</compile_context>

<pallas_src>
import functools

import jax
import jax.numpy as jnp
from jax import lax
from jax.experimental import pallas as pl
from jax.experimental.pallas import tpu as pltpu


def _asa_flash_kernel(xq_ref, xkv_ref,
                      wqa_ref, bqa_ref,
                      wkv_ref, bkv_ref,
                      o_ref,
                      q_scr, anc_scr, m_scr, l_scr, acc_scr):
    # xq_ref : (1, tq, CP)   q-side x tile (resident across the kv axis)
    # xkv_ref: (1, tk, CP)   kv-side x tile (streamed along the kv axis)
    # wqa_ref: (CP, 2CP) bf16 = [Wq | Wa]     bqa_ref: (1, 2CP) f32
    # wkv_ref: (CP, 2CP) bf16 = [Wk | Wv]     bkv_ref: (1, 2CP) f32
    CP = wkv_ref.shape[0]
    kv = pl.program_id(2)

    @pl.when(kv == 0)
    def _init():
        # fused q/anchor projection of the q tile (one MXU matmul per q tile)
        xq = xq_ref[0].astype(jnp.bfloat16)                       # (tq, CP)
        qa = jnp.dot(xq, wqa_ref[...],
                     preferred_element_type=jnp.float32) + bqa_ref[...]
        q_scr[...] = qa[:, :CP].astype(jnp.bfloat16)              # q, bf16
        anc_scr[...] = qa[:, CP:]                                 # anchor, f32
        m_scr[...] = jnp.full(m_scr.shape, -jnp.inf, jnp.float32)
        l_scr[...] = jnp.zeros(l_scr.shape, jnp.float32)
        acc_scr[...] = jnp.zeros(acc_scr.shape, jnp.float32)

    # fused k/v projection of the streamed kv tile (one MXU matmul per step)
    xkv = xkv_ref[0].astype(jnp.bfloat16)                         # (tk, CP)
    kvp = jnp.dot(xkv, wkv_ref[...],
                  preferred_element_type=jnp.float32) + bkv_ref[...]
    k = kvp[:, :CP].astype(jnp.bfloat16)                          # (tk, CP)
    v = kvp[:, CP:].astype(jnp.bfloat16)                          # (tk, CP)

    # scores: contract last dims -> (tq, tk); no transpose materialized
    q = q_scr[...]
    s = lax.dot_general(q, k, (((1,), (1,)), ((), ())),
                        preferred_element_type=jnp.float32)

    # online softmax (f32 math on VPU/EUP)
    m_prev = m_scr[...]
    m_new = jnp.maximum(m_prev, jnp.max(s, axis=-1, keepdims=True))
    alpha = jnp.exp(m_prev - m_new)
    p = jnp.exp(s - m_new)
    l_scr[...] = alpha * l_scr[...] + jnp.sum(p, axis=-1, keepdims=True)
    acc_scr[...] = alpha * acc_scr[...] + jnp.dot(
        p.astype(jnp.bfloat16), v, preferred_element_type=jnp.float32)
    m_scr[...] = m_new

    @pl.when(kv == pl.num_programs(2) - 1)
    def _finalize():
        inv_l = pl.reciprocal(l_scr[...], approx=True)            # EUP vrcp
        out = xq_ref[0].astype(jnp.float32) + acc_scr[...] * inv_l + anc_scr[...]
        o_ref[0] = out.astype(o_ref.dtype)


def _pick_tile(n):
    """Largest of {512, 256, 128} that divides n, else the whole axis."""
    for t in (512, 256, 128):
        if n % t == 0:
            return t
    # TODO(synk): add kv masking for ragged N instead of one monolithic tile.
    return n


@functools.partial(jax.jit, static_argnames=())
def _identity(x):  # helper to keep wrapper jit-free but inputs on device
    return x


def anchored_self_attention(x_nchw, params):
    """x_nchw: (B, C, H, W) float32.  params: dict of (C,C) weights / (C,) biases."""
    B, C, H, W = x_nchw.shape
    N = H * W
    CP = ((C + 127) // 128) * 128          # lane-dense channel padding

    # NCHW -> (B, N, C) -> pad channels to CP.
    # TODO(synk): if the surrounding graph can carry (B, N, C) natively, drop
    # these two transposes to avoid the extra HBM round trips.
    x_bnc = jnp.transpose(x_nchw.reshape(B, C, N), (0, 2, 1))
    if CP != C:
        x_bnc = jnp.pad(x_bnc, ((0, 0), (0, 0), (0, CP - C)))

    def pad_w(w):  # conv weight (C_out, C_in) -> (CP_in, CP_out) so y = x @ W
        return jnp.pad(w.T, ((0, CP - C), (0, CP - C)))

    def pad_b(b):
        return jnp.pad(b, (0, CP - C))

    # Fused projection weights: [Wq | Wa] for the q tile, [Wk | Wv] for the kv
    # tile.  bf16 operands into the MXU, f32 biases added after accumulation.
    w_qa = jnp.concatenate([pad_w(params["wq"]), pad_w(params["wa"])],
                           axis=1).astype(jnp.bfloat16)            # (CP, 2CP)
    w_kv = jnp.concatenate([pad_w(params["wk"]), pad_w(params["wv"])],
                           axis=1).astype(jnp.bfloat16)            # (CP, 2CP)
    b_qa = jnp.concatenate([pad_b(params["bq"]), pad_b(params["ba"])]
                           ).reshape(1, 2 * CP).astype(jnp.float32)
    b_kv = jnp.concatenate([pad_b(params["bk"]), pad_b(params["bv"])]
                           ).reshape(1, 2 * CP).astype(jnp.float32)

    tq = _pick_tile(N)
    tk = _pick_tile(N)
    grid = (B, N // tq, N // tk)

    xq_spec = pl.BlockSpec((1, tq, CP), lambda b, qi, ki: (b, qi, 0))
    # kv tiles stream along the last grid axis; default double-buffering.
    # (Raise to pl.Buffered(3) only if a profile shows exposed DMA.)
    xkv_spec = pl.BlockSpec((1, tk, CP), lambda b, qi, ki: (b, ki, 0))
    w_spec = pl.BlockSpec((CP, 2 * CP), lambda b, qi, ki: (0, 0))
    bias_spec = pl.BlockSpec((1, 2 * CP), lambda b, qi, ki: (0, 0))
    out_spec = pl.BlockSpec((1, tq, CP), lambda b, qi, ki: (b, qi, 0))

    out_bnc = pl.pallas_call(
        _asa_flash_kernel,
        out_shape=jax.ShapeDtypeStruct((B, N, CP), x_nchw.dtype),
        grid=grid,
        in_specs=[xq_spec, xkv_spec,
                  w_spec, bias_spec,
                  w_spec, bias_spec],
        out_specs=out_spec,
        scratch_shapes=[
            pltpu.VMEM((tq, CP), jnp.bfloat16),   # q (bf16, fed to MXU)
            pltpu.VMEM((tq, CP), jnp.float32),    # anchor
            pltpu.VMEM((tq, 1), jnp.float32),     # running max m
            pltpu.VMEM((tq, 1), jnp.float32),     # running sum l
            pltpu.VMEM((tq, CP), jnp.float32),    # output accumulator
        ],
        compiler_params=pltpu.CompilerParams(
            dimension_semantics=("parallel", "parallel", "arbitrary"),
            vmem_limit_bytes=32 * 1024 * 1024),
    )(x_bnc, x_bnc, w_qa, b_qa, w_kv, b_kv)

    # (B, N, CP) -> drop channel padding -> NCHW
    out_bnc = out_bnc[:, :, :C]
    return jnp.transpose(out_bnc, (0, 2, 1)).reshape(B, C, H, W)


def _reference(x_nchw, params):
    """Pure-JAX f32 reference mirroring the PyTorch forward exactly."""
    B, C, H, W = x_nchw.shape
    N = H * W

    def conv1x1(x, w, b):  # w: (C_out, C_in), b: (C_out,)
        return jnp.einsum("bchw,oc->bohw", x, w) + b[None, :, None, None]

    q = conv1x1(x_nchw, params["wq"], params["bq"]).reshape(B, C, N)
    k = conv1x1(x_nchw, params["wk"], params["bk"]).reshape(B, C, N)
    v = conv1x1(x_nchw, params["wv"], params["bv"]).reshape(B, C, N)
    anc = conv1x1(x_nchw, params["wa"], params["ba"])

    attn = jnp.einsum("bcn,bcm->bnm", q, k)                # (B, N, N)
    attn = jax.nn.softmax(attn, axis=-1)
    attended = jnp.einsum("bnm,bcm->bnc", attn, v)         # (B, N, C)
    attended = jnp.transpose(attended, (0, 2, 1)).reshape(B, C, H, W)
    return x_nchw + attended + anc


if __name__ == "__main__":
    key = jax.random.PRNGKey(0)
    B, C, H, W = 2, 4, 16, 16        # N = 256 -> tq = tk = 128, grid (2,2,2)

    keys = jax.random.split(key, 9)
    x = jax.random.normal(keys[0], (B, C, H, W), dtype=jnp.float32)
    params = {
        "wq": jax.random.normal(keys[1], (C, C), dtype=jnp.float32) * 0.1,
        "bq": jax.random.normal(keys[2], (C,), dtype=jnp.float32) * 0.1,
        "wk": jax.random.normal(keys[3], (C, C), dtype=jnp.float32) * 0.1,
        "bk": jax.random.normal(keys[4], (C,), dtype=jnp.float32) * 0.1,
        "wv": jax.random.normal(keys[5], (C, C), dtype=jnp.float32) * 0.1,
        "bv": jax.random.normal(keys[6], (C,), dtype=jnp.float32) * 0.1,
        "wa": jax.random.normal(keys[7], (C, C), dtype=jnp.float32) * 0.1,
        "ba": jax.random.normal(keys[8], (C,), dtype=jnp.float32) * 0.1,
    }

    out = anchored_self_attention(x, params)
    out = jax.block_until_ready(out)

    ref = _reference(x, params)
    assert out.shape == x.shape
    # bf16 MXU operands -> compare at bf16-level tolerance
    assert jnp.allclose(out, ref, atol=3e-2, rtol=3e-2), "mismatch vs reference"

    print("KERNEL_OK")
</pallas_src>

<mosaic_0001>
module attributes {stable_mosaic.version = 11 : i64} {
  func.func @_asa_flash_kernel(%arg0: i32, %arg1: i32, %arg2: i32, %arg3: memref<1x256x128xf32, #tpu.memory_space<vmem>>, %arg4: memref<1x256x128xf32, #tpu.memory_space<vmem>>, %arg5: memref<128x256xbf16, #tpu.memory_space<vmem>>, %arg6: memref<1x256xf32, #tpu.memory_space<vmem>>, %arg7: memref<128x256xbf16, #tpu.memory_space<vmem>>, %arg8: memref<1x256xf32, #tpu.memory_space<vmem>>, %arg9: memref<1x256x128xf32, #tpu.memory_space<vmem>>, %arg10: memref<256x128xbf16, #tpu.memory_space<vmem>>, %arg11: memref<256x128xf32, #tpu.memory_space<vmem>>, %arg12: memref<256x1xf32, #tpu.memory_space<vmem>>, %arg13: memref<256x1xf32, #tpu.memory_space<vmem>>, %arg14: memref<256x128xf32, #tpu.memory_space<vmem>>) attributes {dimension_semantics = [#tpu.dimension_semantics<parallel>, #tpu.dimension_semantics<parallel>, #tpu.dimension_semantics<arbitrary>], iteration_bounds = array<i64: 2, 1, 1>, scalar_prefetch = 0 : i64, scratch_operands = 5 : i64, tpu.core_type = #tpu.core_type<tc>, window_params = [{transform_indices = @transform_0, window_bounds = array<i64: 1, 256, 128>}, {transform_indices = @transform_1, window_bounds = array<i64: 1, 256, 128>}, {pipeline_mode = #tpu.pipeline_mode<synchronous>, transform_indices = @transform_2, window_bounds = array<i64: 128, 256>}, {pipeline_mode = #tpu.pipeline_mode<synchronous>, transform_indices = @transform_3, window_bounds = array<i64: 1, 256>}, {pipeline_mode = #tpu.pipeline_mode<synchronous>, transform_indices = @transform_4, window_bounds = array<i64: 128, 256>}, {pipeline_mode = #tpu.pipeline_mode<synchronous>, transform_indices = @transform_5, window_bounds = array<i64: 1, 256>}, {transform_indices = @transform_6, window_bounds = array<i64: 1, 256, 128>}]} {
    %c0_i32 = arith.constant 0 : i32
    %0 = arith.cmpi eq, %arg2, %c0_i32 : i32
    %1 = arith.extui %0 : i1 to i32
    %c0_i32_0 = arith.constant 0 : i32
    %2 = arith.cmpi ne, %1, %c0_i32_0 : i32
    scf.if %2 {
      %c0_27 = arith.constant 0 : index
      %c0_28 = arith.constant 0 : index
      %c0_29 = arith.constant 0 : index
      %43 = vector.load %arg3[%c0_27, %c0_28, %c0_29] : memref<1x256x128xf32, #tpu.memory_space<vmem>>, vector<1x256x128xf32>
      %44 = vector.shape_cast %43 : vector<1x256x128xf32> to vector<256x128xf32>
      %45 = arith.truncf %44 : vector<256x128xf32> to vector<256x128xbf16>
      %c0_30 = arith.constant 0 : index
      %c0_31 = arith.constant 0 : index
      %46 = vector.load %arg5[%c0_30, %c0_31] : memref<128x256xbf16, #tpu.memory_space<vmem>>, vector<128x256xbf16>
      %cst_32 = arith.constant dense<0.000000e+00> : vector<256x256xf32>
      %47 = tpu.matmul %45, %46, %cst_32 {dimension_numbers = #tpu.dot_dimension_numbers<[1], [0], [0], [1], [0, 0, 1, 1], [], []>} : vector<256x128xbf16>, vector<128x256xbf16>, vector<256x256xf32> -> vector<256x256xf32>
      %c0_33 = arith.constant 0 : index
      %c0_34 = arith.constant 0 : index
      %48 = vector.load %arg6[%c0_33, %c0_34] : memref<1x256xf32, #tpu.memory_space<vmem>>, vector<1x256xf32>
      %49 = vector.broadcast %48 : vector<1x256xf32> to vector<256x256xf32>
      %50 = arith.addf %47, %49 : vector<256x256xf32>
      %51 = vector.extract_strided_slice %50 {offsets = [0, 0], sizes = [256, 128], strides = [1, 1]} : vector<256x256xf32> to vector<256x128xf32>
      %52 = arith.truncf %51 : vector<256x128xf32> to vector<256x128xbf16>
      %c0_35 = arith.constant 0 : index
      %c0_36 = arith.constant 0 : index
      %53 = vector.load %arg10[%c0_35, %c0_36] : memref<256x128xbf16, #tpu.memory_space<vmem>>, vector<256x128xbf16>
      tpu.vector_store %arg10[%c0_35, %c0_36], %52 {strides = array<i32>} : memref<256x128xbf16, #tpu.memory_space<vmem>>, vector<256x128xbf16>,
      %54 = vector.extract_strided_slice %50 {offsets = [0, 128], sizes = [256, 128], strides = [1, 1]} : vector<256x256xf32> to vector<256x128xf32>
      %c0_37 = arith.constant 0 : index
      %c0_38 = arith.constant 0 : index
      %55 = vector.load %arg11[%c0_37, %c0_38] : memref<256x128xf32, #tpu.memory_space<vmem>>, vector<256x128xf32>
      tpu.vector_store %arg11[%c0_37, %c0_38], %54 {strides = array<i32>} : memref<256x128xf32, #tpu.memory_space<vmem>>, vector<256x128xf32>,
      %cst_39 = arith.constant 0xFF800000 : f32
      %56 = vector.broadcast %cst_39 : f32 to vector<256x1xf32>
      %c0_40 = arith.constant 0 : index
      %c0_41 = arith.constant 0 : index
      %57 = vector.load %arg12[%c0_40, %c0_41] : memref<256x1xf32, #tpu.memory_space<vmem>>, vector<256x1xf32>
      tpu.vector_store %arg12[%c0_40, %c0_41], %56 {strides = array<i32>} : memref<256x1xf32, #tpu.memory_space<vmem>>, vector<256x1xf32>,
      %cst_42 = arith.constant 0.000000e+00 : f32
      %58 = vector.broadcast %cst_42 : f32 to vector<256x1xf32>
      %c0_43 = arith.constant 0 : index
      %c0_44 = arith.constant 0 : index
      %59 = vector.load %arg13[%c0_43, %c0_44] : memref<256x1xf32, #tpu.memory_space<vmem>>, vector<256x1xf32>
      tpu.vector_store %arg13[%c0_43, %c0_44], %58 {strides = array<i32>} : memref<256x1xf32, #tpu.memory_space<vmem>>, vector<256x1xf32>,
      %cst_45 = arith.constant 0.000000e+00 : f32
      %60 = vector.broadcast %cst_45 : f32 to vector<256x128xf32>
      %c0_46 = arith.constant 0 : index
      %c0_47 = arith.constant 0 : index
      %61 = vector.load %arg14[%c0_46, %c0_47] : memref<256x128xf32, #tpu.memory_space<vmem>>, vector<256x128xf32>
      tpu.vector_store %arg14[%c0_46, %c0_47], %60 {strides = array<i32>} : memref<256x128xf32, #tpu.memory_space<vmem>>, vector<256x128xf32>,
    } else {
    }
    %c0 = arith.constant 0 : index
    %c0_1 = arith.constant 0 : index
    %c0_2 = arith.constant 0 : index
    %3 = vector.load %arg4[%c0, %c0_1, %c0_2] : memref<1x256x128xf32, #tpu.memory_space<vmem>>, vector<1x256x128xf32>
    %4 = vector.shape_cast %3 : vector<1x256x128xf32> to vector<256x128xf32>
    %5 = arith.truncf %4 : vector<256x128xf32> to vector<256x128xbf16>
    %c0_3 = arith.constant 0 : index
    %c0_4 = arith.constant 0 : index
    %6 = vector.load %arg7[%c0_3, %c0_4] : memref<128x256xbf16, #tpu.memory_space<vmem>>, vector<128x256xbf16>
    %cst = arith.constant dense<0.000000e+00> : vector<256x256xf32>
    %7 = tpu.matmul %5, %6, %cst {dimension_numbers = #tpu.dot_dimension_numbers<[1], [0], [0], [1], [0, 0, 1, 1], [], []>} : vector<256x128xbf16>, vector<128x256xbf16>, vector<256x256xf32> -> vector<256x256xf32>
    %c0_5 = arith.constant 0 : index
    %c0_6 = arith.constant 0 : index
    %8 = vector.load %arg8[%c0_5, %c0_6] : memref<1x256xf32, #tpu.memory_space<vmem>>, vector<1x256xf32>
    %9 = vector.broadcast %8 : vector<1x256xf32> to vector<256x256xf32>
    %10 = arith.addf %7, %9 : vector<256x256xf32>
    %11 = vector.extract_strided_slice %10 {offsets = [0, 0], sizes = [256, 128], strides = [1, 1]} : vector<256x256xf32> to vector<256x128xf32>
    %12 = arith.truncf %11 : vector<256x128xf32> to vector<256x128xbf16>
    %13 = vector.extract_strided_slice %10 {offsets = [0, 128], sizes = [256, 128], strides = [1, 1]} : vector<256x256xf32> to vector<256x128xf32>
    %14 = arith.truncf %13 : vector<256x128xf32> to vector<256x128xbf16>
    %c0_7 = arith.constant 0 : index
    %c0_8 = arith.constant 0 : index
    %15 = vector.load %arg10[%c0_7, %c0_8] : memref<256x128xbf16, #tpu.memory_space<vmem>>, vector<256x128xbf16>
    %cst_9 = arith.constant dense<0.000000e+00> : vector<256x256xf32>
    %16 = tpu.matmul %15, %12, %cst_9 {dimension_numbers = #tpu.dot_dimension_numbers<[1], [1], [0], [0], [0, 0, 1, 0], [], []>} : vector<256x128xbf16>, vector<256x128xbf16>, vector<256x256xf32> -> vector<256x256xf32>
    %c0_10 = arith.constant 0 : index
    %c0_11 = arith.constant 0 : index
    %17 = vector.load %arg12[%c0_10, %c0_11] : memref<256x1xf32, #tpu.memory_space<vmem>>, vector<256x1xf32>
    %cst_12 = arith.constant dense<0xFF800000> : vector<256xf32>
    %18 = vector.multi_reduction <maximumf>, %16, %cst_12 [1] : vector<256x256xf32> to vector<256xf32>
    %19 = vector.shape_cast %18 : vector<256xf32> to vector<256x1xf32>
    %20 = arith.maximumf %17, %19 : vector<256x1xf32>
    %21 = arith.subf %17, %20 : vector<256x1xf32>
    %22 = math.exp %21 : vector<256x1xf32>
    %23 = vector.broadcast %20 : vector<256x1xf32> to vector<256x256xf32>
    %24 = arith.subf %16, %23 : vector<256x256xf32>
    %25 = math.exp %24 : vector<256x256xf32>
    %c0_13 = arith.constant 0 : index
    %c0_14 = arith.constant 0 : index
    %26 = vector.load %arg13[%c0_13, %c0_14] : memref<256x1xf32, #tpu.memory_space<vmem>>, vector<256x1xf32>
    %27 = arith.mulf %22, %26 : vector<256x1xf32>
    %cst_15 = arith.constant dense<0.000000e+00> : vector<256xf32>
    %28 = vector.multi_reduction <add>, %25, %cst_15 [1] : vector<256x256xf32> to vector<256xf32>
    %29 = vector.shape_cast %28 : vector<256xf32> to vector<256x1xf32>
    %30 = arith.addf %27, %29 : vector<256x1xf32>
    %c0_16 = arith.constant 0 : index
    %c0_17 = arith.constant 0 : index
    %31 = vector.load %arg13[%c0_16, %c0_17] : memref<256x1xf32, #tpu.memory_space<vmem>>, vector<256x1xf32>
    tpu.vector_store %arg13[%c0_16, %c0_17], %30 {strides = array<i32>} : memref<256x1xf32, #tpu.memory_space<vmem>>, vector<256x1xf32>,
    %c0_18 = arith.constant 0 : index
    %c0_19 = arith.constant 0 : index
    %32 = vector.load %arg14[%c0_18, %c0_19] : memref<256x128xf32, #tpu.memory_space<vmem>>, vector<256x128xf32>
    %33 = vector.broadcast %22 : vector<256x1xf32> to vector<256x128xf32>
    %34 = arith.mulf %33, %32 : vector<256x128xf32>
    %35 = arith.truncf %25 : vector<256x256xf32> to vector<256x256xbf16>
    %cst_20 = arith.constant dense<0.000000e+00> : vector<256x128xf32>
    %36 = tpu.matmul %35, %14, %cst_20 {dimension_numbers = #tpu.dot_dimension_numbers<[1], [0], [0], [1], [0, 0, 1, 1], [], []>} : vector<256x256xbf16>, vector<256x128xbf16>, vector<256x128xf32> -> vector<256x128xf32>
    %37 = arith.addf %34, %36 : vector<256x128xf32>
    %c0_21 = arith.constant 0 : index
    %c0_22 = arith.constant 0 : index
    %38 = vector.load %arg14[%c0_21, %c0_22] : memref<256x128xf32, #tpu.memory_space<vmem>>, vector<256x128xf32>
    tpu.vector_store %arg14[%c0_21, %c0_22], %37 {strides = array<i32>} : memref<256x128xf32, #tpu.memory_space<vmem>>, vector<256x128xf32>,
    %c0_23 = arith.constant 0 : index
    %c0_24 = arith.constant 0 : index
    %39 = vector.load %arg12[%c0_23, %c0_24] : memref<256x1xf32, #tpu.memory_space<vmem>>, vector<256x1xf32>
    tpu.vector_store %arg12[%c0_23, %c0_24], %20 {strides = array<i32>} : memref<256x1xf32, #tpu.memory_space<vmem>>, vector<256x1xf32>,
    %c0_i32_25 = arith.constant 0 : i32
    %40 = arith.cmpi eq, %arg2, %c0_i32_25 : i32
    %41 = arith.extui %40 : i1 to i32
    %c0_i32_26 = arith.constant 0 : i32
    %42 = arith.cmpi ne, %41, %c0_i32_26 : i32
    scf.if %42 {
      %c0_27 = arith.constant 0 : index
      %c0_28 = arith.constant 0 : index
      %43 = vector.load %arg13[%c0_27, %c0_28] : memref<256x1xf32, #tpu.memory_space<vmem>>, vector<256x1xf32>
      %44 = tpu.reciprocal %43 {approx = true} : vector<256x1xf32> -> vector<256x1xf32>
      %c0_29 = arith.constant 0 : index
      %c0_30 = arith.constant 0 : index
      %c0_31 = arith.constant 0 : index
      %45 = vector.load %arg3[%c0_29, %c0_30, %c0_31] : memref<1x256x128xf32, #tpu.memory_space<vmem>>, vector<1x256x128xf32>
      %46 = vector.shape_cast %45 : vector<1x256x128xf32> to vector<256x128xf32>
      %c0_32 = arith.constant 0 : index
      %c0_33 = arith.constant 0 : index
      %47 = vector.load %arg14[%c0_32, %c0_33] : memref<256x128xf32, #tpu.memory_space<vmem>>, vector<256x128xf32>
      %48 = vector.broadcast %44 : vector<256x1xf32> to vector<256x128xf32>
      %49 = arith.mulf %47, %48 : vector<256x128xf32>
      %50 = arith.addf %46, %49 : vector<256x128xf32>
      %c0_34 = arith.constant 0 : index
      %c0_35 = arith.constant 0 : index
      %51 = vector.load %arg11[%c0_34, %c0_35] : memref<256x128xf32, #tpu.memory_space<vmem>>, vector<256x128xf32>
      %52 = arith.addf %50, %51 : vector<256x128xf32>
      %c0_36 = arith.constant 0 : index
      %c0_37 = arith.constant 0 : index
      %c0_38 = arith.constant 0 : index
      %53 = vector.load %arg9[%c0_36, %c0_37, %c0_38] : memref<1x256x128xf32, #tpu.memory_space<vmem>>, vector<1x256x128xf32>
      %54 = vector.shape_cast %53 : vector<1x256x128xf32> to vector<256x128xf32>
      %55 = vector.shape_cast %52 : vector<256x128xf32> to vector<1x256x128xf32>
      tpu.vector_store %arg9[%c0_36, %c0_37, %c0_38], %55 {strides = array<i32>} : memref<1x256x128xf32, #tpu.memory_space<vmem>>, vector<1x256x128xf32>,
    } else {
    }
    return
  }
  func.func @transform_0(%arg0: i32, %arg1: i32, %arg2: i32) -> (i32, i32, i32) {
    %c0_i32 = arith.constant 0 : i32
    %c0_i32_0 = arith.constant 0 : i32
    return %arg0, %arg1, %c0_i32 : i32, i32, i32
  }
  func.func @transform_1(%arg0: i32, %arg1: i32, %arg2: i32) -> (i32, i32, i32) {
    %c0_i32 = arith.constant 0 : i32
    %c0_i32_0 = arith.constant 0 : i32
    return %arg0, %arg2, %c0_i32 : i32, i32, i32
  }
  func.func @transform_2(%arg0: i32, %arg1: i32, %arg2: i32) -> (i32, i32) {
    %c0_i32 = arith.constant 0 : i32
    %c0_i32_0 = arith.constant 0 : i32
    %c0_i32_1 = arith.constant 0 : i32
    return %c0_i32, %c0_i32_0 : i32, i32
  }
  func.func @transform_3(%arg0: i32, %arg1: i32, %arg2: i32) -> (i32, i32) {
    %c0_i32 = arith.constant 0 : i32
    %c0_i32_0 = arith.constant 0 : i32
    %c0_i32_1 = arith.constant 0 : i32
    return %c0_i32, %c0_i32_0 : i32, i32
  }
  func.func @transform_4(%arg0: i32, %arg1: i32, %arg2: i32) -> (i32, i32) {
    %c0_i32 = arith.constant 0 : i32
    %c0_i32_0 = arith.constant 0 : i32
    %c0_i32_1 = arith.constant 0 : i32
    return %c0_i32, %c0_i32_0 : i32, i32
  }
  func.func @transform_5(%arg0: i32, %arg1: i32, %arg2: i32) -> (i32, i32) {
    %c0_i32 = arith.constant 0 : i32
    %c0_i32_0 = arith.constant 0 : i32
    %c0_i32_1 = arith.constant 0 : i32
    return %c0_i32, %c0_i32_0 : i32, i32
  }
  func.func @transform_6(%arg0: i32, %arg1: i32, %arg2: i32) -> (i32, i32, i32) {
    %c0_i32 = arith.constant 0 : i32
    %c0_i32_0 = arith.constant 0 : i32
    return %arg0, %arg1, %c0_i32 : i32, i32, i32
  }
}

</mosaic_0001>

<llo_original>
// kernel: tpu_custom_call.1
$region0: #{tpu_custom_call.1}
  #allocation0 [shape = 'u32[]', space=smem, size = 0x4, offset = 0x4, fixed_abs, tag = 'smem constant byte address 0x4 - core index']
  #allocation1 [shape = 'u32[72,128]{1,0:T(1,128)}', space=vmem, size = 0x9000, scoped, tag = 'internal scratch']
  #allocation2 [shape = 'bf16[256,128]{1,0:T(8,128)(2,1)}', space=vmem, size = 0x10000, scoped, tag = 'scratch operand']
  #allocation3 [shape = 'f32[256,128]{1,0:T(8,128)}', space=vmem, size = 0x20000, scoped, tag = 'scratch operand']
  #allocation4 [shape = 'f32[256,1]{1,0:T(8,128)}', space=vmem, size = 0x20000, scoped, tag = 'scratch operand']
  #allocation5 [shape = 'f32[256,1]{1,0:T(8,128)}', space=vmem, size = 0x20000, scoped, tag = 'scratch operand']
  #allocation6 [shape = 'f32[256,128]{1,0:T(8,128)}', space=vmem, size = 0x20000, scoped, tag = 'scratch operand']
  %s0 = inlined_call_operand.hbm [shape: f32[2,256,128], index: 0, kind: input, shape index: {}]
  %s1 = inlined_call_operand.hbm [shape: f32[2,256,128], index: 1, kind: input, shape index: {}]
  %s2 = inlined_call_operand.hbm [shape: bf16[128,256], index: 2, kind: input, shape index: {}]
  %s3 = inlined_call_operand.vmem [shape: f32[1,256], index: 3, kind: input, shape index: {}]
  %s4 = inlined_call_operand.hbm [shape: bf16[128,256], index: 4, kind: input, shape index: {}]
  %s5 = inlined_call_operand.vmem [shape: f32[1,256], index: 5, kind: input, shape index: {}]
  %s6 = inlined_call_operand.hbm [shape: f32[2,256,128], index: 6, kind: output, shape index: {}]
  %s7 = sld [smem:[#allocation0]]
  $region81: #{tpu_custom_call.1} parent=0
    _
  %s9 = ssub.s32 1, %s7
  %s10 = scalar_select 0, %s9, %s7
  $region1: #{tpu_custom_call.1} parent=0
    #allocation7 [shape = 'u8[262144]{0}', space=vmem, size = 0x40000, scoped, tag = 'input window, operand 0']
    #allocation8 [shape = 's32[2]{0}', space=sflag, size = 0x8, scoped, tag = 'scoped memory for tpu_custom_call.1']
    #allocation9 [shape = 's32[2]{0}', space=sflag, size = 0x8, scoped, tag = 'scoped memory for tpu_custom_call.1']
    #allocation10 [shape = 'u8[262144]{0}', space=vmem, size = 0x40000, scoped, tag = 'input window, operand 1']
    #allocation11 [shape = 's32[2]{0}', space=sflag, size = 0x8, scoped, tag = 'scoped memory for tpu_custom_call.1']
    #allocation12 [shape = 'u8[65536]{0}', space=vmem, size = 0x10000, scoped, tag = 'input window, operand 2, single buffered']
    #allocation13 [shape = 'u8[65536]{0}', space=vmem, size = 0x10000, scoped, tag = 'input window, operand 4, single buffered']
    #allocation14 [shape = 's32[1]{0}', space=sflag, size = 0x4, scoped, tag = 'scoped memory for tpu_custom_call.1']
    #allocation15 [shape = 'u8[262144]{0}', space=vmem, size = 0x40000, scoped, tag = 'output window, operand 0']
    %11 = vsyncpa [#allocation8], 0
    %s12 = scalar_lea.sflag [#allocation8], 1
    %13 = vsyncpa %s12, 0
    %14 = vsyncpa [#allocation11], 0
    %s15 = scalar_lea.sflag [#allocation11], 1
    %16 = vsyncpa %s15, 0
    %17 = vsyncpa [#allocation14], 0
    %18 = vsyncpa [#allocation9], 0
    %s19 = scalar_lea.sflag [#allocation9], 1
    %20 = vsyncpa %s19, 0
    loop: start=0, step=1, limit=4
    $region2: #{tpu_custom_call.1} parent=1 // loop_pre_header
      _
    $region3: #{tpu_custom_call.1} parent=1 // loop_header
      %s22 = sphi 0, %s26
      %p23 = scmp.ge.s32.totalorder %s22, 4
      %s29 = sphi 0, %s48
      %s30 = sphi 0, %s44
      %s31 = sphi 0, %s40
      %s32 = sphi 0, %s29
      %s33 = sphi 0, %s30
      %s34 = sphi 0, %s31
      %s35 = sphi 0, %s32
      %s36 = sphi 0, %s33
      %s37 = sphi 0, %s34
      %s53 = sphi 0, %s55
      %s56 = sphi 0, %s53
      %s57 = sphi 0, %s56
      %s73 = sphi 0, %s57
      %s81 = sphi 0, %s83
      %s84 = sphi 0, %s81
      %s85 = sphi 0, %s84
      %s101 = sphi 0, %s85
      %s105 = sphi 0, %s105
      %s107 = sphi 0, %s105
      %s108 = sphi 0, %s107
      %s122 = sphi 0, %s108
      %s126 = sphi 0, %s126
      %s128 = sphi 0, %s126
      %s129 = sphi 0, %s128
      %s143 = sphi 0, %s129
      %s147 = sphi 0, %s147
      %s149 = sphi 0, %s147
      %s150 = sphi 0, %s149
      %s164 = sphi 0, %s150
      %s168 = sphi 0, %s168
      %s170 = sphi 0, %s168
      %s171 = sphi 0, %s170
      %s185 = sphi 0, %s171
      %s193 = sphi 0, %s195
      %s196 = sphi 0, %s193
      %s197 = sphi 0, %s196
      %s213 = sphi 0, %s197
    $region4: #{tpu_custom_call.1} parent=1 // loop_header_branch
      %25 = sbr.rel (%p23) target = $region8
    $region5: #{tpu_custom_call.1} parent=1 // loop_body
      %s27 = ssub.s32 %s22, 1
      %s28 = ssub.s32 %s22, 2
      %s38 = sadd.s32 1, %s31
      %p39 = scmp.ge.s32.totalorder %s38, 1
      %s40 = scalar_select %p39, 0, %s38
      %s41 = sadd.s32 1, %s30
      %s42 = scalar_select %p39, %s41, %s30
      %p43 = scmp.ge.s32.totalorder %s42, 1
      %s44 = scalar_select %p43, 0, %s42
      %s45 = sadd.s32 1, %s29
      %s46 = scalar_select %p43, %s45, %s29
      %p47 = scmp.ge.s32.totalorder %s46, 2
      %s48 = scalar_select %p47, 0, %s46
      %s49 = ssub.s32 %s29, %s48
      %s50 = ssub.s32 %s30, %s44
      %s51 = sor.u32 %s49, %s50
      %p52 = scmp.eq.s32.totalorder %s51, 0
      %s54 = sadd.s32 %s53, 1
      %s55 = scalar_select %p52, %s53, %s54
      %p58 = pneg %p52
      %p59 = scmp.eq.s32.totalorder %s22, 1
      %p60 = por %p58, %p59
      %p61 = scmp.ne.s32.totalorder %s53, %s56
      %p62 = scmp.eq.s32.totalorder %s22, 0
      %p63 = por %p61, %p62
      %p64 = scmp.ne.s32.totalorder %s53, %s56
      %p65 = scmp.eq.s32.totalorder %s27, 1
      %p66 = por %p64, %p65
      %p67 = scmp.ne.s32.totalorder %s56, %s57
      %p68 = scmp.eq.s32.totalorder %s27, 0
      %p69 = por %p67, %p68
      %p70 = scmp.ne.s32.totalorder %s56, %s57
      %p71 = scmp.eq.s32.totalorder %s28, 1
      %p72 = por %p70, %p71
      %p74 = scmp.ne.s32.totalorder %s57, %s73
      %p75 = scmp.eq.s32.totalorder %s28, 0
      %p76 = por %p74, %p75
      %s77 = ssub.s32 %s29, %s48
      %s78 = ssub.s32 %s31, %s40
      %s79 = sor.u32 %s77, %s78
      %p80 = scmp.eq.s32.totalorder %s79, 0
      %s82 = sadd.s32 %s81, 1
      %s83 = scalar_select %p80, %s81, %s82
      %p86 = pneg %p80
      %p87 = scmp.eq.s32.totalorder %s22, 1
      %p88 = por %p86, %p87
      %p89 = scmp.ne.s32.totalorder %s81, %s84
      %p90 = scmp.eq.s32.totalorder %s22, 0
      %p91 = por %p89, %p90
      %p92 = scmp.ne.s32.totalorder %s81, %s84
      %p93 = scmp.eq.s32.totalorder %s27, 1
      %p94 = por %p92, %p93
      %p95 = scmp.ne.s32.totalorder %s84, %s85
      %p96 = scmp.eq.s32.totalorder %s27, 0
      %p97 = por %p95, %p96
      %p98 = scmp.ne.s32.totalorder %s84, %s85
      %p99 = scmp.eq.s32.totalorder %s28, 1
      %p100 = por %p98, %p99
      %p102 = scmp.ne.s32.totalorder %s85, %s101
      %p103 = scmp.eq.s32.totalorder %s28, 0
      %p104 = por %p102, %p103
      %s106 = sadd.s32 %s105, 1
      %p109 = scmp.eq.s32.totalorder %s22, 1
      %p110 = scmp.ne.s32.totalorder %s105, %s107
      %p111 = scmp.eq.s32.totalorder %s22, 0
      %p112 = por %p110, %p111
      %p113 = scmp.ne.s32.totalorder %s105, %s107
      %p114 = scmp.eq.s32.totalorder %s27, 1
      %p115 = por %p113, %p114
      %p116 = scmp.ne.s32.totalorder %s107, %s108
      %p117 = scmp.eq.s32.totalorder %s27, 0
      %p118 = por %p116, %p117
      %p119 = scmp.ne.s32.totalorder %s107, %s108
      %p120 = scmp.eq.s32.totalorder %s28, 1
      %p121 = por %p119, %p120
      %p123 = scmp.ne.s32.totalorder %s108, %s122
      %p124 = scmp.eq.s32.totalorder %s28, 0
      %p125 = por %p123, %p124
      %s127 = sadd.s32 %s126, 1
      %p130 = scmp.eq.s32.totalorder %s22, 1
      %p131 = scmp.ne.s32.totalorder %s126, %s128
      %p132 = scmp.eq.s32.totalorder %s22, 0
      %p133 = por %p131, %p132
      %p134 = scmp.ne.s32.totalorder %s126, %s128
      %p135 = scmp.eq.s32.totalorder %s27, 1
      %p136 = por %p134, %p135
      %p137 = scmp.ne.s32.totalorder %s128, %s129
      %p138 = scmp.eq.s32.totalorder %s27, 0
      %p139 = por %p137, %p138
      %p140 = scmp.ne.s32.totalorder %s128, %s129
      %p141 = scmp.eq.s32.totalorder %s28, 1
      %p142 = por %p140, %p141
      %p144 = scmp.ne.s32.totalorder %s129, %s143
      %p145 = scmp.eq.s32.totalorder %s28, 0
      %p146 = por %p144, %p145
      %s148 = sadd.s32 %s147, 1
      %p151 = scmp.eq.s32.totalorder %s22, 1
      %p152 = scmp.ne.s32.totalorder %s147, %s149
      %p153 = scmp.eq.s32.totalorder %s22, 0
      %p154 = por %p152, %p153
      %p155 = scmp.ne.s32.totalorder %s147, %s149
      %p156 = scmp.eq.s32.totalorder %s27, 1
      %p157 = por %p155, %p156
      %p158 = scmp.ne.s32.totalorder %s149, %s150
      %p159 = scmp.eq.s32.totalorder %s27, 0
      %p160 = por %p158, %p159
      %p161 = scmp.ne.s32.totalorder %s149, %s150
      %p162 = scmp.eq.s32.totalorder %s28, 1
      %p163 = por %p161, %p162
      %p165 = scmp.ne.s32.totalorder %s150, %s164
      %p166 = scmp.eq.s32.totalorder %s28, 0
      %p167 = por %p165, %p166
      %s169 = sadd.s32 %s168, 1
      %p172 = scmp.eq.s32.totalorder %s22, 1
      %p173 = scmp.ne.s32.totalorder %s168, %s170
      %p174 = scmp.eq.s32.totalorder %s22, 0
      %p175 = por %p173, %p174
      %p176 = scmp.ne.s32.totalorder %s168, %s170
      %p177 = scmp.eq.s32.totalorder %s27, 1
      %p178 = por %p176, %p177
      %p179 = scmp.ne.s32.totalorder %s170, %s171
      %p180 = scmp.eq.s32.totalorder %s27, 0
      %p181 = por %p179, %p180
      %p182 = scmp.ne.s32.totalorder %s170, %s171
      %p183 = scmp.eq.s32.totalorder %s28, 1
      %p184 = por %p182, %p183
      %p186 = scmp.ne.s32.totalorder %s171, %s185
      %p187 = scmp.eq.s32.totalorder %s28, 0
      %p188 = por %p186, %p187
      %s189 = ssub.s32 %s29, %s48
      %s190 = ssub.s32 %s30, %s44
      %s191 = sor.u32 %s189, %s190
      %p192 = scmp.eq.s32.totalorder %s191, 0
      %s194 = sadd.s32 %s193, 1
      %s195 = scalar_select %p192, %s193, %s194
      %p198 = pneg %p192
      %p199 = scmp.eq.s32.totalorder %s22, 1
      %p200 = por %p198, %p199
      %p201 = scmp.ne.s32.totalorder %s193, %s196
      %p202 = scmp.eq.s32.totalorder %s22, 0
      %p203 = por %p201, %p202
      %p204 = scmp.ne.s32.totalorder %s193, %s196
      %p205 = scmp.eq.s32.totalorder %s27, 1
      %p206 = por %p204, %p205
      %p207 = scmp.ne.s32.totalorder %s196, %s197
      %p208 = scmp.eq.s32.totalorder %s27, 0
      %p209 = por %p207, %p208
      %p210 = scmp.ne.s32.totalorder %s196, %s197
      %p211 = scmp.eq.s32.totalorder %s28, 1
      %p212 = por %p210, %p211
      %p214 = scmp.ne.s32.totalorder %s197, %s213
      %p215 = scmp.eq.s32.totalorder %s28, 0
      %p216 = por %p214, %p215
      %p217 = scmp.le.s32.totalorder 1, %s22
      %p218 = scmp.lt.s32.totalorder %s22, 3
      %p219 = pnand %p217, %p218
      %p220 = pneg %p219
      // Predicated region
      $region9: #{tpu_custom_call.1} parent=5 // pred_check
        _
      $region10: #{tpu_custom_call.1} parent=5 // pred_check_branch
        %222 = sbr.rel (%p219) target = $region12
      $region11: #{tpu_custom_call.1} parent=5 // pred_region
        %s223 = ssub.s32 %s22, 1
        // Predicated region
        $region13: #{tpu_custom_call.1} parent=11 // pred_check
          %p224 = pneg %p118
        $region14: #{tpu_custom_call.1} parent=11 // pred_check_branch
          %226 = sbr.rel (%p224) target = $region16
        $region15: #{tpu_custom_call.1} parent=11 // pred_region
          %228 = vsyncadd [#allocation11], 0
          %s229 = sshll.u32 %s2, 4
          %s230 = int_to_ptr.hbm [resolvable:$true] %s229
          %s231 = sshll.u32 [#allocation12], 4
          %s232 = int_to_ptr.vmem [resolvable:$true] %s231
          %237 = dma.hbm_to_vmem [thread:$0]  %s230, 2048, %s232, [#allocation11], 128, 128, 8
        $region16: #{tpu_custom_call.1} parent=11 // pred_fallthru
          _
        // Predicated region
        $region17: #{tpu_custom_call.1} parent=11 // pred_check
          %p238 = pneg %p139
        $region18: #{tpu_custom_call.1} parent=11 // pred_check_branch
          %240 = sbr.rel (%p238) target = $region20
        $region19: #{tpu_custom_call.1} parent=11 // pred_region
          _
        $region20: #{tpu_custom_call.1} parent=11 // pred_fallthru
          _
        // Predicated region
        $region21: #{tpu_custom_call.1} parent=11 // pred_check
          %p241 = pneg %p160
        $region22: #{tpu_custom_call.1} parent=11 // pred_check_branch
          %243 = sbr.rel (%p241) target = $region24
        $region23: #{tpu_custom_call.1} parent=11 // pred_region
          %245 = vsyncadd [#allocation14], 0
          %s246 = sshll.u32 %s4, 4
          %s247 = int_to_ptr.hbm [resolvable:$true] %s246
          %s248 = sshll.u32 [#allocation13], 4
          %s249 = int_to_ptr.vmem [resolvable:$true] %s248
          %254 = dma.hbm_to_vmem [thread:$0]  %s247, 2048, %s249, [#allocation14], 128, 128, 8
        $region24: #{tpu_custom_call.1} parent=11 // pred_fallthru
          _
        // Predicated region
        $region25: #{tpu_custom_call.1} parent=11 // pred_check
          %p255 = pneg %p181
        $region26: #{tpu_custom_call.1} parent=11 // pred_check_branch
          %257 = sbr.rel (%p255) target = $region28
        $region27: #{tpu_custom_call.1} parent=11 // pred_region
          _
        $region28: #{tpu_custom_call.1} parent=11 // pred_fallthru
          _
      $region12: #{tpu_custom_call.1} parent=5 // pred_fallthru
        _
      %p258 = scmp.lt.s32.totalorder %s22, 2
      // Predicated region
      $region29: #{tpu_custom_call.1} parent=5 // pred_check
        %p259 = pneg %p258
      $region30: #{tpu_custom_call.1} parent=5 // pred_check_branch
        %261 = sbr.rel (%p259) target = $region32
      $region31: #{tpu_custom_call.1} parent=5 // pred_region
        // Predicated region
        $region33: #{tpu_custom_call.1} parent=31 // pred_check
          %p262 = pneg %p63
        $region34: #{tpu_custom_call.1} parent=31 // pred_check_branch
          %264 = sbr.rel (%p262) target = $region36
        $region35: #{tpu_custom_call.1} parent=31 // pred_region
          %s265 = sand.u32 %s53, 1
          %s266 = scalar_lea.sflag [#allocation8], %s265
          %s267 = sand.u32 %s53, 1
          %s268 = smul.addr %s267, 256
          %s269 = scalar_lea.vmem [#allocation7], %s268
          %s270 = smul.u32 32, %s30
          %272 = vsyncadd %s266, 0
          %s273 = smul.addr %s29, 32
          %s274 = sadd.s32 %s270, %s273
          %s275 = smul.addr %s274, 8
          %s276 = scalar_lea.hbm %s0, %s275
          %s277 = sshll.u32 %s276, 4
          %s278 = int_to_ptr.hbm [resolvable:$true] %s277
          %s279 = sshll.u32 %s269, 4
          %s280 = int_to_ptr.vmem [resolvable:$true] %s279
          %285 = dma.hbm_to_vmem [thread:$0]  %s278, 4096, %s280, %s266, 128, 128, 8
        $region36: #{tpu_custom_call.1} parent=31 // pred_fallthru
          _
        // Predicated region
        $region37: #{tpu_custom_call.1} parent=31 // pred_check
          %p286 = pneg %p91
        $region38: #{tpu_custom_call.1} parent=31 // pred_check_branch
          %288 = sbr.rel (%p286) target = $region40
        $region39: #{tpu_custom_call.1} parent=31 // pred_region
          %s289 = sand.u32 %s22, 1
          %s290 = scalar_lea.sflag [#allocation11], %s289
          %s291 = sand.u32 %s81, 1
          %s292 = smul.addr %s291, 256
          %s293 = scalar_lea.vmem [#allocation10], %s292
          %s294 = smul.u32 32, %s31
          %296 = vsyncadd %s290, 0
          %s297 = smul.addr %s29, 32
          %s298 = sadd.s32 %s294, %s297
          %s299 = smul.addr %s298, 8
          %s300 = scalar_lea.hbm %s1, %s299
          %s301 = sshll.u32 %s300, 4
          %s302 = int_to_ptr.hbm [resolvable:$true] %s301
          %s303 = sshll.u32 %s293, 4
          %s304 = int_to_ptr.vmem [resolvable:$true] %s303
          %309 = dma.hbm_to_vmem [thread:$0]  %s302, 4096, %s304, %s290, 128, 128, 8
        $region40: #{tpu_custom_call.1} parent=31 // pred_fallthru
          _
      $region32: #{tpu_custom_call.1} parent=5 // pred_fallthru
        _
      %p310 = scmp.le.s32.totalorder 1, %s22
      %p311 = scmp.lt.s32.totalorder %s22, 3
      %p312 = pnand %p310, %p311
      %p313 = pneg %p312
      // Predicated region
      $region41: #{tpu_custom_call.1} parent=5 // pred_check
        _
      $region42: #{tpu_custom_call.1} parent=5 // pred_check_branch
        %315 = sbr.rel (%p312) target = $region44
      $region43: #{tpu_custom_call.1} parent=5 // pred_region
        %s316 = ssub.s32 %s22, 1
        %s317 = sand.u32 %s56, 1
        %s318 = scalar_lea.sflag [#allocation8], %s317
        %s319 = sand.u32 %s56, 1
        %s320 = smul.addr %s319, 256
        %s321 = scalar_lea.vmem [#allocation7], %s320
        // Predicated region
        $region45: #{tpu_custom_call.1} parent=43 // pred_check
          %p322 = pneg %p69
        $region46: #{tpu_custom_call.1} parent=43 // pred_check_branch
          %324 = sbr.rel (%p322) target = $region48
        $region47: #{tpu_custom_call.1} parent=43 // pred_region
          %326 = dma.done %s318, 4096
        $region48: #{tpu_custom_call.1} parent=43 // pred_fallthru
          _
        %s327 = sand.u32 %s27, 1
        %s328 = scalar_lea.sflag [#allocation11], %s327
        %s329 = sand.u32 %s84, 1
        %s330 = smul.addr %s329, 256
        %s331 = scalar_lea.vmem [#allocation10], %s330
        // Predicated region
        $region49: #{tpu_custom_call.1} parent=43 // pred_check
          %p332 = pneg %p97
        $region50: #{tpu_custom_call.1} parent=43 // pred_check_branch
          %334 = sbr.rel (%p332) target = $region52
        $region51: #{tpu_custom_call.1} parent=43 // pred_region
          %336 = dma.done %s328, 4096
        $region52: #{tpu_custom_call.1} parent=43 // pred_fallthru
          _
        // Predicated region
        $region53: #{tpu_custom_call.1} parent=43 // pred_check
          %p337 = pneg %p118
        $region54: #{tpu_custom_call.1} parent=43 // pred_check_branch
          %339 = sbr.rel (%p337) target = $region56
        $region55: #{tpu_custom_call.1} parent=43 // pred_region
          %341 = dma.done [#allocation11], 2048
        $region56: #{tpu_custom_call.1} parent=43 // pred_fallthru
          _
        // Predicated region
        $region57: #{tpu_custom_call.1} parent=43 // pred_check
          %p342 = pneg %p160
        $region58: #{tpu_custom_call.1} parent=43 // pred_check_branch
          %344 = sbr.rel (%p342) target = $region60
        $region59: #{tpu_custom_call.1} parent=43 // pred_region
          %346 = dma.done [#allocation14], 2048
        $region60: #{tpu_custom_call.1} parent=43 // pred_fallthru
          _
        %s347 = sand.u32 %s56, 1
        %s348 = scalar_lea.sflag [#allocation8], %s347
        %s349 = sand.u32 %s56, 1
        %s350 = smul.addr %s349, 256
        %s351 = scalar_lea.vmem [#allocation7], %s350
        %p352 = pneg %p69
        %p353 = pneg %p66
        %s354 = sand.u32 %s27, 1
        %s355 = scalar_lea.sflag [#allocation11], %s354
        %s356 = sand.u32 %s84, 1
        %s357 = smul.addr %s356, 256
        %s358 = scalar_lea.vmem [#allocation10], %s357
        %p359 = pneg %p97
        %p360 = pneg %p94
        %p361 = pneg %p118
        %p362 = pneg %p115
        %p363 = pneg %p139
        %p364 = pneg %p136
        %p365 = pneg %p160
        %p366 = pneg %p157
        %p367 = pneg %p181
        %p368 = pneg %p178
        %p369 = pneg %p209
        %p370 = pneg %p206
        %s371 = sand.u32 %s196, 1
        %s372 = scalar_lea.sflag [#allocation9], %s371
        %s373 = sand.u32 %s196, 1
        %s374 = smul.addr %s373, 256
        %s375 = scalar_lea.vmem [#allocation15], %s374
        %s376 = smul.u32 32, %s33
        %s377 = smul.u32 32, %s34
        %s378 = smul.u32 32, %s33
        %p379 = scmp.eq.s32.totalorder %s34, 0
        // Predicated region
        $region61: #{tpu_custom_call.1} parent=43 // pred_check
          %p380 = pneg %p379
        $region62: #{tpu_custom_call.1} parent=43 // pred_check_branch
          %382 = sbr.rel (%p380) target = $region64
        $region63: #{tpu_custom_call.1} parent=43 // pred_region
          %v383 = vld [vmem:[%s321] sm:$0xff]
          %v384 = vld [vmem:[%s321 + $0x8] sm:$0xff]
          %v385 = vld [vmem:[%s321 + $0x10] sm:$0xff]
          %v386 = vld [vmem:[%s321 + $0x18] sm:$0xff]
          %v387 = vld [vmem:[%s321 + $0x20] sm:$0xff]
          %v388 = vld [vmem:[%s321 + $0x28] sm:$0xff]
          %v389 = vld [vmem:[%s321 + $0x30] sm:$0xff]
          %v390 = vld [vmem:[%s321 + $0x38] sm:$0xff]
          %v391 = vld [vmem:[%s321 + $0x40] sm:$0xff]
          %v392 = vld [vmem:[%s321 + $0x48] sm:$0xff]
          %v393 = vld [vmem:[%s321 + $0x50] sm:$0xff]
          %v394 = vld [vmem:[%s321 + $0x58] sm:$0xff]
          %v395 = vld [vmem:[%s321 + $0x60] sm:$0xff]
          %v396 = vld [vmem:[%s321 + $0x68] sm:$0xff]
          %v397 = vld [vmem:[%s321 + $0x70] sm:$0xff]
          %v398 = vld [vmem:[%s321 + $0x78] sm:$0xff]
          %v399 = vld [vmem:[%s321 + $0x80] sm:$0xff]
          %v400 = vld [vmem:[%s321 + $0x88] sm:$0xff]
          %v401 = vld [vmem:[%s321 + $0x90] sm:$0xff]
          %v402 = vld [vmem:[%s321 + $0x98] sm:$0xff]
          %v403 = vld [vmem:[%s321 + $0xa0] sm:$0xff]
          %v404 = vld [vmem:[%s321 + $0xa8] sm:$0xff]
          %v405 = vld [vmem:[%s321 + $0xb0] sm:$0xff]
          %v406 = vld [vmem:[%s321 + $0xb8] sm:$0xff]
          %v407 = vld [vmem:[%s321 + $0xc0] sm:$0xff]
          %v408 = vld [vmem:[%s321 + $0xc8] sm:$0xff]
          %v409 = vld [vmem:[%s321 + $0xd0] sm:$0xff]
          %v410 = vld [vmem:[%s321 + $0xd8] sm:$0xff]
          %v411 = vld [vmem:[%s321 + $0xe0] sm:$0xff]
          %v412 = vld [vmem:[%s321 + $0xe8] sm:$0xff]
          %v413 = vld [vmem:[%s321 + $0xf0] sm:$0xff]
          %v414 = vld [vmem:[%s321 + $0xf8] sm:$0xff]
          %v415 = vpack.c.bf16 %v384, %v383
          %v416 = vpack.c.bf16 %v386, %v385
          %v417 = vpack.c.bf16 %v388, %v387
          %v418 = vpack.c.bf16 %v390, %v389
          %v419 = vpack.c.bf16 %v392, %v391
          %v420 = vpack.c.bf16 %v394, %v393
          %v421 = vpack.c.bf16 %v396, %v395
          %v422 = vpack.c.bf16 %v398, %v397
          %v423 = vpack.c.bf16 %v400, %v399
          %v424 = vpack.c.bf16 %v402, %v401
          %v425 = vpack.c.bf16 %v404, %v403
          %v426 = vpack.c.bf16 %v406, %v405
          %v427 = vpack.c.bf16 %v408, %v407
          %v428 = vpack.c.bf16 %v410, %v409
          %v429 = vpack.c.bf16 %v412, %v411
          %v430 = vpack.c.bf16 %v414, %v413
          %v431 = vld [vmem:[#allocation12] sm:$0xff]
          %v432 = vld [vmem:[#allocation12 + $0x8] sm:$0xff]
          %v433 = vld [vmem:[#allocation12 + $0x10] sm:$0xff]
          %v434 = vld [vmem:[#allocation12 + $0x18] sm:$0xff]
          %v435 = vld [vmem:[#allocation12 + $0x20] sm:$0xff]
          %v436 = vld [vmem:[#allocation12 + $0x28] sm:$0xff]
          %v437 = vld [vmem:[#allocation12 + $0x30] sm:$0xff]
          %v438 = vld [vmem:[#allocation12 + $0x38] sm:$0xff]
          %v439 = vld [vmem:[#allocation12 + $0x40] sm:$0xff]
          %v440 = vld [vmem:[#allocation12 + $0x48] sm:$0xff]
          %v441 = vld [vmem:[#allocation12 + $0x50] sm:$0xff]
          %v442 = vld [vmem:[#allocation12 + $0x58] sm:$0xff]
          %v443 = vld [vmem:[#allocation12 + $0x60] sm:$0xff]
          %v444 = vld [vmem:[#allocation12 + $0x68] sm:$0xff]
          %v445 = vld [vmem:[#allocation12 + $0x70] sm:$0xff]
          %v446 = vld [vmem:[#allocation12 + $0x78] sm:$0xff]
          %v447 = vld [vmem:[%s3] sm:$0x3]
          %v449 = vperm.slane %v447, 0
          %v450 = vperm.slane %v447, 1
          %v469 = vunpack.c.l.b16 %v431
          %v470 = vunpack.c.h.b16 %v431
          %v471 = vunpack.c.l.b16 %v432
          %v472 = vunpack.c.h.b16 %v432
          %v473 = vunpack.c.l.b16 %v433
          %v474 = vunpack.c.h.b16 %v433
          %v475 = vunpack.c.l.b16 %v434
          %v476 = vunpack.c.h.b16 %v434
          %v477 = vunpack.c.l.b16 %v435
          %v478 = vunpack.c.h.b16 %v435
          %v479 = vunpack.c.l.b16 %v436
          %v480 = vunpack.c.h.b16 %v436
          %v481 = vunpack.c.l.b16 %v437
          %v482 = vunpack.c.h.b16 %v437
          %v483 = vunpack.c.l.b16 %v438
          %v484 = vunpack.c.h.b16 %v438
          %v485 = vunpack.c.l.b16 %v439
          %v486 = vunpack.c.h.b16 %v439
          %v487 = vunpack.c.l.b16 %v440
          %v488 = vunpack.c.h.b16 %v440
          %v489 = vunpack.c.l.b16 %v441
          %v490 = vunpack.c.h.b16 %v441
          %v491 = vunpack.c.l.b16 %v442
          %v492 = vunpack.c.h.b16 %v442
          %v493 = vunpack.c.l.b16 %v443
          %v494 = vunpack.c.h.b16 %v443
          %v495 = vunpack.c.l.b16 %v444
          %v496 = vunpack.c.h.b16 %v444
          %v497 = vunpack.c.l.b16 %v445
          %v498 = vunpack.c.h.b16 %v445
          %v499 = vunpack.c.l.b16 %v446
          %v500 = vunpack.c.h.b16 %v446
          %v501 = vpack.c.b16 %v471, %v469
          %v502 = vpack.c.b16 %v472, %v470
          %v503 = vpack.c.b16 %v475, %v473
          %v504 = vpack.c.b16 %v476, %v474
          %v505 = vpack.c.b16 %v479, %v477
          %v506 = vpack.c.b16 %v480, %v478
          %v507 = vpack.c.b16 %v483, %v481
          %v508 = vpack.c.b16 %v484, %v482
          %v509 = vpack.c.b16 %v487, %v485
          %v510 = vpack.c.b16 %v488, %v486
          %v511 = vpack.c.b16 %v491, %v489
          %v512 = vpack.c.b16 %v492, %v490
          %v513 = vpack.c.b16 %v495, %v493
          %v514 = vpack.c.b16 %v496, %v494
          %v515 = vpack.c.b16 %v499, %v497
          %v516 = vpack.c.b16 %v500, %v498
          %533 = vmatpush.bf16.msra.mxu0 %v515
          %534 = vmatpush.bf16.msra.mxu0 %v513
          %535 = vmatpush.bf16.msra.mxu0 %v511
          %536 = vmatpush.bf16.msra.mxu0 %v509
          %537 = vmatpush.bf16.msra.mxu0 %v507
          %538 = vmatpush.bf16.msra.mxu0 %v505
          %539 = vmatpush.bf16.msra.mxu0 %v503
          %540 = vmatpush.bf16.msra.mxu0 %v501
          %541 = vmatmul.bf16.gmra.mxu0 %v415
          %v542 = vpop.f32.mrf.mxu0
          %v543 = vadd.f32 %v449, %v542
          %v544 = vpop.f32.mrf.mxu0
          %v545 = vadd.f32 %v449, %v544
          %546 = vmatmul.bf16.gmra.mxu0 %v416
          %v547 = vpop.f32.mrf.mxu0
          %v548 = vadd.f32 %v449, %v547
          %v549 = vpop.f32.mrf.mxu0
          %v550 = vadd.f32 %v449, %v549
          %551 = vmatmul.bf16.gmra.mxu0 %v417
          %v552 = vpop.f32.mrf.mxu0
          %v553 = vadd.f32 %v449, %v552
          %v554 = vpop.f32.mrf.mxu0
          %v555 = vadd.f32 %v449, %v554
          %556 = vmatmul.bf16.gmra.mxu0 %v418
          %v557 = vpop.f32.mrf.mxu0
          %v558 = vadd.f32 %v449, %v557
          %v559 = vpop.f32.mrf.mxu0
          %v560 = vadd.f32 %v449, %v559
          %561 = vmatmul.bf16.gmra.mxu0 %v419
          %v562 = vpop.f32.mrf.mxu0
          %v563 = vadd.f32 %v449, %v562
          %v564 = vpop.f32.mrf.mxu0
          %v565 = vadd.f32 %v449, %v564
          %566 = vmatmul.bf16.gmra.mxu0 %v420
          %v567 = vpop.f32.mrf.mxu0
          %v568 = vadd.f32 %v449, %v567
          %v569 = vpop.f32.mrf.mxu0
          %v570 = vadd.f32 %v449, %v569
          %571 = vmatmul.bf16.gmra.mxu0 %v421
          %v572 = vpop.f32.mrf.mxu0
          %v573 = vadd.f32 %v449, %v572
          %v574 = vpop.f32.mrf.mxu0
          %v575 = vadd.f32 %v449, %v574
          %576 = vmatmul.bf16.gmra.mxu0 %v422
          %v577 = vpop.f32.mrf.mxu0
          %v578 = vadd.f32 %v449, %v577
          %v579 = vpop.f32.mrf.mxu0
          %v580 = vadd.f32 %v449, %v579
          %581 = vmatmul.bf16.gmra.mxu0 %v423
          %v582 = vpop.f32.mrf.mxu0
          %v583 = vadd.f32 %v449, %v582
          %v584 = vpop.f32.mrf.mxu0
          %v585 = vadd.f32 %v449, %v584
          %586 = vmatmul.bf16.gmra.mxu0 %v424
          %v587 = vpop.f32.mrf.mxu0
          %v588 = vadd.f32 %v449, %v587
          %v589 = vpop.f32.mrf.mxu0
          %v590 = vadd.f32 %v449, %v589
          %591 = vmatmul.bf16.gmra.mxu0 %v425
          %v592 = vpop.f32.mrf.mxu0
          %v593 = vadd.f32 %v449, %v592
          %v594 = vpop.f32.mrf.mxu0
          %v595 = vadd.f32 %v449, %v594
          %596 = vmatmul.bf16.gmra.mxu0 %v426
          %v597 = vpop.f32.mrf.mxu0
          %v598 = vadd.f32 %v449, %v597
          %v599 = vpop.f32.mrf.mxu0
          %v600 = vadd.f32 %v449, %v599
          %601 = vmatmul.bf16.gmra.mxu0 %v427
          %v602 = vpop.f32.mrf.mxu0
          %v603 = vadd.f32 %v449, %v602
          %v604 = vpop.f32.mrf.mxu0
          %v605 = vadd.f32 %v449, %v604
          %606 = vmatmul.bf16.gmra.mxu0 %v428
          %v607 = vpop.f32.mrf.mxu0
          %v608 = vadd.f32 %v449, %v607
          %v609 = vpop.f32.mrf.mxu0
          %v610 = vadd.f32 %v449, %v609
          %611 = vmatmul.bf16.gmra.mxu0 %v429
          %v612 = vpop.f32.mrf.mxu0
          %v613 = vadd.f32 %v449, %v612
          %v614 = vpop.f32.mrf.mxu0
          %v615 = vadd.f32 %v449, %v614
          %616 = vmatmul.bf16.gmra.mxu0 %v430
          %v617 = vpop.f32.mrf.mxu0
          %v618 = vadd.f32 %v449, %v617
          %v619 = vpop.f32.mrf.mxu0
          %v620 = vadd.f32 %v449, %v619
          %621 = vdwg.mxu0
          %622 = vmatpush.bf16.msra.mxu0 %v516
          %623 = vmatpush.bf16.msra.mxu0 %v514
          %624 = vmatpush.bf16.msra.mxu0 %v512
          %625 = vmatpush.bf16.msra.mxu0 %v510
          %626 = vmatpush.bf16.msra.mxu0 %v508
          %627 = vmatpush.bf16.msra.mxu0 %v506
          %628 = vmatpush.bf16.msra.mxu0 %v504
          %629 = vmatpush.bf16.msra.mxu0 %v502
          %630 = vmatmul.bf16.gmra.mxu0 %v415
          %v631 = vpop.f32.mrf.mxu0
          %v632 = vadd.f32 %v450, %v631
          %v633 = vpop.f32.mrf.mxu0
          %v634 = vadd.f32 %v450, %v633
          %635 = vmatmul.bf16.gmra.mxu0 %v416
          %v636 = vpop.f32.mrf.mxu0
          %v637 = vadd.f32 %v450, %v636
          %v638 = vpop.f32.mrf.mxu0
          %v639 = vadd.f32 %v450, %v638
          %640 = vmatmul.bf16.gmra.mxu0 %v417
          %v641 = vpop.f32.mrf.mxu0
          %v642 = vadd.f32 %v450, %v641
          %v643 = vpop.f32.mrf.mxu0
          %v644 = vadd.f32 %v450, %v643
          %645 = vmatmul.bf16.gmra.mxu0 %v418
          %v646 = vpop.f32.mrf.mxu0
          %v647 = vadd.f32 %v450, %v646
          %v648 = vpop.f32.mrf.mxu0
          %v649 = vadd.f32 %v450, %v648
          %650 = vmatmul.bf16.gmra.mxu0 %v419
          %v651 = vpop.f32.mrf.mxu0
          %v652 = vadd.f32 %v450, %v651
          %v653 = vpop.f32.mrf.mxu0
          %v654 = vadd.f32 %v450, %v653
          %655 = vmatmul.bf16.gmra.mxu0 %v420
          %v656 = vpop.f32.mrf.mxu0
          %v657 = vadd.f32 %v450, %v656
          %v658 = vpop.f32.mrf.mxu0
          %v659 = vadd.f32 %v450, %v658
          %660 = vmatmul.bf16.gmra.mxu0 %v421
          %v661 = vpop.f32.mrf.mxu0
          %v662 = vadd.f32 %v450, %v661
          %v663 = vpop.f32.mrf.mxu0
          %v664 = vadd.f32 %v450, %v663
          %665 = vmatmul.bf16.gmra.mxu0 %v422
          %v666 = vpop.f32.mrf.mxu0
          %v667 = vadd.f32 %v450, %v666
          %v668 = vpop.f32.mrf.mxu0
          %v669 = vadd.f32 %v450, %v668
          %670 = vmatmul.bf16.gmra.mxu0 %v423
          %v671 = vpop.f32.mrf.mxu0
          %v672 = vadd.f32 %v450, %v671
          %v673 = vpop.f32.mrf.mxu0
          %v674 = vadd.f32 %v450, %v673
          %675 = vmatmul.bf16.gmra.mxu0 %v424
          %v676 = vpop.f32.mrf.mxu0
          %v677 = vadd.f32 %v450, %v676
          %v678 = vpop.f32.mrf.mxu0
          %v679 = vadd.f32 %v450, %v678
          %680 = vmatmul.bf16.gmra.mxu0 %v425
          %v681 = vpop.f32.mrf.mxu0
          %v682 = vadd.f32 %v450, %v681
          %v683 = vpop.f32.mrf.mxu0
          %v684 = vadd.f32 %v450, %v683
          %685 = vmatmul.bf16.gmra.mxu0 %v426
          %v686 = vpop.f32.mrf.mxu0
          %v687 = vadd.f32 %v450, %v686
          %v688 = vpop.f32.mrf.mxu0
          %v689 = vadd.f32 %v450, %v688
          %690 = vmatmul.bf16.gmra.mxu0 %v427
          %v691 = vpop.f32.mrf.mxu0
          %v692 = vadd.f32 %v450, %v691
          %v693 = vpop.f32.mrf.mxu0
          %v694 = vadd.f32 %v450, %v693
          %695 = vmatmul.bf16.gmra.mxu0 %v428
          %v696 = vpop.f32.mrf.mxu0
          %v697 = vadd.f32 %v450, %v696
          %v698 = vpop.f32.mrf.mxu0
          %v699 = vadd.f32 %v450, %v698
          %700 = vmatmul.bf16.gmra.mxu0 %v429
          %v701 = vpop.f32.mrf.mxu0
          %v702 = vadd.f32 %v450, %v701
          %v703 = vpop.f32.mrf.mxu0
          %v704 = vadd.f32 %v450, %v703
          %705 = vmatmul.bf16.gmra.mxu0 %v430
          %v706 = vpop.f32.mrf.mxu0
          %v707 = vadd.f32 %v450, %v706
          %v708 = vpop.f32.mrf.mxu0
          %v709 = vadd.f32 %v450, %v708
          %710 = vdwg.mxu0
          %v711 = vpack.c.bf16 %v543, %v543
          %v712 = vpack.c.bf16 %v545, %v545
          %v713 = vpack.c.bf16 %v548, %v548
          %v714 = vpack.c.bf16 %v550, %v550
          %v715 = vpack.c.bf16 %v553, %v553
          %v716 = vpack.c.bf16 %v555, %v555
          %v717 = vpack.c.bf16 %v558, %v558
          %v718 = vpack.c.bf16 %v560, %v560
          %v719 = vpack.c.bf16 %v563, %v563
          %v720 = vpack.c.bf16 %v565, %v565
          %v721 = vpack.c.bf16 %v568, %v568
          %v722 = vpack.c.bf16 %v570, %v570
          %v723 = vpack.c.bf16 %v573, %v573
          %v724 = vpack.c.bf16 %v575, %v575
          %v725 = vpack.c.bf16 %v578, %v578
          %v726 = vpack.c.bf16 %v580, %v580
          %v727 = vpack.c.bf16 %v583, %v583
          %v728 = vpack.c.bf16 %v585, %v585
          %v729 = vpack.c.bf16 %v588, %v588
          %v730 = vpack.c.bf16 %v590, %v590
          %v731 = vpack.c.bf16 %v593, %v593
          %v732 = vpack.c.bf16 %v595, %v595
          %v733 = vpack.c.bf16 %v598, %v598
          %v734 = vpack.c.bf16 %v600, %v600
          %v735 = vpack.c.bf16 %v603, %v603
          %v736 = vpack.c.bf16 %v605, %v605
          %v737 = vpack.c.bf16 %v608, %v608
          %v738 = vpack.c.bf16 %v610, %v610
          %v739 = vpack.c.bf16 %v613, %v613
          %v740 = vpack.c.bf16 %v615, %v615
          %v741 = vpack.c.bf16 %v618, %v618
          %v742 = vpack.c.bf16 %v620, %v620
          %743 = vst [vmem:[#allocation2] sm:$0xf] %v711
          %744 = vst [vmem:[#allocation2 + $0x4] sm:$0xf] %v712
          %745 = vst [vmem:[#allocation2 + $0x8] sm:$0xf] %v713
          %746 = vst [vmem:[#allocation2 + $0xc] sm:$0xf] %v714
          %747 = vst [vmem:[#allocation2 + $0x10] sm:$0xf] %v715
          %748 = vst [vmem:[#allocation2 + $0x14] sm:$0xf] %v716
          %749 = vst [vmem:[#allocation2 + $0x18] sm:$0xf] %v717
          %750 = vst [vmem:[#allocation2 + $0x1c] sm:$0xf] %v718
          %751 = vst [vmem:[#allocation2 + $0x20] sm:$0xf] %v719
          %752 = vst [vmem:[#allocation2 + $0x24] sm:$0xf] %v720
          %753 = vst [vmem:[#allocation2 + $0x28] sm:$0xf] %v721
          %754 = vst [vmem:[#allocation2 + $0x2c] sm:$0xf] %v722
          %755 = vst [vmem:[#allocation2 + $0x30] sm:$0xf] %v723
          %756 = vst [vmem:[#allocation2 + $0x34] sm:$0xf] %v724
          %757 = vst [vmem:[#allocation2 + $0x38] sm:$0xf] %v725
          %758 = vst [vmem:[#allocation2 + $0x3c] sm:$0xf] %v726
          %759 = vst [vmem:[#allocation2 + $0x40] sm:$0xf] %v727
          %760 = vst [vmem:[#allocation2 + $0x44] sm:$0xf] %v728
          %761 = vst [vmem:[#allocation2 + $0x48] sm:$0xf] %v729
          %762 = vst [vmem:[#allocation2 + $0x4c] sm:$0xf] %v730
          %763 = vst [vmem:[#allocation2 + $0x50] sm:$0xf] %v731
          %764 = vst [vmem:[#allocation2 + $0x54] sm:$0xf] %v732
          %765 = vst [vmem:[#allocation2 + $0x58] sm:$0xf] %v733
          %766 = vst [vmem:[#allocation2 + $0x5c] sm:$0xf] %v734
          %767 = vst [vmem:[#allocation2 + $0x60] sm:$0xf] %v735
          %768 = vst [vmem:[#allocation2 + $0x64] sm:$0xf] %v736
          %769 = vst [vmem:[#allocation2 + $0x68] sm:$0xf] %v737
          %770 = vst [vmem:[#allocation2 + $0x6c] sm:$0xf] %v738
          %771 = vst [vmem:[#allocation2 + $0x70] sm:$0xf] %v739
          %772 = vst [vmem:[#allocation2 + $0x74] sm:$0xf] %v740
          %773 = vst [vmem:[#allocation2 + $0x78] sm:$0xf] %v741
          %774 = vst [vmem:[#allocation2 + $0x7c] sm:$0xf] %v742
          %775 = vst [vmem:[#allocation3] sm:$0xff] %v632
          %776 = vst [vmem:[#allocation3 + $0x8] sm:$0xff] %v634
          %777 = vst [vmem:[#allocation3 + $0x10] sm:$0xff] %v637
          %778 = vst [vmem:[#allocation3 + $0x18] sm:$0xff] %v639
          %779 = vst [vmem:[#allocation3 + $0x20] sm:$0xff] %v642
          %780 = vst [vmem:[#allocation3 + $0x28] sm:$0xff] %v644
          %781 = vst [vmem:[#allocation3 + $0x30] sm:$0xff] %v647
          %782 = vst [vmem:[#allocation3 + $0x38] sm:$0xff] %v649
          %783 = vst [vmem:[#allocation3 + $0x40] sm:$0xff] %v652
          %784 = vst [vmem:[#allocation3 + $0x48] sm:$0xff] %v654
          %785 = vst [vmem:[#allocation3 + $0x50] sm:$0xff] %v657
          %786 = vst [vmem:[#allocation3 + $0x58] sm:$0xff] %v659
          %787 = vst [vmem:[#allocation3 + $0x60] sm:$0xff] %v662
          %788 = vst [vmem:[#allocation3 + $0x68] sm:$0xff] %v664
          %789 = vst [vmem:[#allocation3 + $0x70] sm:$0xff] %v667
          %790 = vst [vmem:[#allocation3 + $0x78] sm:$0xff] %v669
          %791 = vst [vmem:[#allocation3 + $0x80] sm:$0xff] %v672
          %792 = vst [vmem:[#allocation3 + $0x88] sm:$0xff] %v674
          %793 = vst [vmem:[#allocation3 + $0x90] sm:$0xff] %v677
          %794 = vst [vmem:[#allocation3 + $0x98] sm:$0xff] %v679
          %795 = vst [vmem:[#allocation3 + $0xa0] sm:$0xff] %v682
          %796 = vst [vmem:[#allocation3 + $0xa8] sm:$0xff] %v684
          %797 = vst [vmem:[#allocation3 + $0xb0] sm:$0xff] %v687
          %798 = vst [vmem:[#allocation3 + $0xb8] sm:$0xff] %v689
          %799 = vst [vmem:[#allocation3 + $0xc0] sm:$0xff] %v692
          %800 = vst [vmem:[#allocation3 + $0xc8] sm:$0xff] %v694
          %801 = vst [vmem:[#allocation3 + $0xd0] sm:$0xff] %v697
          %802 = vst [vmem:[#allocation3 + $0xd8] sm:$0xff] %v699
          %803 = vst [vmem:[#allocation3 + $0xe0] sm:$0xff] %v702
          %804 = vst [vmem:[#allocation3 + $0xe8] sm:$0xff] %v704
          %805 = vst [vmem:[#allocation3 + $0xf0] sm:$0xff] %v707
          %806 = vst [vmem:[#allocation3 + $0xf8] sm:$0xff] %v709
          %vm807 = vcmask 7168
          %808 = vst.msk [vmem:[#allocation4] sm:$0xff] %vm807, -inf
          %809 = vst.msk [vmem:[#allocation4 + $0x8] sm:$0xff] %vm807, -inf
          %810 = vst.msk [vmem:[#allocation4 + $0x10] sm:$0xff] %vm807, -inf
          %811 = vst.msk [vmem:[#allocation4 + $0x18] sm:$0xff] %vm807, -inf
          %812 = vst.msk [vmem:[#allocation4 + $0x20] sm:$0xff] %vm807, -inf
          %813 = vst.msk [vmem:[#allocation4 + $0x28] sm:$0xff] %vm807, -inf
          %814 = vst.msk [vmem:[#allocation4 + $0x30] sm:$0xff] %vm807, -inf
          %815 = vst.msk [vmem:[#allocation4 + $0x38] sm:$0xff] %vm807, -inf
          %816 = vst.msk [vmem:[#allocation4 + $0x40] sm:$0xff] %vm807, -inf
          %817 = vst.msk [vmem:[#allocation4 + $0x48] sm:$0xff] %vm807, -inf
          %818 = vst.msk [vmem:[#allocation4 + $0x50] sm:$0xff] %vm807, -inf
          %819 = vst.msk [vmem:[#allocation4 + $0x58] sm:$0xff] %vm807, -inf
          %820 = vst.msk [vmem:[#allocation4 + $0x60] sm:$0xff] %vm807, -inf
          %821 = vst.msk [vmem:[#allocation4 + $0x68] sm:$0xff] %vm807, -inf
          %822 = vst.msk [vmem:[#allocation4 + $0x70] sm:$0xff] %vm807, -inf
          %823 = vst.msk [vmem:[#allocation4 + $0x78] sm:$0xff] %vm807, -inf
          %824 = vst.msk [vmem:[#allocation4 + $0x80] sm:$0xff] %vm807, -inf
          %825 = vst.msk [vmem:[#allocation4 + $0x88] sm:$0xff] %vm807, -inf
          %826 = vst.msk [vmem:[#allocation4 + $0x90] sm:$0xff] %vm807, -inf
          %827 = vst.msk [vmem:[#allocation4 + $0x98] sm:$0xff] %vm807, -inf
          %828 = vst.msk [vmem:[#allocation4 + $0xa0] sm:$0xff] %vm807, -inf
          %829 = vst.msk [vmem:[#allocation4 + $0xa8] sm:$0xff] %vm807, -inf
          %830 = vst.msk [vmem:[#allocation4 + $0xb0] sm:$0xff] %vm807, -inf
          %831 = vst.msk [vmem:[#allocation4 + $0xb8] sm:$0xff] %vm807, -inf
          %832 = vst.msk [vmem:[#allocation4 + $0xc0] sm:$0xff] %vm807, -inf
          %833 = vst.msk [vmem:[#allocation4 + $0xc8] sm:$0xff] %vm807, -inf
          %834 = vst.msk [vmem:[#allocation4 + $0xd0] sm:$0xff] %vm807, -inf
          %835 = vst.msk [vmem:[#allocation4 + $0xd8] sm:$0xff] %vm807, -inf
          %836 = vst.msk [vmem:[#allocation4 + $0xe0] sm:$0xff] %vm807, -inf
          %837 = vst.msk [vmem:[#allocation4 + $0xe8] sm:$0xff] %vm807, -inf
          %838 = vst.msk [vmem:[#allocation4 + $0xf0] sm:$0xff] %vm807, -inf
          %839 = vst.msk [vmem:[#allocation4 + $0xf8] sm:$0xff] %vm807, -inf
          %840 = vst.msk [vmem:[#allocation5] sm:$0xff] %vm807, 0.0
          %841 = vst.msk [vmem:[#allocation5 + $0x8] sm:$0xff] %vm807, 0.0
          %842 = vst.msk [vmem:[#allocation5 + $0x10] sm:$0xff] %vm807, 0.0
          %843 = vst.msk [vmem:[#allocation5 + $0x18] sm:$0xff] %vm807, 0.0
          %844 = vst.msk [vmem:[#allocation5 + $0x20] sm:$0xff] %vm807, 0.0
          %845 = vst.msk [vmem:[#allocation5 + $0x28] sm:$0xff] %vm807, 0.0
          %846 = vst.msk [vmem:[#allocation5 + $0x30] sm:$0xff] %vm807, 0.0
          %847 = vst.msk [vmem:[#allocation5 + $0x38] sm:$0xff] %vm807, 0.0
          %848 = vst.msk [vmem:[#allocation5 + $0x40] sm:$0xff] %vm807, 0.0
          %849 = vst.msk [vmem:[#allocation5 + $0x48] sm:$0xff] %vm807, 0.0
          %850 = vst.msk [vmem:[#allocation5 + $0x50] sm:$0xff] %vm807, 0.0
          %851 = vst.msk [vmem:[#allocation5 + $0x58] sm:$0xff] %vm807, 0.0
          %852 = vst.msk [vmem:[#allocation5 + $0x60] sm:$0xff] %vm807, 0.0
          %853 = vst.msk [vmem:[#allocation5 + $0x68] sm:$0xff] %vm807, 0.0
          %854 = vst.msk [vmem:[#allocation5 + $0x70] sm:$0xff] %vm807, 0.0
          %855 = vst.msk [vmem:[#allocation5 + $0x78] sm:$0xff] %vm807, 0.0
          %856 = vst.msk [vmem:[#allocation5 + $0x80] sm:$0xff] %vm807, 0.0
          %857 = vst.msk [vmem:[#allocation5 + $0x88] sm:$0xff] %vm807, 0.0
          %858 = vst.msk [vmem:[#allocation5 + $0x90] sm:$0xff] %vm807, 0.0
          %859 = vst.msk [vmem:[#allocation5 + $0x98] sm:$0xff] %vm807, 0.0
          %860 = vst.msk [vmem:[#allocation5 + $0xa0] sm:$0xff] %vm807, 0.0
          %861 = vst.msk [vmem:[#allocation5 + $0xa8] sm:$0xff] %vm807, 0.0
          %862 = vst.msk [vmem:[#allocation5 + $0xb0] sm:$0xff] %vm807, 0.0
          %863 = vst.msk [vmem:[#allocation5 + $0xb8] sm:$0xff] %vm807, 0.0
          %864 = vst.msk [vmem:[#allocation5 + $0xc0] sm:$0xff] %vm807, 0.0
          %865 = vst.msk [vmem:[#allocation5 + $0xc8] sm:$0xff] %vm807, 0.0
          %866 = vst.msk [vmem:[#allocation5 + $0xd0] sm:$0xff] %vm807, 0.0
          %867 = vst.msk [vmem:[#allocation5 + $0xd8] sm:$0xff] %vm807, 0.0
          %868 = vst.msk [vmem:[#allocation5 + $0xe0] sm:$0xff] %vm807, 0.0
          %869 = vst.msk [vmem:[#allocation5 + $0xe8] sm:$0xff] %vm807, 0.0
          %870 = vst.msk [vmem:[#allocation5 + $0xf0] sm:$0xff] %vm807, 0.0
          %871 = vst.msk [vmem:[#allocation5 + $0xf8] sm:$0xff] %vm807, 0.0
          %872 = vst [vmem:[#allocation6] sm:$0xff] 0.0
          %873 = vst [vmem:[#allocation6 + $0x8] sm:$0xff] 0.0
          %874 = vst [vmem:[#allocation6 + $0x10] sm:$0xff] 0.0
          %875 = vst [vmem:[#allocation6 + $0x18] sm:$0xff] 0.0
          %876 = vst [vmem:[#allocation6 + $0x20] sm:$0xff] 0.0
          %877 = vst [vmem:[#allocation6 + $0x28] sm:$0xff] 0.0
          %878 = vst [vmem:[#allocation6 + $0x30] sm:$0xff] 0.0
          %879 = vst [vmem:[#allocation6 + $0x38] sm:$0xff] 0.0
          %880 = vst [vmem:[#allocation6 + $0x40] sm:$0xff] 0.0
          %881 = vst [vmem:[#allocation6 + $0x48] sm:$0xff] 0.0
          %882 = vst [vmem:[#allocation6 + $0x50] sm:$0xff] 0.0
          %883 = vst [vmem:[#allocation6 + $0x58] sm:$0xff] 0.0
          %884 = vst [vmem:[#allocation6 + $0x60] sm:$0xff] 0.0
          %885 = vst [vmem:[#allocation6 + $0x68] sm:$0xff] 0.0
          %886 = vst [vmem:[#allocation6 + $0x70] sm:$0xff] 0.0
          %887 = vst [vmem:[#allocation6 + $0x78] sm:$0xff] 0.0
          %888 = vst [vmem:[#allocation6 + $0x80] sm:$0xff] 0.0
          %889 = vst [vmem:[#allocation6 + $0x88] sm:$0xff] 0.0
          %890 = vst [vmem:[#allocation6 + $0x90] sm:$0xff] 0.0
          %891 = vst [vmem:[#allocation6 + $0x98] sm:$0xff] 0.0
          %892 = vst [vmem:[#allocation6 + $0xa0] sm:$0xff] 0.0
          %893 = vst [vmem:[#allocation6 + $0xa8] sm:$0xff] 0.0
          %894 = vst [vmem:[#allocation6 + $0xb0] sm:$0xff] 0.0
          %895 = vst [vmem:[#allocation6 + $0xb8] sm:$0xff] 0.0
          %896 = vst [vmem:[#allocation6 + $0xc0] sm:$0xff] 0.0
          %897 = vst [vmem:[#allocation6 + $0xc8] sm:$0xff] 0.0
          %898 = vst [vmem:[#allocation6 + $0xd0] sm:$0xff] 0.0
          %899 = vst [vmem:[#allocation6 + $0xd8] sm:$0xff] 0.0
          %900 = vst [vmem:[#allocation6 + $0xe0] sm:$0xff] 0.0
          %901 = vst [vmem:[#allocation6 + $0xe8] sm:$0xff] 0.0
          %902 = vst [vmem:[#allocation6 + $0xf0] sm:$0xff] 0.0
          %903 = vst [vmem:[#allocation6 + $0xf8] sm:$0xff] 0.0
        $region64: #{tpu_custom_call.1} parent=43 // pred_fallthru
          _
        %v904 = vld [vmem:[%s331] sm:$0xff]
        %v905 = vld [vmem:[%s331 + $0x8] sm:$0xff]
        %v906 = vld [vmem:[%s331 + $0x10] sm:$0xff]
        %v907 = vld [vmem:[%s331 + $0x18] sm:$0xff]
        %v908 = vld [vmem:[%s331 + $0x20] sm:$0xff]
        %v909 = vld [vmem:[%s331 + $0x28] sm:$0xff]
        %v910 = vld [vmem:[%s331 + $0x30] sm:$0xff]
        %v911 = vld [vmem:[%s331 + $0x38] sm:$0xff]
        %v912 = vld [vmem:[%s331 + $0x40] sm:$0xff]
        %v913 = vld [vmem:[%s331 + $0x48] sm:$0xff]
        %v914 = vld [vmem:[%s331 + $0x50] sm:$0xff]
        %v915 = vld [vmem:[%s331 + $0x58] sm:$0xff]
        %v916 = vld [vmem:[%s331 + $0x60] sm:$0xff]
        %v917 = vld [vmem:[%s331 + $0x68] sm:$0xff]
        %v918 = vld [vmem:[%s331 + $0x70] sm:$0xff]
        %v919 = vld [vmem:[%s331 + $0x78] sm:$0xff]
        %v920 = vld [vmem:[%s331 + $0x80] sm:$0xff]
        %v921 = vld [vmem:[%s331 + $0x88] sm:$0xff]
        %v922 = vld [vmem:[%s331 + $0x90] sm:$0xff]
        %v923 = vld [vmem:[%s331 + $0x98] sm:$0xff]
        %v924 = vld [vmem:[%s331 + $0xa0] sm:$0xff]
        %v925 = vld [vmem:[%s331 + $0xa8] sm:$0xff]
        %v926 = vld [vmem:[%s331 + $0xb0] sm:$0xff]
        %v927 = vld [vmem:[%s331 + $0xb8] sm:$0xff]
        %v928 = vld [vmem:[%s331 + $0xc0] sm:$0xff]
        %v929 = vld [vmem:[%s331 + $0xc8] sm:$0xff]
        %v930 = vld [vmem:[%s331 + $0xd0] sm:$0xff]
        %v931 = vld [vmem:[%s331 + $0xd8] sm:$0xff]
        %v932 = vld [vmem:[%s331 + $0xe0] sm:$0xff]
        %v933 = vld [vmem:[%s331 + $0xe8] sm:$0xff]
        %v934 = vld [vmem:[%s331 + $0xf0] sm:$0xff]
        %v935 = vld [vmem:[%s331 + $0xf8] sm:$0xff]
        %v936 = vpack.c.bf16 %v905, %v904
        %v937 = vpack.c.bf16 %v907, %v906
        %v938 = vpack.c.bf16 %v909, %v908
        %v939 = vpack.c.bf16 %v911, %v910
        %v940 = vpack.c.bf16 %v913, %v912
        %v941 = vpack.c.bf16 %v915, %v914
        %v942 = vpack.c.bf16 %v917, %v916
        %v943 = vpack.c.bf16 %v919, %v918
        %v944 = vpack.c.bf16 %v921, %v920
        %v945 = vpack.c.bf16 %v923, %v922
        %v946 = vpack.c.bf16 %v925, %v924
        %v947 = vpack.c.bf16 %v927, %v926
        %v948 = vpack.c.bf16 %v929, %v928
        %v949 = vpack.c.bf16 %v931, %v930
        %v950 = vpack.c.bf16 %v933, %v932
        %v951 = vpack.c.bf16 %v935, %v934
        %v952 = vld [vmem:[#allocation13] sm:$0xff]
        %v953 = vld [vmem:[#allocation13 + $0x8] sm:$0xff]
        %v954 = vld [vmem:[#allocation13 + $0x10] sm:$0xff]
        %v955 = vld [vmem:[#allocation13 + $0x18] sm:$0xff]
        %v956 = vld [vmem:[#allocation13 + $0x20] sm:$0xff]
        %v957 = vld [vmem:[#allocation13 + $0x28] sm:$0xff]
        %v958 = vld [vmem:[#allocation13 + $0x30] sm:$0xff]
        %v959 = vld [vmem:[#allocation13 + $0x38] sm:$0xff]
        %v960 = vld [vmem:[#allocation13 + $0x40] sm:$0xff]
        %v961 = vld [vmem:[#allocation13 + $0x48] sm:$0xff]
        %v962 = vld [vmem:[#allocation13 + $0x50] sm:$0xff]
        %v963 = vld [vmem:[#allocation13 + $0x58] sm:$0xff]
        %v964 = vld [vmem:[#allocation13 + $0x60] sm:$0xff]
        %v965 = vld [vmem:[#allocation13 + $0x68] sm:$0xff]
        %v966 = vld [vmem:[#allocation13 + $0x70] sm:$0xff]
        %v967 = vld [vmem:[#allocation13 + $0x78] sm:$0xff]
        %v968 = vld [vmem:[%s5] sm:$0x3]
        %v970 = vperm.slane %v968, 0
        %v971 = vperm.slane %v968, 1
        %v990 = vunpack.c.l.b16 %v952
        %v991 = vunpack.c.h.b16 %v952
        %v992 = vunpack.c.l.b16 %v953
        %v993 = vunpack.c.h.b16 %v953
        %v994 = vunpack.c.l.b16 %v954
        %v995 = vunpack.c.h.b16 %v954
        %v996 = vunpack.c.l.b16 %v955
        %v997 = vunpack.c.h.b16 %v955
        %v998 = vunpack.c.l.b16 %v956
        %v999 = vunpack.c.h.b16 %v956
        %v1000 = vunpack.c.l.b16 %v957
        %v1001 = vunpack.c.h.b16 %v957
        %v1002 = vunpack.c.l.b16 %v958
        %v1003 = vunpack.c.h.b16 %v958
        %v1004 = vunpack.c.l.b16 %v959
        %v1005 = vunpack.c.h.b16 %v959
        %v1006 = vunpack.c.l.b16 %v960
        %v1007 = vunpack.c.h.b16 %v960
        %v1008 = vunpack.c.l.b16 %v961
        %v1009 = vunpack.c.h.b16 %v961
        %v1010 = vunpack.c.l.b16 %v962
        %v1011 = vunpack.c.h.b16 %v962
        %v1012 = vunpack.c.l.b16 %v963
        %v1013 = vunpack.c.h.b16 %v963
        %v1014 = vunpack.c.l.b16 %v964
        %v1015 = vunpack.c.h.b16 %v964
        %v1016 = vunpack.c.l.b16 %v965
        %v1017 = vunpack.c.h.b16 %v965
        %v1018 = vunpack.c.l.b16 %v966
        %v1019 = vunpack.c.h.b16 %v966
        %v1020 = vunpack.c.l.b16 %v967
        %v1021 = vunpack.c.h.b16 %v967
        %v1022 = vpack.c.b16 %v992, %v990
        %v1023 = vpack.c.b16 %v993, %v991
        %v1024 = vpack.c.b16 %v996, %v994
        %v1025 = vpack.c.b16 %v997, %v995
        %v1026 = vpack.c.b16 %v1000, %v998
        %v1027 = vpack.c.b16 %v1001, %v999
        %v1028 = vpack.c.b16 %v1004, %v1002
        %v1029 = vpack.c.b16 %v1005, %v1003
        %v1030 = vpack.c.b16 %v1008, %v1006
        %v1031 = vpack.c.b16 %v1009, %v1007
        %v1032 = vpack.c.b16 %v1012, %v1010
        %v1033 = vpack.c.b16 %v1013, %v1011
        %v1034 = vpack.c.b16 %v1016, %v1014
        %v1035 = vpack.c.b16 %v1017, %v1015
        %v1036 = vpack.c.b16 %v1020, %v1018
        %v1037 = vpack.c.b16 %v1021, %v1019
        %1054 = vmatpush.bf16.msra.mxu0 %v1036
        %1055 = vmatpush.bf16.msra.mxu0 %v1034
        %1056 = vmatpush.bf16.msra.mxu0 %v1032
        %1057 = vmatpush.bf16.msra.mxu0 %v1030
        %1058 = vmatpush.bf16.msra.mxu0 %v1028
        %1059 = vmatpush.bf16.msra.mxu0 %v1026
        %1060 = vmatpush.bf16.msra.mxu0 %v1024
        %1061 = vmatpush.bf16.msra.mxu0 %v1022
        %1062 = vmatmul.bf16.gmra.mxu0 %v936
        %v1063 = vpop.f32.mrf.mxu0
        %v1064 = vadd.f32 %v970, %v1063
        %v1065 = vpop.f32.mrf.mxu0
        %v1066 = vadd.f32 %v970, %v1065
        %1067 = vmatmul.bf16.gmra.mxu0 %v937
        %v1068 = vpop.f32.mrf.mxu0
        %v1069 = vadd.f32 %v970, %v1068
        %v1070 = vpop.f32.mrf.mxu0
        %v1071 = vadd.f32 %v970, %v1070
        %1072 = vmatmul.bf16.gmra.mxu0 %v938
        %v1073 = vpop.f32.mrf.mxu0
        %v1074 = vadd.f32 %v970, %v1073
        %v1075 = vpop.f32.mrf.mxu0
        %v1076 = vadd.f32 %v970, %v1075
        %1077 = vmatmul.bf16.gmra.mxu0 %v939
        %v1078 = vpop.f32.mrf.mxu0
        %v1079 = vadd.f32 %v970, %v1078
        %v1080 = vpop.f32.mrf.mxu0
        %v1081 = vadd.f32 %v970, %v1080
        %1082 = vmatmul.bf16.gmra.mxu0 %v940
        %v1083 = vpop.f32.mrf.mxu0
        %v1084 = vadd.f32 %v970, %v1083
        %v1085 = vpop.f32.mrf.mxu0
        %v1086 = vadd.f32 %v970, %v1085
        %1087 = vmatmul.bf16.gmra.mxu0 %v941
        %v1088 = vpop.f32.mrf.mxu0
        %v1089 = vadd.f32 %v970, %v1088
        %v1090 = vpop.f32.mrf.mxu0
        %v1091 = vadd.f32 %v970, %v1090
        %1092 = vmatmul.bf16.gmra.mxu0 %v942
        %v1093 = vpop.f32.mrf.mxu0
        %v1094 = vadd.f32 %v970, %v1093
        %v1095 = vpop.f32.mrf.mxu0
        %v1096 = vadd.f32 %v970, %v1095
        %1097 = vmatmul.bf16.gmra.mxu0 %v943
        %v1098 = vpop.f32.mrf.mxu0
        %v1099 = vadd.f32 %v970, %v1098
        %v1100 = vpop.f32.mrf.mxu0
        %v1101 = vadd.f32 %v970, %v1100
        %1102 = vmatmul.bf16.gmra.mxu0 %v944
        %v1103 = vpop.f32.mrf.mxu0
        %v1104 = vadd.f32 %v970, %v1103
        %v1105 = vpop.f32.mrf.mxu0
        %v1106 = vadd.f32 %v970, %v1105
        %1107 = vmatmul.bf16.gmra.mxu0 %v945
        %v1108 = vpop.f32.mrf.mxu0
        %v1109 = vadd.f32 %v970, %v1108
        %v1110 = vpop.f32.mrf.mxu0
        %v1111 = vadd.f32 %v970, %v1110
        %1112 = vmatmul.bf16.gmra.mxu0 %v946
        %v1113 = vpop.f32.mrf.mxu0
        %v1114 = vadd.f32 %v970, %v1113
        %v1115 = vpop.f32.mrf.mxu0
        %v1116 = vadd.f32 %v970, %v1115
        %1117 = vmatmul.bf16.gmra.mxu0 %v947
        %v1118 = vpop.f32.mrf.mxu0
        %v1119 = vadd.f32 %v970, %v1118
        %v1120 = vpop.f32.mrf.mxu0
        %v1121 = vadd.f32 %v970, %v1120
        %1122 = vmatmul.bf16.gmra.mxu0 %v948
        %v1123 = vpop.f32.mrf.mxu0
        %v1124 = vadd.f32 %v970, %v1123
        %v1125 = vpop.f32.mrf.mxu0
        %v1126 = vadd.f32 %v970, %v1125
        %1127 = vmatmul.bf16.gmra.mxu0 %v949
        %v1128 = vpop.f32.mrf.mxu0
        %v1129 = vadd.f32 %v970, %v1128
        %v1130 = vpop.f32.mrf.mxu0
        %v1131 = vadd.f32 %v970, %v1130
        %1132 = vmatmul.bf16.gmra.mxu0 %v950
        %v1133 = vpop.f32.mrf.mxu0
        %v1134 = vadd.f32 %v970, %v1133
        %v1135 = vpop.f32.mrf.mxu0
        %v1136 = vadd.f32 %v970, %v1135
        %1137 = vmatmul.bf16.gmra.mxu0 %v951
        %v1138 = vpop.f32.mrf.mxu0
        %v1139 = vadd.f32 %v970, %v1138
        %v1140 = vpop.f32.mrf.mxu0
        %v1141 = vadd.f32 %v970, %v1140
        %1142 = vdwg.mxu0
        %1143 = vmatpush.bf16.msra.mxu0 %v1037
        %1144 = vmatpush.bf16.msra.mxu0 %v1035
        %1145 = vmatpush.bf16.msra.mxu0 %v1033
        %1146 = vmatpush.bf16.msra.mxu0 %v1031
        %1147 = vmatpush.bf16.msra.mxu0 %v1029
        %1148 = vmatpush.bf16.msra.mxu0 %v1027
        %1149 = vmatpush.bf16.msra.mxu0 %v1025
        %1150 = vmatpush.bf16.msra.mxu0 %v1023
        %1151 = vmatmul.bf16.gmra.mxu0 %v936
        %v1152 = vpop.f32.mrf.mxu0
        %v1153 = vadd.f32 %v971, %v1152
        %v1154 = vpop.f32.mrf.mxu0
        %v1155 = vadd.f32 %v971, %v1154
        %1156 = vmatmul.bf16.gmra.mxu0 %v937
        %v1157 = vpop.f32.mrf.mxu0
        %v1158 = vadd.f32 %v971, %v1157
        %v1159 = vpop.f32.mrf.mxu0
        %v1160 = vadd.f32 %v971, %v1159
        %1161 = vmatmul.bf16.gmra.mxu0 %v938
        %v1162 = vpop.f32.mrf.mxu0
        %v1163 = vadd.f32 %v971, %v1162
        %v1164 = vpop.f32.mrf.mxu0
        %v1165 = vadd.f32 %v971, %v1164
        %1166 = vmatmul.bf16.gmra.mxu0 %v939
        %v1167 = vpop.f32.mrf.mxu0
        %v1168 = vadd.f32 %v971, %v1167
        %v1169 = vpop.f32.mrf.mxu0
        %v1170 = vadd.f32 %v971, %v1169
        %1171 = vmatmul.bf16.gmra.mxu0 %v940
        %v1172 = vpop.f32.mrf.mxu0
        %v1173 = vadd.f32 %v971, %v1172
        %v1174 = vpop.f32.mrf.mxu0
        %v1175 = vadd.f32 %v971, %v1174
        %1176 = vmatmul.bf16.gmra.mxu0 %v941
        %v1177 = vpop.f32.mrf.mxu0
        %v1178 = vadd.f32 %v971, %v1177
        %v1179 = vpop.f32.mrf.mxu0
        %v1180 = vadd.f32 %v971, %v1179
        %1181 = vmatmul.bf16.gmra.mxu0 %v942
        %v1182 = vpop.f32.mrf.mxu0
        %v1183 = vadd.f32 %v971, %v1182
        %v1184 = vpop.f32.mrf.mxu0
        %v1185 = vadd.f32 %v971, %v1184
        %1186 = vmatmul.bf16.gmra.mxu0 %v943
        %v1187 = vpop.f32.mrf.mxu0
        %v1188 = vadd.f32 %v971, %v1187
        %v1189 = vpop.f32.mrf.mxu0
        %v1190 = vadd.f32 %v971, %v1189
        %1191 = vmatmul.bf16.gmra.mxu0 %v944
        %v1192 = vpop.f32.mrf.mxu0
        %v1193 = vadd.f32 %v971, %v1192
        %v1194 = vpop.f32.mrf.mxu0
        %v1195 = vadd.f32 %v971, %v1194
        %1196 = vmatmul.bf16.gmra.mxu0 %v945
        %v1197 = vpop.f32.mrf.mxu0
        %v1198 = vadd.f32 %v971, %v1197
        %v1199 = vpop.f32.mrf.mxu0
        %v1200 = vadd.f32 %v971, %v1199
        %1201 = vmatmul.bf16.gmra.mxu0 %v946
        %v1202 = vpop.f32.mrf.mxu0
        %v1203 = vadd.f32 %v971, %v1202
        %v1204 = vpop.f32.mrf.mxu0
        %v1205 = vadd.f32 %v971, %v1204
        %1206 = vmatmul.bf16.gmra.mxu0 %v947
        %v1207 = vpop.f32.mrf.mxu0
        %v1208 = vadd.f32 %v971, %v1207
        %v1209 = vpop.f32.mrf.mxu0
        %v1210 = vadd.f32 %v971, %v1209
        %1211 = vmatmul.bf16.gmra.mxu0 %v948
        %v1212 = vpop.f32.mrf.mxu0
        %v1213 = vadd.f32 %v971, %v1212
        %v1214 = vpop.f32.mrf.mxu0
        %v1215 = vadd.f32 %v971, %v1214
        %1216 = vmatmul.bf16.gmra.mxu0 %v949
        %v1217 = vpop.f32.mrf.mxu0
        %v1218 = vadd.f32 %v971, %v1217
        %v1219 = vpop.f32.mrf.mxu0
        %v1220 = vadd.f32 %v971, %v1219
        %1221 = vmatmul.bf16.gmra.mxu0 %v950
        %v1222 = vpop.f32.mrf.mxu0
        %v1223 = vadd.f32 %v971, %v1222
        %v1224 = vpop.f32.mrf.mxu0
        %v1225 = vadd.f32 %v971, %v1224
        %1226 = vmatmul.bf16.gmra.mxu0 %v951
        %v1227 = vpop.f32.mrf.mxu0
        %v1228 = vadd.f32 %v971, %v1227
        %v1229 = vpop.f32.mrf.mxu0
        %v1230 = vadd.f32 %v971, %v1229
        %1231 = vdwg.mxu0
        %v1232 = vpack.c.bf16 %v1066, %v1064
        %v1233 = vpack.c.bf16 %v1071, %v1069
        %v1234 = vpack.c.bf16 %v1076, %v1074
        %v1235 = vpack.c.bf16 %v1081, %v1079
        %v1236 = vpack.c.bf16 %v1086, %v1084
        %v1237 = vpack.c.bf16 %v1091, %v1089
        %v1238 = vpack.c.bf16 %v1096, %v1094
        %v1239 = vpack.c.bf16 %v1101, %v1099
        %v1240 = vpack.c.bf16 %v1106, %v1104
        %v1241 = vpack.c.bf16 %v1111, %v1109
        %v1242 = vpack.c.bf16 %v1116, %v1114
        %v1243 = vpack.c.bf16 %v1121, %v1119
        %v1244 = vpack.c.bf16 %v1126, %v1124
        %v1245 = vpack.c.bf16 %v1131, %v1129
        %v1246 = vpack.c.bf16 %v1136, %v1134
        %v1247 = vpack.c.bf16 %v1141, %v1139
        %v1248 = vpack.c.bf16 %v1155, %v1153
        %v1249 = vpack.c.bf16 %v1160, %v1158
        %v1250 = vpack.c.bf16 %v1165, %v1163
        %v1251 = vpack.c.bf16 %v1170, %v1168
        %v1252 = vpack.c.bf16 %v1175, %v1173
        %v1253 = vpack.c.bf16 %v1180, %v1178
        %v1254 = vpack.c.bf16 %v1185, %v1183
        %v1255 = vpack.c.bf16 %v1190, %v1188
        %v1256 = vpack.c.bf16 %v1195, %v1193
        %v1257 = vpack.c.bf16 %v1200, %v1198
        %v1258 = vpack.c.bf16 %v1205, %v1203
        %v1259 = vpack.c.bf16 %v1210, %v1208
        %v1260 = vpack.c.bf16 %v1215, %v1213
        %v1261 = vpack.c.bf16 %v1220, %v1218
        %v1262 = vpack.c.bf16 %v1225, %v1223
        %v1263 = vpack.c.bf16 %v1230, %v1228
        %v1264 = vld [vmem:[#allocation2] sm:$0xf]
        %v1265 = vld [vmem:[#allocation2 + $0x4] sm:$0xf]
        %v1266 = vld [vmem:[#allocation2 + $0x8] sm:$0xf]
        %v1267 = vld [vmem:[#allocation2 + $0xc] sm:$0xf]
        %v1268 = vld [vmem:[#allocation2 + $0x10] sm:$0xf]
        %v1269 = vld [vmem:[#allocation2 + $0x14] sm:$0xf]
        %v1270 = vld [vmem:[#allocation2 + $0x18] sm:$0xf]
        %v1271 = vld [vmem:[#allocation2 + $0x1c] sm:$0xf]
        %v1272 = vld [vmem:[#allocation2 + $0x20] sm:$0xf]
        %v1273 = vld [vmem:[#allocation2 + $0x24] sm:$0xf]
        %v1274 = vld [vmem:[#allocation2 + $0x28] sm:$0xf]
        %v1275 = vld [vmem:[#allocation2 + $0x2c] sm:$0xf]
        %v1276 = vld [vmem:[#allocation2 + $0x30] sm:$0xf]
        %v1277 = vld [vmem:[#allocation2 + $0x34] sm:$0xf]
        %v1278 = vld [vmem:[#allocation2 + $0x38] sm:$0xf]
        %v1279 = vld [vmem:[#allocation2 + $0x3c] sm:$0xf]
        %v1280 = vld [vmem:[#allocation2 + $0x40] sm:$0xf]
        %v1281 = vld [vmem:[#allocation2 + $0x44] sm:$0xf]
        %v1282 = vld [vmem:[#allocation2 + $0x48] sm:$0xf]
        %v1283 = vld [vmem:[#allocation2 + $0x4c] sm:$0xf]
        %v1284 = vld [vmem:[#allocation2 + $0x50] sm:$0xf]
        %v1285 = vld [vmem:[#allocation2 + $0x54] sm:$0xf]
        %v1286 = vld [vmem:[#allocation2 + $0x58] sm:$0xf]
        %v1287 = vld [vmem:[#allocation2 + $0x5c] sm:$0xf]
        %v1288 = vld [vmem:[#allocation2 + $0x60] sm:$0xf]
        %v1289 = vld [vmem:[#allocation2 + $0x64] sm:$0xf]
        %v1290 = vld [vmem:[#allocation2 + $0x68] sm:$0xf]
        %v1291 = vld [vmem:[#allocation2 + $0x6c] sm:$0xf]
        %v1292 = vld [vmem:[#allocation2 + $0x70] sm:$0xf]
        %v1293 = vld [vmem:[#allocation2 + $0x74] sm:$0xf]
        %v1294 = vld [vmem:[#allocation2 + $0x78] sm:$0xf]
        %v1295 = vld [vmem:[#allocation2 + $0x7c] sm:$0xf]
        %v1328 = vunpack.c.l.b16 %v1264
        %v1329 = vunpack.c.l.b16 %v1265
        %v1330 = vunpack.c.l.b16 %v1266
        %v1331 = vunpack.c.l.b16 %v1267
        %v1332 = vunpack.c.l.b16 %v1268
        %v1333 = vunpack.c.l.b16 %v1269
        %v1334 = vunpack.c.l.b16 %v1270
        %v1335 = vunpack.c.l.b16 %v1271
        %v1336 = vunpack.c.l.b16 %v1272
        %v1337 = vunpack.c.l.b16 %v1273
        %v1338 = vunpack.c.l.b16 %v1274
        %v1339 = vunpack.c.l.b16 %v1275
        %v1340 = vunpack.c.l.b16 %v1276
        %v1341 = vunpack.c.l.b16 %v1277
        %v1342 = vunpack.c.l.b16 %v1278
        %v1343 = vunpack.c.l.b16 %v1279
        %v1344 = vunpack.c.l.b16 %v1280
        %v1345 = vunpack.c.l.b16 %v1281
        %v1346 = vunpack.c.l.b16 %v1282
        %v1347 = vunpack.c.l.b16 %v1283
        %v1348 = vunpack.c.l.b16 %v1284
        %v1349 = vunpack.c.l.b16 %v1285
        %v1350 = vunpack.c.l.b16 %v1286
        %v1351 = vunpack.c.l.b16 %v1287
        %v1352 = vunpack.c.l.b16 %v1288
        %v1353 = vunpack.c.l.b16 %v1289
        %v1354 = vunpack.c.l.b16 %v1290
        %v1355 = vunpack.c.l.b16 %v1291
        %v1356 = vunpack.c.l.b16 %v1292
        %v1357 = vunpack.c.l.b16 %v1293
        %v1358 = vunpack.c.l.b16 %v1294
        %v1359 = vunpack.c.l.b16 %v1295
        %v1360 = vpack.c.b16 %v1329, %v1328
        %v1361 = vpack.c.b16 %v1331, %v1330
        %v1362 = vpack.c.b16 %v1333, %v1332
        %v1363 = vpack.c.b16 %v1335, %v1334
        %v1364 = vpack.c.b16 %v1337, %v1336
        %v1365 = vpack.c.b16 %v1339, %v1338
        %v1366 = vpack.c.b16 %v1341, %v1340
        %v1367 = vpack.c.b16 %v1343, %v1342
        %v1368 = vpack.c.b16 %v1345, %v1344
        %v1369 = vpack.c.b16 %v1347, %v1346
        %v1370 = vpack.c.b16 %v1349, %v1348
        %v1371 = vpack.c.b16 %v1351, %v1350
        %v1372 = vpack.c.b16 %v1353, %v1352
        %v1373 = vpack.c.b16 %v1355, %v1354
        %v1374 = vpack.c.b16 %v1357, %v1356
        %v1375 = vpack.c.b16 %v1359, %v1358
        %1392 = vmatpush.bf16.xpose.msra.mxu0 %v1239
        %1393 = vmatpush.bf16.xpose.msra.mxu0 %v1238
        %1394 = vmatpush.bf16.xpose.msra.mxu0 %v1237
        %1395 = vmatpush.bf16.xpose.msra.mxu0 %v1236
        %1396 = vmatpush.bf16.xpose.msra.mxu0 %v1235
        %1397 = vmatpush.bf16.xpose.msra.mxu0 %v1234
        %1398 = vmatpush.bf16.xpose.msra.mxu0 %v1233
        %1399 = vmatpush.bf16.xpose.msra.mxu0 %v1232
        %1400 = vmatmul.bf16.gmra.mxu0 %v1360
        %v1401 = vpop.f32.mrf.mxu0
        %v1402 = vadd.f32 0.0, %v1401
        %v1403 = vpop.f32.mrf.mxu0
        %v1404 = vadd.f32 0.0, %v1403
        %1405 = vmatmul.bf16.gmra.mxu0 %v1361
        %v1406 = vpop.f32.mrf.mxu0
        %v1407 = vadd.f32 0.0, %v1406
        %v1408 = vpop.f32.mrf.mxu0
        %v1409 = vadd.f32 0.0, %v1408
        %1410 = vmatmul.bf16.gmra.mxu0 %v1362
        %v1411 = vpop.f32.mrf.mxu0
        %v1412 = vadd.f32 0.0, %v1411
        %v1413 = vpop.f32.mrf.mxu0
        %v1414 = vadd.f32 0.0, %v1413
        %1415 = vmatmul.bf16.gmra.mxu0 %v1363
        %v1416 = vpop.f32.mrf.mxu0
        %v1417 = vadd.f32 0.0, %v1416
        %v1418 = vpop.f32.mrf.mxu0
        %v1419 = vadd.f32 0.0, %v1418
        %1420 = vmatmul.bf16.gmra.mxu0 %v1364
        %v1421 = vpop.f32.mrf.mxu0
        %v1422 = vadd.f32 0.0, %v1421
        %v1423 = vpop.f32.mrf.mxu0
        %v1424 = vadd.f32 0.0, %v1423
        %1425 = vmatmul.bf16.gmra.mxu0 %v1365
        %v1426 = vpop.f32.mrf.mxu0
        %v1427 = vadd.f32 0.0, %v1426
        %v1428 = vpop.f32.mrf.mxu0
        %v1429 = vadd.f32 0.0, %v1428
        %1430 = vmatmul.bf16.gmra.mxu0 %v1366
        %v1431 = vpop.f32.mrf.mxu0
        %v1432 = vadd.f32 0.0, %v1431
        %v1433 = vpop.f32.mrf.mxu0
        %v1434 = vadd.f32 0.0, %v1433
        %1435 = vmatmul.bf16.gmra.mxu0 %v1367
        %v1436 = vpop.f32.mrf.mxu0
        %v1437 = vadd.f32 0.0, %v1436
        %v1438 = vpop.f32.mrf.mxu0
        %v1439 = vadd.f32 0.0, %v1438
        %1440 = vmatmul.bf16.gmra.mxu0 %v1368
        %v1441 = vpop.f32.mrf.mxu0
        %v1442 = vadd.f32 0.0, %v1441
        %v1443 = vpop.f32.mrf.mxu0
        %v1444 = vadd.f32 0.0, %v1443
        %1445 = vmatmul.bf16.gmra.mxu0 %v1369
        %v1446 = vpop.f32.mrf.mxu0
        %v1447 = vadd.f32 0.0, %v1446
        %v1448 = vpop.f32.mrf.mxu0
        %v1449 = vadd.f32 0.0, %v1448
        %1450 = vmatmul.bf16.gmra.mxu0 %v1370
        %v1451 = vpop.f32.mrf.mxu0
        %v1452 = vadd.f32 0.0, %v1451
        %v1453 = vpop.f32.mrf.mxu0
        %v1454 = vadd.f32 0.0, %v1453
        %1455 = vmatmul.bf16.gmra.mxu0 %v1371
        %v1456 = vpop.f32.mrf.mxu0
        %v1457 = vadd.f32 0.0, %v1456
        %v1458 = vpop.f32.mrf.mxu0
        %v1459 = vadd.f32 0.0, %v1458
        %1460 = vmatmul.bf16.gmra.mxu0 %v1372
        %v1461 = vpop.f32.mrf.mxu0
        %v1462 = vadd.f32 0.0, %v1461
        %v1463 = vpop.f32.mrf.mxu0
        %v1464 = vadd.f32 0.0, %v1463
        %1465 = vmatmul.bf16.gmra.mxu0 %v1373
        %v1466 = vpop.f32.mrf.mxu0
        %v1467 = vadd.f32 0.0, %v1466
        %v1468 = vpop.f32.mrf.mxu0
        %v1469 = vadd.f32 0.0, %v1468
        %1470 = vmatmul.bf16.gmra.mxu0 %v1374
        %v1471 = vpop.f32.mrf.mxu0
        %v1472 = vadd.f32 0.0, %v1471
        %v1473 = vpop.f32.mrf.mxu0
        %v1474 = vadd.f32 0.0, %v1473
        %1475 = vmatmul.bf16.gmra.mxu0 %v1375
        %v1476 = vpop.f32.mrf.mxu0
        %v1477 = vadd.f32 0.0, %v1476
        %v1478 = vpop.f32.mrf.mxu0
        %v1479 = vadd.f32 0.0, %v1478
        %1480 = vdwg.mxu0
        %1481 = vmatpush.bf16.xpose.msra.mxu0 %v1247
        %1482 = vmatpush.bf16.xpose.msra.mxu0 %v1246
        %1483 = vmatpush.bf16.xpose.msra.mxu0 %v1245
        %1484 = vmatpush.bf16.xpose.msra.mxu0 %v1244
        %1485 = vmatpush.bf16.xpose.msra.mxu0 %v1243
        %1486 = vmatpush.bf16.xpose.msra.mxu0 %v1242
        %1487 = vmatpush.bf16.xpose.msra.mxu0 %v1241
        %1488 = vmatpush.bf16.xpose.msra.mxu0 %v1240
        %1489 = vmatmul.bf16.gmra.mxu0 %v1360
        %v1490 = vpop.f32.mrf.mxu0
        %v1491 = vadd.f32 0.0, %v1490
        %v1492 = vpop.f32.mrf.mxu0
        %v1493 = vadd.f32 0.0, %v1492
        %1494 = vmatmul.bf16.gmra.mxu0 %v1361
        %v1495 = vpop.f32.mrf.mxu0
        %v1496 = vadd.f32 0.0, %v1495
        %v1497 = vpop.f32.mrf.mxu0
        %v1498 = vadd.f32 0.0, %v1497
        %1499 = vmatmul.bf16.gmra.mxu0 %v1362
        %v1500 = vpop.f32.mrf.mxu0
        %v1501 = vadd.f32 0.0, %v1500
        %v1502 = vpop.f32.mrf.mxu0
        %v1503 = vadd.f32 0.0, %v1502
        %1504 = vmatmul.bf16.gmra.mxu0 %v1363
        %v1505 = vpop.f32.mrf.mxu0
        %v1506 = vadd.f32 0.0, %v1505
        %v1507 = vpop.f32.mrf.mxu0
        %v1508 = vadd.f32 0.0, %v1507
        %1509 = vmatmul.bf16.gmra.mxu0 %v1364
        %v1510 = vpop.f32.mrf.mxu0
        %v1511 = vadd.f32 0.0, %v1510
        %v1512 = vpop.f32.mrf.mxu0
        %v1513 = vadd.f32 0.0, %v1512
        %1514 = vmatmul.bf16.gmra.mxu0 %v1365
        %v1515 = vpop.f32.mrf.mxu0
        %v1516 = vadd.f32 0.0, %v1515
        %v1517 = vpop.f32.mrf.mxu0
        %v1518 = vadd.f32 0.0, %v1517
        %1519 = vmatmul.bf16.gmra.mxu0 %v1366
        %v1520 = vpop.f32.mrf.mxu0
        %v1521 = vadd.f32 0.0, %v1520
        %v1522 = vpop.f32.mrf.mxu0
        %v1523 = vadd.f32 0.0, %v1522
        %1524 = vmatmul.bf16.gmra.mxu0 %v1367
        %v1525 = vpop.f32.mrf.mxu0
        %v1526 = vadd.f32 0.0, %v1525
        %v1527 = vpop.f32.mrf.mxu0
        %v1528 = vadd.f32 0.0, %v1527
        %1529 = vmatmul.bf16.gmra.mxu0 %v1368
        %v1530 = vpop.f32.mrf.mxu0
        %v1531 = vadd.f32 0.0, %v1530
        %v1532 = vpop.f32.mrf.mxu0
        %v1533 = vadd.f32 0.0, %v1532
        %1534 = vmatmul.bf16.gmra.mxu0 %v1369
        %v1535 = vpop.f32.mrf.mxu0
        %v1536 = vadd.f32 0.0, %v1535
        %v1537 = vpop.f32.mrf.mxu0
        %v1538 = vadd.f32 0.0, %v1537
        %1539 = vmatmul.bf16.gmra.mxu0 %v1370
        %v1540 = vpop.f32.mrf.mxu0
        %v1541 = vadd.f32 0.0, %v1540
        %v1542 = vpop.f32.mrf.mxu0
        %v1543 = vadd.f32 0.0, %v1542
        %1544 = vmatmul.bf16.gmra.mxu0 %v1371
        %v1545 = vpop.f32.mrf.mxu0
        %v1546 = vadd.f32 0.0, %v1545
        %v1547 = vpop.f32.mrf.mxu0
        %v1548 = vadd.f32 0.0, %v1547
        %1549 = vmatmul.bf16.gmra.mxu0 %v1372
        %v1550 = vpop.f32.mrf.mxu0
        %v1551 = vadd.f32 0.0, %v1550
        %v1552 = vpop.f32.mrf.mxu0
        %v1553 = vadd.f32 0.0, %v1552
        %1554 = vmatmul.bf16.gmra.mxu0 %v1373
        %v1555 = vpop.f32.mrf.mxu0
        %v1556 = vadd.f32 0.0, %v1555
        %v1557 = vpop.f32.mrf.mxu0
        %v1558 = vadd.f32 0.0, %v1557
        %1559 = vmatmul.bf16.gmra.mxu0 %v1374
        %v1560 = vpop.f32.mrf.mxu0
        %v1561 = vadd.f32 0.0, %v1560
        %v1562 = vpop.f32.mrf.mxu0
        %v1563 = vadd.f32 0.0, %v1562
        %1564 = vmatmul.bf16.gmra.mxu0 %v1375
        %v1565 = vpop.f32.mrf.mxu0
        %v1566 = vadd.f32 0.0, %v1565
        %v1567 = vpop.f32.mrf.mxu0
        %v1568 = vadd.f32 0.0, %v1567
        %1569 = vdwg.mxu0
        %v1570 = vld [vmem:[#allocation4] sm:$0xff]
        %v1571 = vld [vmem:[#allocation4 + $0x8] sm:$0xff]
        %v1572 = vld [vmem:[#allocation4 + $0x10] sm:$0xff]
        %v1573 = vld [vmem:[#allocation4 + $0x18] sm:$0xff]
        %v1574 = vld [vmem:[#allocation4 + $0x20] sm:$0xff]
        %v1575 = vld [vmem:[#allocation4 + $0x28] sm:$0xff]
        %v1576 = vld [vmem:[#allocation4 + $0x30] sm:$0xff]
        %v1577 = vld [vmem:[#allocation4 + $0x38] sm:$0xff]
        %v1578 = vld [vmem:[#allocation4 + $0x40] sm:$0xff]
        %v1579 = vld [vmem:[#allocation4 + $0x48] sm:$0xff]
        %v1580 = vld [vmem:[#allocation4 + $0x50] sm:$0xff]
        %v1581 = vld [vmem:[#allocation4 + $0x58] sm:$0xff]
        %v1582 = vld [vmem:[#allocation4 + $0x60] sm:$0xff]
        %v1583 = vld [vmem:[#allocation4 + $0x68] sm:$0xff]
        %v1584 = vld [vmem:[#allocation4 + $0x70] sm:$0xff]
        %v1585 = vld [vmem:[#allocation4 + $0x78] sm:$0xff]
        %v1586 = vld [vmem:[#allocation4 + $0x80] sm:$0xff]
        %v1587 = vld [vmem:[#allocation4 + $0x88] sm:$0xff]
        %v1588 = vld [vmem:[#allocation4 + $0x90] sm:$0xff]
        %v1589 = vld [vmem:[#allocation4 + $0x98] sm:$0xff]
        %v1590 = vld [vmem:[#allocation4 + $0xa0] sm:$0xff]
        %v1591 = vld [vmem:[#allocation4 + $0xa8] sm:$0xff]
        %v1592 = vld [vmem:[#allocation4 + $0xb0] sm:$0xff]
        %v1593 = vld [vmem:[#allocation4 + $0xb8] sm:$0xff]
        %v1594 = vld [vmem:[#allocation4 + $0xc0] sm:$0xff]
        %v1595 = vld [vmem:[#allocation4 + $0xc8] sm:$0xff]
        %v1596 = vld [vmem:[#allocation4 + $0xd0] sm:$0xff]
        %v1597 = vld [vmem:[#allocation4 + $0xd8] sm:$0xff]
        %v1598 = vld [vmem:[#allocation4 + $0xe0] sm:$0xff]
        %v1599 = vld [vmem:[#allocation4 + $0xe8] sm:$0xff]
        %v1600 = vld [vmem:[#allocation4 + $0xf0] sm:$0xff]
        %v1601 = vld [vmem:[#allocation4 + $0xf8] sm:$0xff]
        %v1602 = vmax.f32 %v1402, %v1491
        %1603 = vmax.xlane.f32.xlu0 %v1602
        %v1604 = vpop.xlane.xlu0 %1603
        %v1605 = vmax.f32 %v1404, %v1493
        %1606 = vmax.xlane.f32.xlu0 %v1605
        %v1607 = vpop.xlane.xlu0 %1606
        %v1608 = vmax.f32 %v1407, %v1496
        %1609 = vmax.xlane.f32.xlu0 %v1608
        %v1610 = vpop.xlane.xlu0 %1609
        %v1611 = vmax.f32 %v1409, %v1498
        %1612 = vmax.xlane.f32.xlu0 %v1611
        %v1613 = vpop.xlane.xlu0 %1612
        %v1614 = vmax.f32 %v1412, %v1501
        %1615 = vmax.xlane.f32.xlu0 %v1614
        %v1616 = vpop.xlane.xlu0 %1615
        %v1617 = vmax.f32 %v1414, %v1503
        %1618 = vmax.xlane.f32.xlu0 %v1617
        %v1619 = vpop.xlane.xlu0 %1618
        %v1620 = vmax.f32 %v1417, %v1506
        %1621 = vmax.xlane.f32.xlu0 %v1620
        %v1622 = vpop.xlane.xlu0 %1621
        %v1623 = vmax.f32 %v1419, %v1508
        %1624 = vmax.xlane.f32.xlu0 %v1623
        %v1625 = vpop.xlane.xlu0 %1624
        %v1626 = vmax.f32 %v1422, %v1511
        %1627 = vmax.xlane.f32.xlu0 %v1626
        %v1628 = vpop.xlane.xlu0 %1627
        %v1629 = vmax.f32 %v1424, %v1513
        %1630 = vmax.xlane.f32.xlu0 %v1629
        %v1631 = vpop.xlane.xlu0 %1630
        %v1632 = vmax.f32 %v1427, %v1516
        %1633 = vmax.xlane.f32.xlu0 %v1632
        %v1634 = vpop.xlane.xlu0 %1633
        %v1635 = vmax.f32 %v1429, %v1518
        %1636 = vmax.xlane.f32.xlu0 %v1635
        %v1637 = vpop.xlane.xlu0 %1636
        %v1638 = vmax.f32 %v1432, %v1521
        %1639 = vmax.xlane.f32.xlu0 %v1638
        %v1640 = vpop.xlane.xlu0 %1639
        %v1641 = vmax.f32 %v1434, %v1523
        %1642 = vmax.xlane.f32.xlu0 %v1641
        %v1643 = vpop.xlane.xlu0 %1642
        %v1644 = vmax.f32 %v1437, %v1526
        %1645 = vmax.xlane.f32.xlu0 %v1644
        %v1646 = vpop.xlane.xlu0 %1645
        %v1647 = vmax.f32 %v1439, %v1528
        %1648 = vmax.xlane.f32.xlu0 %v1647
        %v1649 = vpop.xlane.xlu0 %1648
        %v1650 = vmax.f32 %v1442, %v1531
        %1651 = vmax.xlane.f32.xlu0 %v1650
        %v1652 = vpop.xlane.xlu0 %1651
        %v1653 = vmax.f32 %v1444, %v1533
        %1654 = vmax.xlane.f32.xlu0 %v1653
        %v1655 = vpop.xlane.xlu0 %1654
        %v1656 = vmax.f32 %v1447, %v1536
        %1657 = vmax.xlane.f32.xlu0 %v1656
        %v1658 = vpop.xlane.xlu0 %1657
        %v1659 = vmax.f32 %v1449, %v1538
        %1660 = vmax.xlane.f32.xlu0 %v1659
        %v1661 = vpop.xlane.xlu0 %1660
        %v1662 = vmax.f32 %v1452, %v1541
        %1663 = vmax.xlane.f32.xlu0 %v1662
        %v1664 = vpop.xlane.xlu0 %1663
        %v1665 = vmax.f32 %v1454, %v1543
        %1666 = vmax.xlane.f32.xlu0 %v1665
        %v1667 = vpop.xlane.xlu0 %1666
        %v1668 = vmax.f32 %v1457, %v1546
        %1669 = vmax.xlane.f32.xlu0 %v1668
        %v1670 = vpop.xlane.xlu0 %1669
        %v1671 = vmax.f32 %v1459, %v1548
        %1672 = vmax.xlane.f32.xlu0 %v1671
        %v1673 = vpop.xlane.xlu0 %1672
        %v1674 = vmax.f32 %v1462, %v1551
        %1675 = vmax.xlane.f32.xlu0 %v1674
        %v1676 = vpop.xlane.xlu0 %1675
        %v1677 = vmax.f32 %v1464, %v1553
        %1678 = vmax.xlane.f32.xlu0 %v1677
        %v1679 = vpop.xlane.xlu0 %1678
        %v1680 = vmax.f32 %v1467, %v1556
        %1681 = vmax.xlane.f32.xlu0 %v1680
        %v1682 = vpop.xlane.xlu0 %1681
        %v1683 = vmax.f32 %v1469, %v1558
        %1684 = vmax.xlane.f32.xlu0 %v1683
        %v1685 = vpop.xlane.xlu0 %1684
        %v1686 = vmax.f32 %v1472, %v1561
        %1687 = vmax.xlane.f32.xlu0 %v1686
        %v1688 = vpop.xlane.xlu0 %1687
        %v1689 = vmax.f32 %v1474, %v1563
        %1690 = vmax.xlane.f32.xlu0 %v1689
        %v1691 = vpop.xlane.xlu0 %1690
        %v1692 = vmax.f32 %v1477, %v1566
        %1693 = vmax.xlane.f32.xlu0 %v1692
        %v1694 = vpop.xlane.xlu0 %1693
        %v1695 = vmax.f32 %v1479, %v1568
        %1696 = vmax.xlane.f32.xlu0 %v1695
        %v1697 = vpop.xlane.xlu0 %1696
        %v1698 = vmax.f32 %v1570, %v1604
        %v1699 = vmax.f32 %v1571, %v1607
        %v1700 = vmax.f32 %v1572, %v1610
        %v1701 = vmax.f32 %v1573, %v1613
        %v1702 = vmax.f32 %v1574, %v1616
        %v1703 = vmax.f32 %v1575, %v1619
        %v1704 = vmax.f32 %v1576, %v1622
        %v1705 = vmax.f32 %v1577, %v1625
        %v1706 = vmax.f32 %v1578, %v1628
        %v1707 = vmax.f32 %v1579, %v1631
        %v1708 = vmax.f32 %v1580, %v1634
        %v1709 = vmax.f32 %v1581, %v1637
        %v1710 = vmax.f32 %v1582, %v1640
        %v1711 = vmax.f32 %v1583, %v1643
        %v1712 = vmax.f32 %v1584, %v1646
        %v1713 = vmax.f32 %v1585, %v1649
        %v1714 = vmax.f32 %v1586, %v1652
        %v1715 = vmax.f32 %v1587, %v1655
        %v1716 = vmax.f32 %v1588, %v1658
        %v1717 = vmax.f32 %v1589, %v1661
        %v1718 = vmax.f32 %v1590, %v1664
        %v1719 = vmax.f32 %v1591, %v1667
        %v1720 = vmax.f32 %v1592, %v1670
        %v1721 = vmax.f32 %v1593, %v1673
        %v1722 = vmax.f32 %v1594, %v1676
        %v1723 = vmax.f32 %v1595, %v1679
        %v1724 = vmax.f32 %v1596, %v1682
        %v1725 = vmax.f32 %v1597, %v1685
        %v1726 = vmax.f32 %v1598, %v1688
        %v1727 = vmax.f32 %v1599, %v1691
        %v1728 = vmax.f32 %v1600, %v1694
        %v1729 = vmax.f32 %v1601, %v1697
        %v1730 = vsub.f32 %v1570, %v1698
        %v1731 = vsub.f32 %v1571, %v1699
        %v1732 = vsub.f32 %v1572, %v1700
        %v1733 = vsub.f32 %v1573, %v1701
        %v1734 = vsub.f32 %v1574, %v1702
        %v1735 = vsub.f32 %v1575, %v1703
        %v1736 = vsub.f32 %v1576, %v1704
        %v1737 = vsub.f32 %v1577, %v1705
        %v1738 = vsub.f32 %v1578, %v1706
        %v1739 = vsub.f32 %v1579, %v1707
        %v1740 = vsub.f32 %v1580, %v1708
        %v1741 = vsub.f32 %v1581, %v1709
        %v1742 = vsub.f32 %v1582, %v1710
        %v1743 = vsub.f32 %v1583, %v1711
        %v1744 = vsub.f32 %v1584, %v1712
        %v1745 = vsub.f32 %v1585, %v1713
        %v1746 = vsub.f32 %v1586, %v1714
        %v1747 = vsub.f32 %v1587, %v1715
        %v1748 = vsub.f32 %v1588, %v1716
        %v1749 = vsub.f32 %v1589, %v1717
        %v1750 = vsub.f32 %v1590, %v1718
        %v1751 = vsub.f32 %v1591, %v1719
        %v1752 = vsub.f32 %v1592, %v1720
        %v1753 = vsub.f32 %v1593, %v1721
        %v1754 = vsub.f32 %v1594, %v1722
        %v1755 = vsub.f32 %v1595, %v1723
        %v1756 = vsub.f32 %v1596, %v1724
        %v1757 = vsub.f32 %v1597, %v1725
        %v1758 = vsub.f32 %v1598, %v1726
        %v1759 = vsub.f32 %v1599, %v1727
        %v1760 = vsub.f32 %v1600, %v1728
        %v1761 = vsub.f32 %v1601, %v1729
        %v1762 = vmul.f32 %v1730, 1.442695
        %v1763 = vpow.pop %v1762
        %v1764 = vmul.f32 %v1731, 1.442695
        %v1765 = vpow.pop %v1764
        %v1766 = vmul.f32 %v1732, 1.442695
        %v1767 = vpow.pop %v1766
        %v1768 = vmul.f32 %v1733, 1.442695
        %v1769 = vpow.pop %v1768
        %v1770 = vmul.f32 %v1734, 1.442695
        %v1771 = vpow.pop %v1770
        %v1772 = vmul.f32 %v1735, 1.442695
        %v1773 = vpow.pop %v1772
        %v1774 = vmul.f32 %v1736, 1.442695
        %v1775 = vpow.pop %v1774
        %v1776 = vmul.f32 %v1737, 1.442695
        %v1777 = vpow.pop %v1776
        %v1778 = vmul.f32 %v1738, 1.442695
        %v1779 = vpow.pop %v1778
        %v1780 = vmul.f32 %v1739, 1.442695
        %v1781 = vpow.pop %v1780
        %v1782 = vmul.f32 %v1740, 1.442695
        %v1783 = vpow.pop %v1782
        %v1784 = vmul.f32 %v1741, 1.442695
        %v1785 = vpow.pop %v1784
        %v1786 = vmul.f32 %v1742, 1.442695
        %v1787 = vpow.pop %v1786
        %v1788 = vmul.f32 %v1743, 1.442695
        %v1789 = vpow.pop %v1788
        %v1790 = vmul.f32 %v1744, 1.442695
        %v1791 = vpow.pop %v1790
        %v1792 = vmul.f32 %v1745, 1.442695
        %v1793 = vpow.pop %v1792
        %v1794 = vmul.f32 %v1746, 1.442695
        %v1795 = vpow.pop %v1794
        %v1796 = vmul.f32 %v1747, 1.442695
        %v1797 = vpow.pop %v1796
        %v1798 = vmul.f32 %v1748, 1.442695
        %v1799 = vpow.pop %v1798
        %v1800 = vmul.f32 %v1749, 1.442695
        %v1801 = vpow.pop %v1800
        %v1802 = vmul.f32 %v1750, 1.442695
        %v1803 = vpow.pop %v1802
        %v1804 = vmul.f32 %v1751, 1.442695
        %v1805 = vpow.pop %v1804
        %v1806 = vmul.f32 %v1752, 1.442695
        %v1807 = vpow.pop %v1806
        %v1808 = vmul.f32 %v1753, 1.442695
        %v1809 = vpow.pop %v1808
        %v1810 = vmul.f32 %v1754, 1.442695
        %v1811 = vpow.pop %v1810
        %v1812 = vmul.f32 %v1755, 1.442695
        %v1813 = vpow.pop %v1812
        %v1814 = vmul.f32 %v1756, 1.442695
        %v1815 = vpow.pop %v1814
        %v1816 = vmul.f32 %v1757, 1.442695
        %v1817 = vpow.pop %v1816
        %v1818 = vmul.f32 %v1758, 1.442695
        %v1819 = vpow.pop %v1818
        %v1820 = vmul.f32 %v1759, 1.442695
        %v1821 = vpow.pop %v1820
        %v1822 = vmul.f32 %v1760, 1.442695
        %v1823 = vpow.pop %v1822
        %v1824 = vmul.f32 %v1761, 1.442695
        %v1825 = vpow.pop %v1824
        %1827 = vset.pattern.permute.xlu0 0
        %1828 = vperm.xlu0 %1827, %v1698
        %v1829 = vpop.permute.xlu0 %1828
        %1832 = vset.pattern.permute.xlu0 0
        %1833 = vperm.xlu0 %1832, %v1699
        %v1834 = vpop.permute.xlu0 %1833
        %1837 = vset.pattern.permute.xlu0 0
        %1838 = vperm.xlu0 %1837, %v1700
        %v1839 = vpop.permute.xlu0 %1838
        %1842 = vset.pattern.permute.xlu0 0
        %1843 = vperm.xlu0 %1842, %v1701
        %v1844 = vpop.permute.xlu0 %1843
        %1847 = vset.pattern.permute.xlu0 0
        %1848 = vperm.xlu0 %1847, %v1702
        %v1849 = vpop.permute.xlu0 %1848
        %1852 = vset.pattern.permute.xlu0 0
        %1853 = vperm.xlu0 %1852, %v1703
        %v1854 = vpop.permute.xlu0 %1853
        %1857 = vset.pattern.permute.xlu0 0
        %1858 = vperm.xlu0 %1857, %v1704
        %v1859 = vpop.permute.xlu0 %1858
        %1862 = vset.pattern.permute.xlu0 0
        %1863 = vperm.xlu0 %1862, %v1705
        %v1864 = vpop.permute.xlu0 %1863
        %1867 = vset.pattern.permute.xlu0 0
        %1868 = vperm.xlu0 %1867, %v1706
        %v1869 = vpop.permute.xlu0 %1868
        %1872 = vset.pattern.permute.xlu0 0
        %1873 = vperm.xlu0 %1872, %v1707
        %v1874 = vpop.permute.xlu0 %1873
        %1877 = vset.pattern.permute.xlu0 0
        %1878 = vperm.xlu0 %1877, %v1708
        %v1879 = vpop.permute.xlu0 %1878
        %1882 = vset.pattern.permute.xlu0 0
        %1883 = vperm.xlu0 %1882, %v1709
        %v1884 = vpop.permute.xlu0 %1883
        %1887 = vset.pattern.permute.xlu0 0
        %1888 = vperm.xlu0 %1887, %v1710
        %v1889 = vpop.permute.xlu0 %1888
        %1892 = vset.pattern.permute.xlu0 0
        %1893 = vperm.xlu0 %1892, %v1711
        %v1894 = vpop.permute.xlu0 %1893
        %1897 = vset.pattern.permute.xlu0 0
        %1898 = vperm.xlu0 %1897, %v1712
        %v1899 = vpop.permute.xlu0 %1898
        %1902 = vset.pattern.permute.xlu0 0
        %1903 = vperm.xlu0 %1902, %v1713
        %v1904 = vpop.permute.xlu0 %1903
        %1907 = vset.pattern.permute.xlu0 0
        %1908 = vperm.xlu0 %1907, %v1714
        %v1909 = vpop.permute.xlu0 %1908
        %1912 = vset.pattern.permute.xlu0 0
        %1913 = vperm.xlu0 %1912, %v1715
        %v1914 = vpop.permute.xlu0 %1913
        %1917 = vset.pattern.permute.xlu0 0
        %1918 = vperm.xlu0 %1917, %v1716
        %v1919 = vpop.permute.xlu0 %1918
        %1922 = vset.pattern.permute.xlu0 0
        %1923 = vperm.xlu0 %1922, %v1717
        %v1924 = vpop.permute.xlu0 %1923
        %1927 = vset.pattern.permute.xlu0 0
        %1928 = vperm.xlu0 %1927, %v1718
        %v1929 = vpop.permute.xlu0 %1928
        %1932 = vset.pattern.permute.xlu0 0
        %1933 = vperm.xlu0 %1932, %v1719
        %v1934 = vpop.permute.xlu0 %1933
        %1937 = vset.pattern.permute.xlu0 0
        %1938 = vperm.xlu0 %1937, %v1720
        %v1939 = vpop.permute.xlu0 %1938
        %1942 = vset.pattern.permute.xlu0 0
        %1943 = vperm.xlu0 %1942, %v1721
        %v1944 = vpop.permute.xlu0 %1943
        %1947 = vset.pattern.permute.xlu0 0
        %1948 = vperm.xlu0 %1947, %v1722
        %v1949 = vpop.permute.xlu0 %1948
        %1952 = vset.pattern.permute.xlu0 0
        %1953 = vperm.xlu0 %1952, %v1723
        %v1954 = vpop.permute.xlu0 %1953
        %1957 = vset.pattern.permute.xlu0 0
        %1958 = vperm.xlu0 %1957, %v1724
        %v1959 = vpop.permute.xlu0 %1958
        %1962 = vset.pattern.permute.xlu0 0
        %1963 = vperm.xlu0 %1962, %v1725
        %v1964 = vpop.permute.xlu0 %1963
        %1967 = vset.pattern.permute.xlu0 0
        %1968 = vperm.xlu0 %1967, %v1726
        %v1969 = vpop.permute.xlu0 %1968
        %1972 = vset.pattern.permute.xlu0 0
        %1973 = vperm.xlu0 %1972, %v1727
        %v1974 = vpop.permute.xlu0 %1973
        %1977 = vset.pattern.permute.xlu0 0
        %1978 = vperm.xlu0 %1977, %v1728
        %v1979 = vpop.permute.xlu0 %1978
        %1982 = vset.pattern.permute.xlu0 0
        %1983 = vperm.xlu0 %1982, %v1729
        %v1984 = vpop.permute.xlu0 %1983
        %v1986 = vsub.f32 %v1402, %v1829
        %v1987 = vsub.f32 %v1491, %v1829
        %v1988 = vsub.f32 %v1404, %v1834
        %v1989 = vsub.f32 %v1493, %v1834
        %v1990 = vsub.f32 %v1407, %v1839
        %v1991 = vsub.f32 %v1496, %v1839
        %v1992 = vsub.f32 %v1409, %v1844
        %v1993 = vsub.f32 %v1498, %v1844
        %v1994 = vsub.f32 %v1412, %v1849
        %v1995 = vsub.f32 %v1501, %v1849
        %v1996 = vsub.f32 %v1414, %v1854
        %v1997 = vsub.f32 %v1503, %v1854
        %v1998 = vsub.f32 %v1417, %v1859
        %v1999 = vsub.f32 %v1506, %v1859
        %v2000 = vsub.f32 %v1419, %v1864
        %v2001 = vsub.f32 %v1508, %v1864
        %v2002 = vsub.f32 %v1422, %v1869
        %v2003 = vsub.f32 %v1511, %v1869
        %v2004 = vsub.f32 %v1424, %v1874
        %v2005 = vsub.f32 %v1513, %v1874
        %v2006 = vsub.f32 %v1427, %v1879
        %v2007 = vsub.f32 %v1516, %v1879
        %v2008 = vsub.f32 %v1429, %v1884
        %v2009 = vsub.f32 %v1518, %v1884
        %v2010 = vsub.f32 %v1432, %v1889
        %v2011 = vsub.f32 %v1521, %v1889
        %v2012 = vsub.f32 %v1434, %v1894
        %v2013 = vsub.f32 %v1523, %v1894
        %v2014 = vsub.f32 %v1437, %v1899
        %v2015 = vsub.f32 %v1526, %v1899
        %v2016 = vsub.f32 %v1439, %v1904
        %v2017 = vsub.f32 %v1528, %v1904
        %v2018 = vsub.f32 %v1442, %v1909
        %v2019 = vsub.f32 %v1531, %v1909
        %v2020 = vsub.f32 %v1444, %v1914
        %v2021 = vsub.f32 %v1533, %v1914
        %v2022 = vsub.f32 %v1447, %v1919
        %v2023 = vsub.f32 %v1536, %v1919
        %v2024 = vsub.f32 %v1449, %v1924
        %v2025 = vsub.f32 %v1538, %v1924
        %v2026 = vsub.f32 %v1452, %v1929
        %v2027 = vsub.f32 %v1541, %v1929
        %v2028 = vsub.f32 %v1454, %v1934
        %v2029 = vsub.f32 %v1543, %v1934
        %v2030 = vsub.f32 %v1457, %v1939
        %v2031 = vsub.f32 %v1546, %v1939
        %v2032 = vsub.f32 %v1459, %v1944
        %v2033 = vsub.f32 %v1548, %v1944
        %v2034 = vsub.f32 %v1462, %v1949
        %v2035 = vsub.f32 %v1551, %v1949
        %v2036 = vsub.f32 %v1464, %v1954
        %v2037 = vsub.f32 %v1553, %v1954
        %v2038 = vsub.f32 %v1467, %v1959
        %v2039 = vsub.f32 %v1556, %v1959
        %v2040 = vsub.f32 %v1469, %v1964
        %v2041 = vsub.f32 %v1558, %v1964
        %v2042 = vsub.f32 %v1472, %v1969
        %v2043 = vsub.f32 %v1561, %v1969
        %v2044 = vsub.f32 %v1474, %v1974
        %v2045 = vsub.f32 %v1563, %v1974
        %v2046 = vsub.f32 %v1477, %v1979
        %v2047 = vsub.f32 %v1566, %v1979
        %v2048 = vsub.f32 %v1479, %v1984
        %v2049 = vsub.f32 %v1568, %v1984
        %v2050 = vmul.f32 %v1986, 1.442695
        %v2051 = vpow.pop %v2050
        %v2052 = vmul.f32 %v1987, 1.442695
        %v2053 = vpow.pop %v2052
        %v2054 = vmul.f32 %v1988, 1.442695
        %v2055 = vpow.pop %v2054
        %v2056 = vmul.f32 %v1989, 1.442695
        %v2057 = vpow.pop %v2056
        %v2058 = vmul.f32 %v1990, 1.442695
        %v2059 = vpow.pop %v2058
        %v2060 = vmul.f32 %v1991, 1.442695
        %v2061 = vpow.pop %v2060
        %v2062 = vmul.f32 %v1992, 1.442695
        %v2063 = vpow.pop %v2062
        %v2064 = vmul.f32 %v1993, 1.442695
        %v2065 = vpow.pop %v2064
        %v2066 = vmul.f32 %v1994, 1.442695
        %v2067 = vpow.pop %v2066
        %v2068 = vmul.f32 %v1995, 1.442695
        %v2069 = vpow.pop %v2068
        %v2070 = vmul.f32 %v1996, 1.442695
        %v2071 = vpow.pop %v2070
        %v2072 = vmul.f32 %v1997, 1.442695
        %v2073 = vpow.pop %v2072
        %v2074 = vmul.f32 %v1998, 1.442695
        %v2075 = vpow.pop %v2074
        %v2076 = vmul.f32 %v1999, 1.442695
        %v2077 = vpow.pop %v2076
        %v2078 = vmul.f32 %v2000, 1.442695
        %v2079 = vpow.pop %v2078
        %v2080 = vmul.f32 %v2001, 1.442695
        %v2081 = vpow.pop %v2080
        %v2082 = vmul.f32 %v2002, 1.442695
        %v2083 = vpow.pop %v2082
        %v2084 = vmul.f32 %v2003, 1.442695
        %v2085 = vpow.pop %v2084
        %v2086 = vmul.f32 %v2004, 1.442695
        %v2087 = vpow.pop %v2086
        %v2088 = vmul.f32 %v2005, 1.442695
        %v2089 = vpow.pop %v2088
        %v2090 = vmul.f32 %v2006, 1.442695
        %v2091 = vpow.pop %v2090
        %v2092 = vmul.f32 %v2007, 1.442695
        %v2093 = vpow.pop %v2092
        %v2094 = vmul.f32 %v2008, 1.442695
        %v2095 = vpow.pop %v2094
        %v2096 = vmul.f32 %v2009, 1.442695
        %v2097 = vpow.pop %v2096
        %v2098 = vmul.f32 %v2010, 1.442695
        %v2099 = vpow.pop %v2098
        %v2100 = vmul.f32 %v2011, 1.442695
        %v2101 = vpow.pop %v2100
        %v2102 = vmul.f32 %v2012, 1.442695
        %v2103 = vpow.pop %v2102
        %v2104 = vmul.f32 %v2013, 1.442695
        %v2105 = vpow.pop %v2104
        %v2106 = vmul.f32 %v2014, 1.442695
        %v2107 = vpow.pop %v2106
        %v2108 = vmul.f32 %v2015, 1.442695
        %v2109 = vpow.pop %v2108
        %v2110 = vmul.f32 %v2016, 1.442695
        %v2111 = vpow.pop %v2110
        %v2112 = vmul.f32 %v2017, 1.442695
        %v2113 = vpow.pop %v2112
        %v2114 = vmul.f32 %v2018, 1.442695
        %v2115 = vpow.pop %v2114
        %v2116 = vmul.f32 %v2019, 1.442695
        %v2117 = vpow.pop %v2116
        %v2118 = vmul.f32 %v2020, 1.442695
        %v2119 = vpow.pop %v2118
        %v2120 = vmul.f32 %v2021, 1.442695
        %v2121 = vpow.pop %v2120
        %v2122 = vmul.f32 %v2022, 1.442695
        %v2123 = vpow.pop %v2122
        %v2124 = vmul.f32 %v2023, 1.442695
        %v2125 = vpow.pop %v2124
        %v2126 = vmul.f32 %v2024, 1.442695
        %v2127 = vpow.pop %v2126
        %v2128 = vmul.f32 %v2025, 1.442695
        %v2129 = vpow.pop %v2128
        %v2130 = vmul.f32 %v2026, 1.442695
        %v2131 = vpow.pop %v2130
        %v2132 = vmul.f32 %v2027, 1.442695
        %v2133 = vpow.pop %v2132
        %v2134 = vmul.f32 %v2028, 1.442695
        %v2135 = vpow.pop %v2134
        %v2136 = vmul.f32 %v2029, 1.442695
        %v2137 = vpow.pop %v2136
        %v2138 = vmul.f32 %v2030, 1.442695
        %v2139 = vpow.pop %v2138
        %v2140 = vmul.f32 %v2031, 1.442695
        %v2141 = vpow.pop %v2140
        %v2142 = vmul.f32 %v2032, 1.442695
        %v2143 = vpow.pop %v2142
        %v2144 = vmul.f32 %v2033, 1.442695
        %v2145 = vpow.pop %v2144
        %v2146 = vmul.f32 %v2034, 1.442695
        %v2147 = vpow.pop %v2146
        %v2148 = vmul.f32 %v2035, 1.442695
        %v2149 = vpow.pop %v2148
        %v2150 = vmul.f32 %v2036, 1.442695
        %v2151 = vpow.pop %v2150
        %v2152 = vmul.f32 %v2037, 1.442695
        %v2153 = vpow.pop %v2152
        %v2154 = vmul.f32 %v2038, 1.442695
        %v2155 = vpow.pop %v2154
        %v2156 = vmul.f32 %v2039, 1.442695
        %v2157 = vpow.pop %v2156
        %v2158 = vmul.f32 %v2040, 1.442695
        %v2159 = vpow.pop %v2158
        %v2160 = vmul.f32 %v2041, 1.442695
        %v2161 = vpow.pop %v2160
        %v2162 = vmul.f32 %v2042, 1.442695
        %v2163 = vpow.pop %v2162
        %v2164 = vmul.f32 %v2043, 1.442695
        %v2165 = vpow.pop %v2164
        %v2166 = vmul.f32 %v2044, 1.442695
        %v2167 = vpow.pop %v2166
        %v2168 = vmul.f32 %v2045, 1.442695
        %v2169 = vpow.pop %v2168
        %v2170 = vmul.f32 %v2046, 1.442695
        %v2171 = vpow.pop %v2170
        %v2172 = vmul.f32 %v2047, 1.442695
        %v2173 = vpow.pop %v2172
        %v2174 = vmul.f32 %v2048, 1.442695
        %v2175 = vpow.pop %v2174
        %v2176 = vmul.f32 %v2049, 1.442695
        %v2177 = vpow.pop %v2176
        %v2178 = vld [vmem:[#allocation5] sm:$0xff]
        %v2179 = vld [vmem:[#allocation5 + $0x8] sm:$0xff]
        %v2180 = vld [vmem:[#allocation5 + $0x10] sm:$0xff]
        %v2181 = vld [vmem:[#allocation5 + $0x18] sm:$0xff]
        %v2182 = vld [vmem:[#allocation5 + $0x20] sm:$0xff]
        %v2183 = vld [vmem:[#allocation5 + $0x28] sm:$0xff]
        %v2184 = vld [vmem:[#allocation5 + $0x30] sm:$0xff]
        %v2185 = vld [vmem:[#allocation5 + $0x38] sm:$0xff]
        %v2186 = vld [vmem:[#allocation5 + $0x40] sm:$0xff]
        %v2187 = vld [vmem:[#allocation5 + $0x48] sm:$0xff]
        %v2188 = vld [vmem:[#allocation5 + $0x50] sm:$0xff]
        %v2189 = vld [vmem:[#allocation5 + $0x58] sm:$0xff]
        %v2190 = vld [vmem:[#allocation5 + $0x60] sm:$0xff]
        %v2191 = vld [vmem:[#allocation5 + $0x68] sm:$0xff]
        %v2192 = vld [vmem:[#allocation5 + $0x70] sm:$0xff]
        %v2193 = vld [vmem:[#allocation5 + $0x78] sm:$0xff]
        %v2194 = vld [vmem:[#allocation5 + $0x80] sm:$0xff]
        %v2195 = vld [vmem:[#allocation5 + $0x88] sm:$0xff]
        %v2196 = vld [vmem:[#allocation5 + $0x90] sm:$0xff]
        %v2197 = vld [vmem:[#allocation5 + $0x98] sm:$0xff]
        %v2198 = vld [vmem:[#allocation5 + $0xa0] sm:$0xff]
        %v2199 = vld [vmem:[#allocation5 + $0xa8] sm:$0xff]
        %v2200 = vld [vmem:[#allocation5 + $0xb0] sm:$0xff]
        %v2201 = vld [vmem:[#allocation5 + $0xb8] sm:$0xff]
        %v2202 = vld [vmem:[#allocation5 + $0xc0] sm:$0xff]
        %v2203 = vld [vmem:[#allocation5 + $0xc8] sm:$0xff]
        %v2204 = vld [vmem:[#allocation5 + $0xd0] sm:$0xff]
        %v2205 = vld [vmem:[#allocation5 + $0xd8] sm:$0xff]
        %v2206 = vld [vmem:[#allocation5 + $0xe0] sm:$0xff]
        %v2207 = vld [vmem:[#allocation5 + $0xe8] sm:$0xff]
        %v2208 = vld [vmem:[#allocation5 + $0xf0] sm:$0xff]
        %v2209 = vld [vmem:[#allocation5 + $0xf8] sm:$0xff]
        %v2210 = vmul.f32 %v1763, %v2178
        %v2211 = vmul.f32 %v1765, %v2179
        %v2212 = vmul.f32 %v1767, %v2180
        %v2213 = vmul.f32 %v1769, %v2181
        %v2214 = vmul.f32 %v1771, %v2182
        %v2215 = vmul.f32 %v1773, %v2183
        %v2216 = vmul.f32 %v1775, %v2184
        %v2217 = vmul.f32 %v1777, %v2185
        %v2218 = vmul.f32 %v1779, %v2186
        %v2219 = vmul.f32 %v1781, %v2187
        %v2220 = vmul.f32 %v1783, %v2188
        %v2221 = vmul.f32 %v1785, %v2189
        %v2222 = vmul.f32 %v1787, %v2190
        %v2223 = vmul.f32 %v1789, %v2191
        %v2224 = vmul.f32 %v1791, %v2192
        %v2225 = vmul.f32 %v1793, %v2193
        %v2226 = vmul.f32 %v1795, %v2194
        %v2227 = vmul.f32 %v1797, %v2195
        %v2228 = vmul.f32 %v1799, %v2196
        %v2229 = vmul.f32 %v1801, %v2197
        %v2230 = vmul.f32 %v1803, %v2198
        %v2231 = vmul.f32 %v1805, %v2199
        %v2232 = vmul.f32 %v1807, %v2200
        %v2233 = vmul.f32 %v1809, %v2201
        %v2234 = vmul.f32 %v1811, %v2202
        %v2235 = vmul.f32 %v1813, %v2203
        %v2236 = vmul.f32 %v1815, %v2204
        %v2237 = vmul.f32 %v1817, %v2205
        %v2238 = vmul.f32 %v1819, %v2206
        %v2239 = vmul.f32 %v1821, %v2207
        %v2240 = vmul.f32 %v1823, %v2208
        %v2241 = vmul.f32 %v1825, %v2209
        %v2242 = vadd.f32 %v2051, %v2053
        %2243 = vadd.xlane.f32.xlu0 %v2242
        %v2244 = vpop.xlane.xlu0 %2243
        %v2245 = vadd.f32 %v2055, %v2057
        %2246 = vadd.xlane.f32.xlu0 %v2245
        %v2247 = vpop.xlane.xlu0 %2246
        %v2248 = vadd.f32 %v2059, %v2061
        %2249 = vadd.xlane.f32.xlu0 %v2248
        %v2250 = vpop.xlane.xlu0 %2249
        %v2251 = vadd.f32 %v2063, %v2065
        %2252 = vadd.xlane.f32.xlu0 %v2251
        %v2253 = vpop.xlane.xlu0 %2252
        %v2254 = vadd.f32 %v2067, %v2069
        %2255 = vadd.xlane.f32.xlu0 %v2254
        %v2256 = vpop.xlane.xlu0 %2255
        %v2257 = vadd.f32 %v2071, %v2073
        %2258 = vadd.xlane.f32.xlu0 %v2257
        %v2259 = vpop.xlane.xlu0 %2258
        %v2260 = vadd.f32 %v2075, %v2077
        %2261 = vadd.xlane.f32.xlu0 %v2260
        %v2262 = vpop.xlane.xlu0 %2261
        %v2263 = vadd.f32 %v2079, %v2081
        %2264 = vadd.xlane.f32.xlu0 %v2263
        %v2265 = vpop.xlane.xlu0 %2264
        %v2266 = vadd.f32 %v2083, %v2085
        %2267 = vadd.xlane.f32.xlu0 %v2266
        %v2268 = vpop.xlane.xlu0 %2267
        %v2269 = vadd.f32 %v2087, %v2089
        %2270 = vadd.xlane.f32.xlu0 %v2269
        %v2271 = vpop.xlane.xlu0 %2270
        %v2272 = vadd.f32 %v2091, %v2093
        %2273 = vadd.xlane.f32.xlu0 %v2272
        %v2274 = vpop.xlane.xlu0 %2273
        %v2275 = vadd.f32 %v2095, %v2097
        %2276 = vadd.xlane.f32.xlu0 %v2275
        %v2277 = vpop.xlane.xlu0 %2276
        %v2278 = vadd.f32 %v2099, %v2101
        %2279 = vadd.xlane.f32.xlu0 %v2278
        %v2280 = vpop.xlane.xlu0 %2279
        %v2281 = vadd.f32 %v2103, %v2105
        %2282 = vadd.xlane.f32.xlu0 %v2281
        %v2283 = vpop.xlane.xlu0 %2282
        %v2284 = vadd.f32 %v2107, %v2109
        %2285 = vadd.xlane.f32.xlu0 %v2284
        %v2286 = vpop.xlane.xlu0 %2285
        %v2287 = vadd.f32 %v2111, %v2113
        %2288 = vadd.xlane.f32.xlu0 %v2287
        %v2289 = vpop.xlane.xlu0 %2288
        %v2290 = vadd.f32 %v2115, %v2117
        %2291 = vadd.xlane.f32.xlu0 %v2290
        %v2292 = vpop.xlane.xlu0 %2291
        %v2293 = vadd.f32 %v2119, %v2121
        %2294 = vadd.xlane.f32.xlu0 %v2293
        %v2295 = vpop.xlane.xlu0 %2294
        %v2296 = vadd.f32 %v2123, %v2125
        %2297 = vadd.xlane.f32.xlu0 %v2296
        %v2298 = vpop.xlane.xlu0 %2297
        %v2299 = vadd.f32 %v2127, %v2129
        %2300 = vadd.xlane.f32.xlu0 %v2299
        %v2301 = vpop.xlane.xlu0 %2300
        %v2302 = vadd.f32 %v2131, %v2133
        %2303 = vadd.xlane.f32.xlu0 %v2302
        %v2304 = vpop.xlane.xlu0 %2303
        %v2305 = vadd.f32 %v2135, %v2137
        %2306 = vadd.xlane.f32.xlu0 %v2305
        %v2307 = vpop.xlane.xlu0 %2306
        %v2308 = vadd.f32 %v2139, %v2141
        %2309 = vadd.xlane.f32.xlu0 %v2308
        %v2310 = vpop.xlane.xlu0 %2309
        %v2311 = vadd.f32 %v2143, %v2145
        %2312 = vadd.xlane.f32.xlu0 %v2311
        %v2313 = vpop.xlane.xlu0 %2312
        %v2314 = vadd.f32 %v2147, %v2149
        %2315 = vadd.xlane.f32.xlu0 %v2314
        %v2316 = vpop.xlane.xlu0 %2315
        %v2317 = vadd.f32 %v2151, %v2153
        %2318 = vadd.xlane.f32.xlu0 %v2317
        %v2319 = vpop.xlane.xlu0 %2318
        %v2320 = vadd.f32 %v2155, %v2157
        %2321 = vadd.xlane.f32.xlu0 %v2320
        %v2322 = vpop.xlane.xlu0 %2321
        %v2323 = vadd.f32 %v2159, %v2161
        %2324 = vadd.xlane.f32.xlu0 %v2323
        %v2325 = vpop.xlane.xlu0 %2324
        %v2326 = vadd.f32 %v2163, %v2165
        %2327 = vadd.xlane.f32.xlu0 %v2326
        %v2328 = vpop.xlane.xlu0 %2327
        %v2329 = vadd.f32 %v2167, %v2169
        %2330 = vadd.xlane.f32.xlu0 %v2329
        %v2331 = vpop.xlane.xlu0 %2330
        %v2332 = vadd.f32 %v2171, %v2173
        %2333 = vadd.xlane.f32.xlu0 %v2332
        %v2334 = vpop.xlane.xlu0 %2333
        %v2335 = vadd.f32 %v2175, %v2177
        %2336 = vadd.xlane.f32.xlu0 %v2335
        %v2337 = vpop.xlane.xlu0 %2336
        %v2338 = vadd.f32 %v2210, %v2244
        %v2339 = vadd.f32 %v2211, %v2247
        %v2340 = vadd.f32 %v2212, %v2250
        %v2341 = vadd.f32 %v2213, %v2253
        %v2342 = vadd.f32 %v2214, %v2256
        %v2343 = vadd.f32 %v2215, %v2259
        %v2344 = vadd.f32 %v2216, %v2262
        %v2345 = vadd.f32 %v2217, %v2265
        %v2346 = vadd.f32 %v2218, %v2268
        %v2347 = vadd.f32 %v2219, %v2271
        %v2348 = vadd.f32 %v2220, %v2274
        %v2349 = vadd.f32 %v2221, %v2277
        %v2350 = vadd.f32 %v2222, %v2280
        %v2351 = vadd.f32 %v2223, %v2283
        %v2352 = vadd.f32 %v2224, %v2286
        %v2353 = vadd.f32 %v2225, %v2289
        %v2354 = vadd.f32 %v2226, %v2292
        %v2355 = vadd.f32 %v2227, %v2295
        %v2356 = vadd.f32 %v2228, %v2298
        %v2357 = vadd.f32 %v2229, %v2301
        %v2358 = vadd.f32 %v2230, %v2304
        %v2359 = vadd.f32 %v2231, %v2307
        %v2360 = vadd.f32 %v2232, %v2310
        %v2361 = vadd.f32 %v2233, %v2313
        %v2362 = vadd.f32 %v2234, %v2316
        %v2363 = vadd.f32 %v2235, %v2319
        %v2364 = vadd.f32 %v2236, %v2322
        %v2365 = vadd.f32 %v2237, %v2325
        %v2366 = vadd.f32 %v2238, %v2328
        %v2367 = vadd.f32 %v2239, %v2331
        %v2368 = vadd.f32 %v2240, %v2334
        %v2369 = vadd.f32 %v2241, %v2337
        %vm2370 = vcmask 7168
        %2371 = vst.msk [vmem:[#allocation5] sm:$0xff] %vm2370, %v2338
        %2372 = vst.msk [vmem:[#allocation5 + $0x8] sm:$0xff] %vm2370, %v2339
        %2373 = vst.msk [vmem:[#allocation5 + $0x10] sm:$0xff] %vm2370, %v2340
        %2374 = vst.msk [vmem:[#allocation5 + $0x18] sm:$0xff] %vm2370, %v2341
        %2375 = vst.msk [vmem:[#allocation5 + $0x20] sm:$0xff] %vm2370, %v2342
        %2376 = vst.msk [vmem:[#allocation5 + $0x28] sm:$0xff] %vm2370, %v2343
        %2377 = vst.msk [vmem:[#allocation5 + $0x30] sm:$0xff] %vm2370, %v2344
        %2378 = vst.msk [vmem:[#allocation5 + $0x38] sm:$0xff] %vm2370, %v2345
        %2379 = vst.msk [vmem:[#allocation5 + $0x40] sm:$0xff] %vm2370, %v2346
        %2380 = vst.msk [vmem:[#allocation5 + $0x48] sm:$0xff] %vm2370, %v2347
        %2381 = vst.msk [vmem:[#allocation5 + $0x50] sm:$0xff] %vm2370, %v2348
        %2382 = vst.msk [vmem:[#allocation5 + $0x58] sm:$0xff] %vm2370, %v2349
        %2383 = vst.msk [vmem:[#allocation5 + $0x60] sm:$0xff] %vm2370, %v2350
        %2384 = vst.msk [vmem:[#allocation5 + $0x68] sm:$0xff] %vm2370, %v2351
        %2385 = vst.msk [vmem:[#allocation5 + $0x70] sm:$0xff] %vm2370, %v2352
        %2386 = vst.msk [vmem:[#allocation5 + $0x78] sm:$0xff] %vm2370, %v2353
        %2387 = vst.msk [vmem:[#allocation5 + $0x80] sm:$0xff] %vm2370, %v2354
        %2388 = vst.msk [vmem:[#allocation5 + $0x88] sm:$0xff] %vm2370, %v2355
        %2389 = vst.msk [vmem:[#allocation5 + $0x90] sm:$0xff] %vm2370, %v2356
        %2390 = vst.msk [vmem:[#allocation5 + $0x98] sm:$0xff] %vm2370, %v2357
        %2391 = vst.msk [vmem:[#allocation5 + $0xa0] sm:$0xff] %vm2370, %v2358
        %2392 = vst.msk [vmem:[#allocation5 + $0xa8] sm:$0xff] %vm2370, %v2359
        %2393 = vst.msk [vmem:[#allocation5 + $0xb0] sm:$0xff] %vm2370, %v2360
        %2394 = vst.msk [vmem:[#allocation5 + $0xb8] sm:$0xff] %vm2370, %v2361
        %2395 = vst.msk [vmem:[#allocation5 + $0xc0] sm:$0xff] %vm2370, %v2362
        %2396 = vst.msk [vmem:[#allocation5 + $0xc8] sm:$0xff] %vm2370, %v2363
        %2397 = vst.msk [vmem:[#allocation5 + $0xd0] sm:$0xff] %vm2370, %v2364
        %2398 = vst.msk [vmem:[#allocation5 + $0xd8] sm:$0xff] %vm2370, %v2365
        %2399 = vst.msk [vmem:[#allocation5 + $0xe0] sm:$0xff] %vm2370, %v2366
        %2400 = vst.msk [vmem:[#allocation5 + $0xe8] sm:$0xff] %vm2370, %v2367
        %2401 = vst.msk [vmem:[#allocation5 + $0xf0] sm:$0xff] %vm2370, %v2368
        %2402 = vst.msk [vmem:[#allocation5 + $0xf8] sm:$0xff] %vm2370, %v2369
        %v2403 = vld [vmem:[#allocation6] sm:$0xff]
        %v2404 = vld [vmem:[#allocation6 + $0x8] sm:$0xff]
        %v2405 = vld [vmem:[#allocation6 + $0x10] sm:$0xff]
        %v2406 = vld [vmem:[#allocation6 + $0x18] sm:$0xff]
        %v2407 = vld [vmem:[#allocation6 + $0x20] sm:$0xff]
        %v2408 = vld [vmem:[#allocation6 + $0x28] sm:$0xff]
        %v2409 = vld [vmem:[#allocation6 + $0x30] sm:$0xff]
        %v2410 = vld [vmem:[#allocation6 + $0x38] sm:$0xff]
        %v2411 = vld [vmem:[#allocation6 + $0x40] sm:$0xff]
        %v2412 = vld [vmem:[#allocation6 + $0x48] sm:$0xff]
        %v2413 = vld [vmem:[#allocation6 + $0x50] sm:$0xff]
        %v2414 = vld [vmem:[#allocation6 + $0x58] sm:$0xff]
        %v2415 = vld [vmem:[#allocation6 + $0x60] sm:$0xff]
        %v2416 = vld [vmem:[#allocation6 + $0x68] sm:$0xff]
        %v2417 = vld [vmem:[#allocation6 + $0x70] sm:$0xff]
        %v2418 = vld [vmem:[#allocation6 + $0x78] sm:$0xff]
        %v2419 = vld [vmem:[#allocation6 + $0x80] sm:$0xff]
        %v2420 = vld [vmem:[#allocation6 + $0x88] sm:$0xff]
        %v2421 = vld [vmem:[#allocation6 + $0x90] sm:$0xff]
        %v2422 = vld [vmem:[#allocation6 + $0x98] sm:$0xff]
        %v2423 = vld [vmem:[#allocation6 + $0xa0] sm:$0xff]
        %v2424 = vld [vmem:[#allocation6 + $0xa8] sm:$0xff]
        %v2425 = vld [vmem:[#allocation6 + $0xb0] sm:$0xff]
        %v2426 = vld [vmem:[#allocation6 + $0xb8] sm:$0xff]
        %v2427 = vld [vmem:[#allocation6 + $0xc0] sm:$0xff]
        %v2428 = vld [vmem:[#allocation6 + $0xc8] sm:$0xff]
        %v2429 = vld [vmem:[#allocation6 + $0xd0] sm:$0xff]
        %v2430 = vld [vmem:[#allocation6 + $0xd8] sm:$0xff]
        %v2431 = vld [vmem:[#allocation6 + $0xe0] sm:$0xff]
        %v2432 = vld [vmem:[#allocation6 + $0xe8] sm:$0xff]
        %v2433 = vld [vmem:[#allocation6 + $0xf0] sm:$0xff]
        %v2434 = vld [vmem:[#allocation6 + $0xf8] sm:$0xff]
        %2436 = vset.pattern.permute.xlu0 0
        %2437 = vperm.xlu0 %2436, %v1763
        %v2438 = vpop.permute.xlu0 %2437
        %2441 = vset.pattern.permute.xlu0 0
        %2442 = vperm.xlu0 %2441, %v1765
        %v2443 = vpop.permute.xlu0 %2442
        %2446 = vset.pattern.permute.xlu0 0
        %2447 = vperm.xlu0 %2446, %v1767
        %v2448 = vpop.permute.xlu0 %2447
        %2451 = vset.pattern.permute.xlu0 0
        %2452 = vperm.xlu0 %2451, %v1769
        %v2453 = vpop.permute.xlu0 %2452
        %2456 = vset.pattern.permute.xlu0 0
        %2457 = vperm.xlu0 %2456, %v1771
        %v2458 = vpop.permute.xlu0 %2457
        %2461 = vset.pattern.permute.xlu0 0
        %2462 = vperm.xlu0 %2461, %v1773
        %v2463 = vpop.permute.xlu0 %2462
        %2466 = vset.pattern.permute.xlu0 0
        %2467 = vperm.xlu0 %2466, %v1775
        %v2468 = vpop.permute.xlu0 %2467
        %2471 = vset.pattern.permute.xlu0 0
        %2472 = vperm.xlu0 %2471, %v1777
        %v2473 = vpop.permute.xlu0 %2472
        %2476 = vset.pattern.permute.xlu0 0
        %2477 = vperm.xlu0 %2476, %v1779
        %v2478 = vpop.permute.xlu0 %2477
        %2481 = vset.pattern.permute.xlu0 0
        %2482 = vperm.xlu0 %2481, %v1781
        %v2483 = vpop.permute.xlu0 %2482
        %2486 = vset.pattern.permute.xlu0 0
        %2487 = vperm.xlu0 %2486, %v1783
        %v2488 = vpop.permute.xlu0 %2487
        %2491 = vset.pattern.permute.xlu0 0
        %2492 = vperm.xlu0 %2491, %v1785
        %v2493 = vpop.permute.xlu0 %2492
        %2496 = vset.pattern.permute.xlu0 0
        %2497 = vperm.xlu0 %2496, %v1787
        %v2498 = vpop.permute.xlu0 %2497
        %2501 = vset.pattern.permute.xlu0 0
        %2502 = vperm.xlu0 %2501, %v1789
        %v2503 = vpop.permute.xlu0 %2502
        %2506 = vset.pattern.permute.xlu0 0
        %2507 = vperm.xlu0 %2506, %v1791
        %v2508 = vpop.permute.xlu0 %2507
        %2511 = vset.pattern.permute.xlu0 0
        %2512 = vperm.xlu0 %2511, %v1793
        %v2513 = vpop.permute.xlu0 %2512
        %2516 = vset.pattern.permute.xlu0 0
        %2517 = vperm.xlu0 %2516, %v1795
        %v2518 = vpop.permute.xlu0 %2517
        %2521 = vset.pattern.permute.xlu0 0
        %2522 = vperm.xlu0 %2521, %v1797
        %v2523 = vpop.permute.xlu0 %2522
        %2526 = vset.pattern.permute.xlu0 0
        %2527 = vperm.xlu0 %2526, %v1799
        %v2528 = vpop.permute.xlu0 %2527
        %2531 = vset.pattern.permute.xlu0 0
        %2532 = vperm.xlu0 %2531, %v1801
        %v2533 = vpop.permute.xlu0 %2532
        %2536 = vset.pattern.permute.xlu0 0
        %2537 = vperm.xlu0 %2536, %v1803
        %v2538 = vpop.permute.xlu0 %2537
        %2541 = vset.pattern.permute.xlu0 0
        %2542 = vperm.xlu0 %2541, %v1805
        %v2543 = vpop.permute.xlu0 %2542
        %2546 = vset.pattern.permute.xlu0 0
        %2547 = vperm.xlu0 %2546, %v1807
        %v2548 = vpop.permute.xlu0 %2547
        %2551 = vset.pattern.permute.xlu0 0
        %2552 = vperm.xlu0 %2551, %v1809
        %v2553 = vpop.permute.xlu0 %2552
        %2556 = vset.pattern.permute.xlu0 0
        %2557 = vperm.xlu0 %2556, %v1811
        %v2558 = vpop.permute.xlu0 %2557
        %2561 = vset.pattern.permute.xlu0 0
        %2562 = vperm.xlu0 %2561, %v1813
        %v2563 = vpop.permute.xlu0 %2562
        %2566 = vset.pattern.permute.xlu0 0
        %2567 = vperm.xlu0 %2566, %v1815
        %v2568 = vpop.permute.xlu0 %2567
        %2571 = vset.pattern.permute.xlu0 0
        %2572 = vperm.xlu0 %2571, %v1817
        %v2573 = vpop.permute.xlu0 %2572
        %2576 = vset.pattern.permute.xlu0 0
        %2577 = vperm.xlu0 %2576, %v1819
        %v2578 = vpop.permute.xlu0 %2577
        %2581 = vset.pattern.permute.xlu0 0
        %2582 = vperm.xlu0 %2581, %v1821
        %v2583 = vpop.permute.xlu0 %2582
        %2586 = vset.pattern.permute.xlu0 0
        %2587 = vperm.xlu0 %2586, %v1823
        %v2588 = vpop.permute.xlu0 %2587
        %2591 = vset.pattern.permute.xlu0 0
        %2592 = vperm.xlu0 %2591, %v1825
        %v2593 = vpop.permute.xlu0 %2592
        %v2595 = vmul.f32 %v2438, %v2403
        %v2596 = vmul.f32 %v2443, %v2404
        %v2597 = vmul.f32 %v2448, %v2405
        %v2598 = vmul.f32 %v2453, %v2406
        %v2599 = vmul.f32 %v2458, %v2407
        %v2600 = vmul.f32 %v2463, %v2408
        %v2601 = vmul.f32 %v2468, %v2409
        %v2602 = vmul.f32 %v2473, %v2410
        %v2603 = vmul.f32 %v2478, %v2411
        %v2604 = vmul.f32 %v2483, %v2412
        %v2605 = vmul.f32 %v2488, %v2413
        %v2606 = vmul.f32 %v2493, %v2414
        %v2607 = vmul.f32 %v2498, %v2415
        %v2608 = vmul.f32 %v2503, %v2416
        %v2609 = vmul.f32 %v2508, %v2417
        %v2610 = vmul.f32 %v2513, %v2418
        %v2611 = vmul.f32 %v2518, %v2419
        %v2612 = vmul.f32 %v2523, %v2420
        %v2613 = vmul.f32 %v2528, %v2421
        %v2614 = vmul.f32 %v2533, %v2422
        %v2615 = vmul.f32 %v2538, %v2423
        %v2616 = vmul.f32 %v2543, %v2424
        %v2617 = vmul.f32 %v2548, %v2425
        %v2618 = vmul.f32 %v2553, %v2426
        %v2619 = vmul.f32 %v2558, %v2427
        %v2620 = vmul.f32 %v2563, %v2428
        %v2621 = vmul.f32 %v2568, %v2429
        %v2622 = vmul.f32 %v2573, %v2430
        %v2623 = vmul.f32 %v2578, %v2431
        %v2624 = vmul.f32 %v2583, %v2432
        %v2625 = vmul.f32 %v2588, %v2433
        %v2626 = vmul.f32 %v2593, %v2434
        %v2627 = vpack.c.bf16 %v2055, %v2051
        %v2628 = vpack.c.bf16 %v2057, %v2053
        %v2629 = vpack.c.bf16 %v2063, %v2059
        %v2630 = vpack.c.bf16 %v2065, %v2061
        %v2631 = vpack.c.bf16 %v2071, %v2067
        %v2632 = vpack.c.bf16 %v2073, %v2069
        %v2633 = vpack.c.bf16 %v2079, %v2075
        %v2634 = vpack.c.bf16 %v2081, %v2077
        %v2635 = vpack.c.bf16 %v2087, %v2083
        %v2636 = vpack.c.bf16 %v2089, %v2085
        %v2637 = vpack.c.bf16 %v2095, %v2091
        %v2638 = vpack.c.bf16 %v2097, %v2093
        %v2639 = vpack.c.bf16 %v2103, %v2099
        %v2640 = vpack.c.bf16 %v2105, %v2101
        %v2641 = vpack.c.bf16 %v2111, %v2107
        %v2642 = vpack.c.bf16 %v2113, %v2109
        %v2643 = vpack.c.bf16 %v2119, %v2115
        %v2644 = vpack.c.bf16 %v2121, %v2117
        %v2645 = vpack.c.bf16 %v2127, %v2123
        %v2646 = vpack.c.bf16 %v2129, %v2125
        %v2647 = vpack.c.bf16 %v2135, %v2131
        %v2648 = vpack.c.bf16 %v2137, %v2133
        %v2649 = vpack.c.bf16 %v2143, %v2139
        %v2650 = vpack.c.bf16 %v2145, %v2141
        %v2651 = vpack.c.bf16 %v2151, %v2147
        %v2652 = vpack.c.bf16 %v2153, %v2149
        %v2653 = vpack.c.bf16 %v2159, %v2155
        %v2654 = vpack.c.bf16 %v2161, %v2157
        %v2655 = vpack.c.bf16 %v2167, %v2163
        %v2656 = vpack.c.bf16 %v2169, %v2165
        %v2657 = vpack.c.bf16 %v2175, %v2171
        %v2658 = vpack.c.bf16 %v2177, %v2173
        %2659 = vmatpush.bf16.msra.mxu0 %v1255
        %2660 = vmatpush.bf16.msra.mxu0 %v1254
        %2661 = vmatpush.bf16.msra.mxu0 %v1253
        %2662 = vmatpush.bf16.msra.mxu0 %v1252
        %2663 = vmatpush.bf16.msra.mxu0 %v1251
        %2664 = vmatpush.bf16.msra.mxu0 %v1250
        %2665 = vmatpush.bf16.msra.mxu0 %v1249
        %2666 = vmatpush.bf16.msra.mxu0 %v1248
        %2667 = vmatmul.bf16.gmra.mxu0 %v2627
        %v2668 = vpop.f32.mrf.mxu0
        %v2669 = vadd.f32 0.0, %v2668
        %v2670 = vpop.f32.mrf.mxu0
        %v2671 = vadd.f32 0.0, %v2670
        %2672 = vmatmul.bf16.gmra.mxu0 %v2629
        %v2673 = vpop.f32.mrf.mxu0
        %v2674 = vadd.f32 0.0, %v2673
        %v2675 = vpop.f32.mrf.mxu0
        %v2676 = vadd.f32 0.0, %v2675
        %2677 = vmatmul.bf16.gmra.mxu0 %v2631
        %v2678 = vpop.f32.mrf.mxu0
        %v2679 = vadd.f32 0.0, %v2678
        %v2680 = vpop.f32.mrf.mxu0
        %v2681 = vadd.f32 0.0, %v2680
        %2682 = vmatmul.bf16.gmra.mxu0 %v2633
        %v2683 = vpop.f32.mrf.mxu0
        %v2684 = vadd.f32 0.0, %v2683
        %v2685 = vpop.f32.mrf.mxu0
        %v2686 = vadd.f32 0.0, %v2685
        %2687 = vmatmul.bf16.gmra.mxu0 %v2635
        %v2688 = vpop.f32.mrf.mxu0
        %v2689 = vadd.f32 0.0, %v2688
        %v2690 = vpop.f32.mrf.mxu0
        %v2691 = vadd.f32 0.0, %v2690
        %2692 = vmatmul.bf16.gmra.mxu0 %v2637
        %v2693 = vpop.f32.mrf.mxu0
        %v2694 = vadd.f32 0.0, %v2693
        %v2695 = vpop.f32.mrf.mxu0
        %v2696 = vadd.f32 0.0, %v2695
        %2697 = vmatmul.bf16.gmra.mxu0 %v2639
        %v2698 = vpop.f32.mrf.mxu0
        %v2699 = vadd.f32 0.0, %v2698
        %v2700 = vpop.f32.mrf.mxu0
        %v2701 = vadd.f32 0.0, %v2700
        %2702 = vmatmul.bf16.gmra.mxu0 %v2641
        %v2703 = vpop.f32.mrf.mxu0
        %v2704 = vadd.f32 0.0, %v2703
        %v2705 = vpop.f32.mrf.mxu0
        %v2706 = vadd.f32 0.0, %v2705
        %2707 = vmatmul.bf16.gmra.mxu0 %v2643
        %v2708 = vpop.f32.mrf.mxu0
        %v2709 = vadd.f32 0.0, %v2708
        %v2710 = vpop.f32.mrf.mxu0
        %v2711 = vadd.f32 0.0, %v2710
        %2712 = vmatmul.bf16.gmra.mxu0 %v2645
        %v2713 = vpop.f32.mrf.mxu0
        %v2714 = vadd.f32 0.0, %v2713
        %v2715 = vpop.f32.mrf.mxu0
        %v2716 = vadd.f32 0.0, %v2715
        %2717 = vmatmul.bf16.gmra.mxu0 %v2647
        %v2718 = vpop.f32.mrf.mxu0
        %v2719 = vadd.f32 0.0, %v2718
        %v2720 = vpop.f32.mrf.mxu0
        %v2721 = vadd.f32 0.0, %v2720
        %2722 = vmatmul.bf16.gmra.mxu0 %v2649
        %v2723 = vpop.f32.mrf.mxu0
        %v2724 = vadd.f32 0.0, %v2723
        %v2725 = vpop.f32.mrf.mxu0
        %v2726 = vadd.f32 0.0, %v2725
        %2727 = vmatmul.bf16.gmra.mxu0 %v2651
        %v2728 = vpop.f32.mrf.mxu0
        %v2729 = vadd.f32 0.0, %v2728
        %v2730 = vpop.f32.mrf.mxu0
        %v2731 = vadd.f32 0.0, %v2730
        %2732 = vmatmul.bf16.gmra.mxu0 %v2653
        %v2733 = vpop.f32.mrf.mxu0
        %v2734 = vadd.f32 0.0, %v2733
        %v2735 = vpop.f32.mrf.mxu0
        %v2736 = vadd.f32 0.0, %v2735
        %2737 = vmatmul.bf16.gmra.mxu0 %v2655
        %v2738 = vpop.f32.mrf.mxu0
        %v2739 = vadd.f32 0.0, %v2738
        %v2740 = vpop.f32.mrf.mxu0
        %v2741 = vadd.f32 0.0, %v2740
        %2742 = vmatmul.bf16.gmra.mxu0 %v2657
        %v2743 = vpop.f32.mrf.mxu0
        %v2744 = vadd.f32 0.0, %v2743
        %v2745 = vpop.f32.mrf.mxu0
        %v2746 = vadd.f32 0.0, %v2745
        %2747 = vdwg.mxu0
        %2748 = vmatpush.bf16.msra.mxu0 %v1263
        %2749 = vmatpush.bf16.msra.mxu0 %v1262
        %2750 = vmatpush.bf16.msra.mxu0 %v1261
        %2751 = vmatpush.bf16.msra.mxu0 %v1260
        %2752 = vmatpush.bf16.msra.mxu0 %v1259
        %2753 = vmatpush.bf16.msra.mxu0 %v1258
        %2754 = vmatpush.bf16.msra.mxu0 %v1257
        %2755 = vmatpush.bf16.msra.mxu0 %v1256
        %2756 = vmatmul.bf16.gmra.mxu0 %v2628
        %v2757 = vpop.f32.mrf.mxu0
        %v2758 = vadd.f32 %v2669, %v2757
        %v2759 = vpop.f32.mrf.mxu0
        %v2760 = vadd.f32 %v2671, %v2759
        %2761 = vmatmul.bf16.gmra.mxu0 %v2630
        %v2762 = vpop.f32.mrf.mxu0
        %v2763 = vadd.f32 %v2674, %v2762
        %v2764 = vpop.f32.mrf.mxu0
        %v2765 = vadd.f32 %v2676, %v2764
        %2766 = vmatmul.bf16.gmra.mxu0 %v2632
        %v2767 = vpop.f32.mrf.mxu0
        %v2768 = vadd.f32 %v2679, %v2767
        %v2769 = vpop.f32.mrf.mxu0
        %v2770 = vadd.f32 %v2681, %v2769
        %2771 = vmatmul.bf16.gmra.mxu0 %v2634
        %v2772 = vpop.f32.mrf.mxu0
        %v2773 = vadd.f32 %v2684, %v2772
        %v2774 = vpop.f32.mrf.mxu0
        %v2775 = vadd.f32 %v2686, %v2774
        %2776 = vmatmul.bf16.gmra.mxu0 %v2636
        %v2777 = vpop.f32.mrf.mxu0
        %v2778 = vadd.f32 %v2689, %v2777
        %v2779 = vpop.f32.mrf.mxu0
        %v2780 = vadd.f32 %v2691, %v2779
        %2781 = vmatmul.bf16.gmra.mxu0 %v2638
        %v2782 = vpop.f32.mrf.mxu0
        %v2783 = vadd.f32 %v2694, %v2782
        %v2784 = vpop.f32.mrf.mxu0
        %v2785 = vadd.f32 %v2696, %v2784
        %2786 = vmatmul.bf16.gmra.mxu0 %v2640
        %v2787 = vpop.f32.mrf.mxu0
        %v2788 = vadd.f32 %v2699, %v2787
        %v2789 = vpop.f32.mrf.mxu0
        %v2790 = vadd.f32 %v2701, %v2789
        %2791 = vmatmul.bf16.gmra.mxu0 %v2642
        %v2792 = vpop.f32.mrf.mxu0
        %v2793 = vadd.f32 %v2704, %v2792
        %v2794 = vpop.f32.mrf.mxu0
        %v2795 = vadd.f32 %v2706, %v2794
        %2796 = vmatmul.bf16.gmra.mxu0 %v2644
        %v2797 = vpop.f32.mrf.mxu0
        %v2798 = vadd.f32 %v2709, %v2797
        %v2799 = vpop.f32.mrf.mxu0
        %v2800 = vadd.f32 %v2711, %v2799
        %2801 = vmatmul.bf16.gmra.mxu0 %v2646
        %v2802 = vpop.f32.mrf.mxu0
        %v2803 = vadd.f32 %v2714, %v2802
        %v2804 = vpop.f32.mrf.mxu0
        %v2805 = vadd.f32 %v2716, %v2804
        %2806 = vmatmul.bf16.gmra.mxu0 %v2648
        %v2807 = vpop.f32.mrf.mxu0
        %v2808 = vadd.f32 %v2719, %v2807
        %v2809 = vpop.f32.mrf.mxu0
        %v2810 = vadd.f32 %v2721, %v2809
        %2811 = vmatmul.bf16.gmra.mxu0 %v2650
        %v2812 = vpop.f32.mrf.mxu0
        %v2813 = vadd.f32 %v2724, %v2812
        %v2814 = vpop.f32.mrf.mxu0
        %v2815 = vadd.f32 %v2726, %v2814
        %2816 = vmatmul.bf16.gmra.mxu0 %v2652
        %v2817 = vpop.f32.mrf.mxu0
        %v2818 = vadd.f32 %v2729, %v2817
        %v2819 = vpop.f32.mrf.mxu0
        %v2820 = vadd.f32 %v2731, %v2819
        %2821 = vmatmul.bf16.gmra.mxu0 %v2654
        %v2822 = vpop.f32.mrf.mxu0
        %v2823 = vadd.f32 %v2734, %v2822
        %v2824 = vpop.f32.mrf.mxu0
        %v2825 = vadd.f32 %v2736, %v2824
        %2826 = vmatmul.bf16.gmra.mxu0 %v2656
        %v2827 = vpop.f32.mrf.mxu0
        %v2828 = vadd.f32 %v2739, %v2827
        %v2829 = vpop.f32.mrf.mxu0
        %v2830 = vadd.f32 %v2741, %v2829
        %2831 = vmatmul.bf16.gmra.mxu0 %v2658
        %v2832 = vpop.f32.mrf.mxu0
        %v2833 = vadd.f32 %v2744, %v2832
        %v2834 = vpop.f32.mrf.mxu0
        %v2835 = vadd.f32 %v2746, %v2834
        %2836 = vdwg.mxu0
        %v2837 = vadd.f32 %v2595, %v2758
        %v2838 = vadd.f32 %v2596, %v2760
        %v2839 = vadd.f32 %v2597, %v2763
        %v2840 = vadd.f32 %v2598, %v2765
        %v2841 = vadd.f32 %v2599, %v2768
        %v2842 = vadd.f32 %v2600, %v2770
        %v2843 = vadd.f32 %v2601, %v2773
        %v2844 = vadd.f32 %v2602, %v2775
        %v2845 = vadd.f32 %v2603, %v2778
        %v2846 = vadd.f32 %v2604, %v2780
        %v2847 = vadd.f32 %v2605, %v2783
        %v2848 = vadd.f32 %v2606, %v2785
        %v2849 = vadd.f32 %v2607, %v2788
        %v2850 = vadd.f32 %v2608, %v2790
        %v2851 = vadd.f32 %v2609, %v2793
        %v2852 = vadd.f32 %v2610, %v2795
        %v2853 = vadd.f32 %v2611, %v2798
        %v2854 = vadd.f32 %v2612, %v2800
        %v2855 = vadd.f32 %v2613, %v2803
        %v2856 = vadd.f32 %v2614, %v2805
        %v2857 = vadd.f32 %v2615, %v2808
        %v2858 = vadd.f32 %v2616, %v2810
        %v2859 = vadd.f32 %v2617, %v2813
        %v2860 = vadd.f32 %v2618, %v2815
        %v2861 = vadd.f32 %v2619, %v2818
        %v2862 = vadd.f32 %v2620, %v2820
        %v2863 = vadd.f32 %v2621, %v2823
        %v2864 = vadd.f32 %v2622, %v2825
        %v2865 = vadd.f32 %v2623, %v2828
        %v2866 = vadd.f32 %v2624, %v2830
        %v2867 = vadd.f32 %v2625, %v2833
        %v2868 = vadd.f32 %v2626, %v2835
        %2869 = vst [vmem:[#allocation6] sm:$0xff] %v2837
        %2870 = vst [vmem:[#allocation6 + $0x8] sm:$0xff] %v2838
        %2871 = vst [vmem:[#allocation6 + $0x10] sm:$0xff] %v2839
        %2872 = vst [vmem:[#allocation6 + $0x18] sm:$0xff] %v2840
        %2873 = vst [vmem:[#allocation6 + $0x20] sm:$0xff] %v2841
        %2874 = vst [vmem:[#allocation6 + $0x28] sm:$0xff] %v2842
        %2875 = vst [vmem:[#allocation6 + $0x30] sm:$0xff] %v2843
        %2876 = vst [vmem:[#allocation6 + $0x38] sm:$0xff] %v2844
        %2877 = vst [vmem:[#allocation6 + $0x40] sm:$0xff] %v2845
        %2878 = vst [vmem:[#allocation6 + $0x48] sm:$0xff] %v2846
        %2879 = vst [vmem:[#allocation6 + $0x50] sm:$0xff] %v2847
        %2880 = vst [vmem:[#allocation6 + $0x58] sm:$0xff] %v2848
        %2881 = vst [vmem:[#allocation6 + $0x60] sm:$0xff] %v2849
        %2882 = vst [vmem:[#allocation6 + $0x68] sm:$0xff] %v2850
        %2883 = vst [vmem:[#allocation6 + $0x70] sm:$0xff] %v2851
        %2884 = vst [vmem:[#allocation6 + $0x78] sm:$0xff] %v2852
        %2885 = vst [vmem:[#allocation6 + $0x80] sm:$0xff] %v2853
        %2886 = vst [vmem:[#allocation6 + $0x88] sm:$0xff] %v2854
        %2887 = vst [vmem:[#allocation6 + $0x90] sm:$0xff] %v2855
        %2888 = vst [vmem:[#allocation6 + $0x98] sm:$0xff] %v2856
        %2889 = vst [vmem:[#allocation6 + $0xa0] sm:$0xff] %v2857
        %2890 = vst [vmem:[#allocation6 + $0xa8] sm:$0xff] %v2858
        %2891 = vst [vmem:[#allocation6 + $0xb0] sm:$0xff] %v2859
        %2892 = vst [vmem:[#allocation6 + $0xb8] sm:$0xff] %v2860
        %2893 = vst [vmem:[#allocation6 + $0xc0] sm:$0xff] %v2861
        %2894 = vst [vmem:[#allocation6 + $0xc8] sm:$0xff] %v2862
        %2895 = vst [vmem:[#allocation6 + $0xd0] sm:$0xff] %v2863
        %2896 = vst [vmem:[#allocation6 + $0xd8] sm:$0xff] %v2864
        %2897 = vst [vmem:[#allocation6 + $0xe0] sm:$0xff] %v2865
        %2898 = vst [vmem:[#allocation6 + $0xe8] sm:$0xff] %v2866
        %2899 = vst [vmem:[#allocation6 + $0xf0] sm:$0xff] %v2867
        %2900 = vst [vmem:[#allocation6 + $0xf8] sm:$0xff] %v2868
        %2901 = vst.msk [vmem:[#allocation4] sm:$0xff] %vm2370, %v1698
        %2902 = vst.msk [vmem:[#allocation4 + $0x8] sm:$0xff] %vm2370, %v1699
        %2903 = vst.msk [vmem:[#allocation4 + $0x10] sm:$0xff] %vm2370, %v1700
        %2904 = vst.msk [vmem:[#allocation4 + $0x18] sm:$0xff] %vm2370, %v1701
        %2905 = vst.msk [vmem:[#allocation4 + $0x20] sm:$0xff] %vm2370, %v1702
        %2906 = vst.msk [vmem:[#allocation4 + $0x28] sm:$0xff] %vm2370, %v1703
        %2907 = vst.msk [vmem:[#allocation4 + $0x30] sm:$0xff] %vm2370, %v1704
        %2908 = vst.msk [vmem:[#allocation4 + $0x38] sm:$0xff] %vm2370, %v1705
        %2909 = vst.msk [vmem:[#allocation4 + $0x40] sm:$0xff] %vm2370, %v1706
        %2910 = vst.msk [vmem:[#allocation4 + $0x48] sm:$0xff] %vm2370, %v1707
        %2911 = vst.msk [vmem:[#allocation4 + $0x50] sm:$0xff] %vm2370, %v1708
        %2912 = vst.msk [vmem:[#allocation4 + $0x58] sm:$0xff] %vm2370, %v1709
        %2913 = vst.msk [vmem:[#allocation4 + $0x60] sm:$0xff] %vm2370, %v1710
        %2914 = vst.msk [vmem:[#allocation4 + $0x68] sm:$0xff] %vm2370, %v1711
        %2915 = vst.msk [vmem:[#allocation4 + $0x70] sm:$0xff] %vm2370, %v1712
        %2916 = vst.msk [vmem:[#allocation4 + $0x78] sm:$0xff] %vm2370, %v1713
        %2917 = vst.msk [vmem:[#allocation4 + $0x80] sm:$0xff] %vm2370, %v1714
        %2918 = vst.msk [vmem:[#allocation4 + $0x88] sm:$0xff] %vm2370, %v1715
        %2919 = vst.msk [vmem:[#allocation4 + $0x90] sm:$0xff] %vm2370, %v1716
        %2920 = vst.msk [vmem:[#allocation4 + $0x98] sm:$0xff] %vm2370, %v1717
        %2921 = vst.msk [vmem:[#allocation4 + $0xa0] sm:$0xff] %vm2370, %v1718
        %2922 = vst.msk [vmem:[#allocation4 + $0xa8] sm:$0xff] %vm2370, %v1719
        %2923 = vst.msk [vmem:[#allocation4 + $0xb0] sm:$0xff] %vm2370, %v1720
        %2924 = vst.msk [vmem:[#allocation4 + $0xb8] sm:$0xff] %vm2370, %v1721
        %2925 = vst.msk [vmem:[#allocation4 + $0xc0] sm:$0xff] %vm2370, %v1722
        %2926 = vst.msk [vmem:[#allocation4 + $0xc8] sm:$0xff] %vm2370, %v1723
        %2927 = vst.msk [vmem:[#allocation4 + $0xd0] sm:$0xff] %vm2370, %v1724
        %2928 = vst.msk [vmem:[#allocation4 + $0xd8] sm:$0xff] %vm2370, %v1725
        %2929 = vst.msk [vmem:[#allocation4 + $0xe0] sm:$0xff] %vm2370, %v1726
        %2930 = vst.msk [vmem:[#allocation4 + $0xe8] sm:$0xff] %vm2370, %v1727
        %2931 = vst.msk [vmem:[#allocation4 + $0xf0] sm:$0xff] %vm2370, %v1728
        %2932 = vst.msk [vmem:[#allocation4 + $0xf8] sm:$0xff] %vm2370, %v1729
        // Predicated region
        $region65: #{tpu_custom_call.1} parent=43 // pred_check
          %p2933 = pneg %p379
        $region66: #{tpu_custom_call.1} parent=43 // pred_check_branch
          %2935 = sbr.rel (%p2933) target = $region68
        $region67: #{tpu_custom_call.1} parent=43 // pred_region
          %v2936 = vld [vmem:[#allocation5] sm:$0xff]
          %v2937 = vld [vmem:[#allocation5 + $0x8] sm:$0xff]
          %v2938 = vld [vmem:[#allocation5 + $0x10] sm:$0xff]
          %v2939 = vld [vmem:[#allocation5 + $0x18] sm:$0xff]
          %v2940 = vld [vmem:[#allocation5 + $0x20] sm:$0xff]
          %v2941 = vld [vmem:[#allocation5 + $0x28] sm:$0xff]
          %v2942 = vld [vmem:[#allocation5 + $0x30] sm:$0xff]
          %v2943 = vld [vmem:[#allocation5 + $0x38] sm:$0xff]
          %v2944 = vld [vmem:[#allocation5 + $0x40] sm:$0xff]
          %v2945 = vld [vmem:[#allocation5 + $0x48] sm:$0xff]
          %v2946 = vld [vmem:[#allocation5 + $0x50] sm:$0xff]
          %v2947 = vld [vmem:[#allocation5 + $0x58] sm:$0xff]
          %v2948 = vld [vmem:[#allocation5 + $0x60] sm:$0xff]
          %v2949 = vld [vmem:[#allocation5 + $0x68] sm:$0xff]
          %v2950 = vld [vmem:[#allocation5 + $0x70] sm:$0xff]
          %v2951 = vld [vmem:[#allocation5 + $0x78] sm:$0xff]
          %v2952 = vld [vmem:[#allocation5 + $0x80] sm:$0xff]
          %v2953 = vld [vmem:[#allocation5 + $0x88] sm:$0xff]
          %v2954 = vld [vmem:[#allocation5 + $0x90] sm:$0xff]
          %v2955 = vld [vmem:[#allocation5 + $0x98] sm:$0xff]
          %v2956 = vld [vmem:[#allocation5 + $0xa0] sm:$0xff]
          %v2957 = vld [vmem:[#allocation5 + $0xa8] sm:$0xff]
          %v2958 = vld [vmem:[#allocation5 + $0xb0] sm:$0xff]
          %v2959 = vld [vmem:[#allocation5 + $0xb8] sm:$0xff]
          %v2960 = vld [vmem:[#allocation5 + $0xc0] sm:$0xff]
          %v2961 = vld [vmem:[#allocation5 + $0xc8] sm:$0xff]
          %v2962 = vld [vmem:[#allocation5 + $0xd0] sm:$0xff]
          %v2963 = vld [vmem:[#allocation5 + $0xd8] sm:$0xff]
          %v2964 = vld [vmem:[#allocation5 + $0xe0] sm:$0xff]
          %v2965 = vld [vmem:[#allocation5 + $0xe8] sm:$0xff]
          %v2966 = vld [vmem:[#allocation5 + $0xf0] sm:$0xff]
          %v2967 = vld [vmem:[#allocation5 + $0xf8] sm:$0xff]
          %v2968 = vrcp.pop %v2936
          %v2969 = vrcp.pop %v2937
          %v2970 = vrcp.pop %v2938
          %v2971 = vrcp.pop %v2939
          %v2972 = vrcp.pop %v2940
          %v2973 = vrcp.pop %v2941
          %v2974 = vrcp.pop %v2942
          %v2975 = vrcp.pop %v2943
          %v2976 = vrcp.pop %v2944
          %v2977 = vrcp.pop %v2945
          %v2978 = vrcp.pop %v2946
          %v2979 = vrcp.pop %v2947
          %v2980 = vrcp.pop %v2948
          %v2981 = vrcp.pop %v2949
          %v2982 = vrcp.pop %v2950
          %v2983 = vrcp.pop %v2951
          %v2984 = vrcp.pop %v2952
          %v2985 = vrcp.pop %v2953
          %v2986 = vrcp.pop %v2954
          %v2987 = vrcp.pop %v2955
          %v2988 = vrcp.pop %v2956
          %v2989 = vrcp.pop %v2957
          %v2990 = vrcp.pop %v2958
          %v2991 = vrcp.pop %v2959
          %v2992 = vrcp.pop %v2960
          %v2993 = vrcp.pop %v2961
          %v2994 = vrcp.pop %v2962
          %v2995 = vrcp.pop %v2963
          %v2996 = vrcp.pop %v2964
          %v2997 = vrcp.pop %v2965
          %v2998 = vrcp.pop %v2966
          %v2999 = vrcp.pop %v2967
          %v3000 = vld [vmem:[%s321] sm:$0xff]
          %v3001 = vld [vmem:[%s321 + $0x8] sm:$0xff]
          %v3002 = vld [vmem:[%s321 + $0x10] sm:$0xff]
          %v3003 = vld [vmem:[%s321 + $0x18] sm:$0xff]
          %v3004 = vld [vmem:[%s321 + $0x20] sm:$0xff]
          %v3005 = vld [vmem:[%s321 + $0x28] sm:$0xff]
          %v3006 = vld [vmem:[%s321 + $0x30] sm:$0xff]
          %v3007 = vld [vmem:[%s321 + $0x38] sm:$0xff]
          %v3008 = vld [vmem:[%s321 + $0x40] sm:$0xff]
          %v3009 = vld [vmem:[%s321 + $0x48] sm:$0xff]
          %v3010 = vld [vmem:[%s321 + $0x50] sm:$0xff]
          %v3011 = vld [vmem:[%s321 + $0x58] sm:$0xff]
          %v3012 = vld [vmem:[%s321 + $0x60] sm:$0xff]
          %v3013 = vld [vmem:[%s321 + $0x68] sm:$0xff]
          %v3014 = vld [vmem:[%s321 + $0x70] sm:$0xff]
          %v3015 = vld [vmem:[%s321 + $0x78] sm:$0xff]
          %v3016 = vld [vmem:[%s321 + $0x80] sm:$0xff]
          %v3017 = vld [vmem:[%s321 + $0x88] sm:$0xff]
          %v3018 = vld [vmem:[%s321 + $0x90] sm:$0xff]
          %v3019 = vld [vmem:[%s321 + $0x98] sm:$0xff]
          %v3020 = vld [vmem:[%s321 + $0xa0] sm:$0xff]
          %v3021 = vld [vmem:[%s321 + $0xa8] sm:$0xff]
          %v3022 = vld [vmem:[%s321 + $0xb0] sm:$0xff]
          %v3023 = vld [vmem:[%s321 + $0xb8] sm:$0xff]
          %v3024 = vld [vmem:[%s321 + $0xc0] sm:$0xff]
          %v3025 = vld [vmem:[%s321 + $0xc8] sm:$0xff]
          %v3026 = vld [vmem:[%s321 + $0xd0] sm:$0xff]
          %v3027 = vld [vmem:[%s321 + $0xd8] sm:$0xff]
          %v3028 = vld [vmem:[%s321 + $0xe0] sm:$0xff]
          %v3029 = vld [vmem:[%s321 + $0xe8] sm:$0xff]
          %v3030 = vld [vmem:[%s321 + $0xf0] sm:$0xff]
          %v3031 = vld [vmem:[%s321 + $0xf8] sm:$0xff]
          %v3032 = vld [vmem:[#allocation6] sm:$0xff]
          %v3033 = vld [vmem:[#allocation6 + $0x8] sm:$0xff]
          %v3034 = vld [vmem:[#allocation6 + $0x10] sm:$0xff]
          %v3035 = vld [vmem:[#allocation6 + $0x18] sm:$0xff]
          %v3036 = vld [vmem:[#allocation6 + $0x20] sm:$0xff]
          %v3037 = vld [vmem:[#allocation6 + $0x28] sm:$0xff]
          %v3038 = vld [vmem:[#allocation6 + $0x30] sm:$0xff]
          %v3039 = vld [vmem:[#allocation6 + $0x38] sm:$0xff]
          %v3040 = vld [vmem:[#allocation6 + $0x40] sm:$0xff]
          %v3041 = vld [vmem:[#allocation6 + $0x48] sm:$0xff]
          %v3042 = vld [vmem:[#allocation6 + $0x50] sm:$0xff]
          %v3043 = vld [vmem:[#allocation6 + $0x58] sm:$0xff]
          %v3044 = vld [vmem:[#allocation6 + $0x60] sm:$0xff]
          %v3045 = vld [vmem:[#allocation6 + $0x68] sm:$0xff]
          %v3046 = vld [vmem:[#allocation6 + $0x70] sm:$0xff]
          %v3047 = vld [vmem:[#allocation6 + $0x78] sm:$0xff]
          %v3048 = vld [vmem:[#allocation6 + $0x80] sm:$0xff]
          %v3049 = vld [vmem:[#allocation6 + $0x88] sm:$0xff]
          %v3050 = vld [vmem:[#allocation6 + $0x90] sm:$0xff]
          %v3051 = vld [vmem:[#allocation6 + $0x98] sm:$0xff]
          %v3052 = vld [vmem:[#allocation6 + $0xa0] sm:$0xff]
          %v3053 = vld [vmem:[#allocation6 + $0xa8] sm:$0xff]
          %v3054 = vld [vmem:[#allocation6 + $0xb0] sm:$0xff]
          %v3055 = vld [vmem:[#allocation6 + $0xb8] sm:$0xff]
          %v3056 = vld [vmem:[#allocation6 + $0xc0] sm:$0xff]
          %v3057 = vld [vmem:[#allocation6 + $0xc8] sm:$0xff]
          %v3058 = vld [vmem:[#allocation6 + $0xd0] sm:$0xff]
          %v3059 = vld [vmem:[#allocation6 + $0xd8] sm:$0xff]
          %v3060 = vld [vmem:[#allocation6 + $0xe0] sm:$0xff]
          %v3061 = vld [vmem:[#allocation6 + $0xe8] sm:$0xff]
          %v3062 = vld [vmem:[#allocation6 + $0xf0] sm:$0xff]
          %v3063 = vld [vmem:[#allocation6 + $0xf8] sm:$0xff]
          %3065 = vset.pattern.permute.xlu0 0
          %3066 = vperm.xlu0 %3065, %v2968
          %v3067 = vpop.permute.xlu0 %3066
          %3070 = vset.pattern.permute.xlu0 0
          %3071 = vperm.xlu0 %3070, %v2969
          %v3072 = vpop.permute.xlu0 %3071
          %3075 = vset.pattern.permute.xlu0 0
          %3076 = vperm.xlu0 %3075, %v2970
          %v3077 = vpop.permute.xlu0 %3076
          %3080 = vset.pattern.permute.xlu0 0
          %3081 = vperm.xlu0 %3080, %v2971
          %v3082 = vpop.permute.xlu0 %3081
          %3085 = vset.pattern.permute.xlu0 0
          %3086 = vperm.xlu0 %3085, %v2972
          %v3087 = vpop.permute.xlu0 %3086
          %3090 = vset.pattern.permute.xlu0 0
          %3091 = vperm.xlu0 %3090, %v2973
          %v3092 = vpop.permute.xlu0 %3091
          %3095 = vset.pattern.permute.xlu0 0
          %3096 = vperm.xlu0 %3095, %v2974
          %v3097 = vpop.permute.xlu0 %3096
          %3100 = vset.pattern.permute.xlu0 0
          %3101 = vperm.xlu0 %3100, %v2975
          %v3102 = vpop.permute.xlu0 %3101
          %3105 = vset.pattern.permute.xlu0 0
          %3106 = vperm.xlu0 %3105, %v2976
          %v3107 = vpop.permute.xlu0 %3106
          %3110 = vset.pattern.permute.xlu0 0
          %3111 = vperm.xlu0 %3110, %v2977
          %v3112 = vpop.permute.xlu0 %3111
          %3115 = vset.pattern.permute.xlu0 0
          %3116 = vperm.xlu0 %3115, %v2978
          %v3117 = vpop.permute.xlu0 %3116
          %3120 = vset.pattern.permute.xlu0 0
          %3121 = vperm.xlu0 %3120, %v2979
          %v3122 = vpop.permute.xlu0 %3121
          %3125 = vset.pattern.permute.xlu0 0
          %3126 = vperm.xlu0 %3125, %v2980
          %v3127 = vpop.permute.xlu0 %3126
          %3130 = vset.pattern.permute.xlu0 0
          %3131 = vperm.xlu0 %3130, %v2981
          %v3132 = vpop.permute.xlu0 %3131
          %3135 = vset.pattern.permute.xlu0 0
          %3136 = vperm.xlu0 %3135, %v2982
          %v3137 = vpop.permute.xlu0 %3136
          %3140 = vset.pattern.permute.xlu0 0
          %3141 = vperm.xlu0 %3140, %v2983
          %v3142 = vpop.permute.xlu0 %3141
          %3145 = vset.pattern.permute.xlu0 0
          %3146 = vperm.xlu0 %3145, %v2984
          %v3147 = vpop.permute.xlu0 %3146
          %3150 = vset.pattern.permute.xlu0 0
          %3151 = vperm.xlu0 %3150, %v2985
          %v3152 = vpop.permute.xlu0 %3151
          %3155 = vset.pattern.permute.xlu0 0
          %3156 = vperm.xlu0 %3155, %v2986
          %v3157 = vpop.permute.xlu0 %3156
          %3160 = vset.pattern.permute.xlu0 0
          %3161 = vperm.xlu0 %3160, %v2987
          %v3162 = vpop.permute.xlu0 %3161
          %3165 = vset.pattern.permute.xlu0 0
          %3166 = vperm.xlu0 %3165, %v2988
          %v3167 = vpop.permute.xlu0 %3166
          %3170 = vset.pattern.permute.xlu0 0
          %3171 = vperm.xlu0 %3170, %v2989
          %v3172 = vpop.permute.xlu0 %3171
          %3175 = vset.pattern.permute.xlu0 0
          %3176 = vperm.xlu0 %3175, %v2990
          %v3177 = vpop.permute.xlu0 %3176
          %3180 = vset.pattern.permute.xlu0 0
          %3181 = vperm.xlu0 %3180, %v2991
          %v3182 = vpop.permute.xlu0 %3181
          %3185 = vset.pattern.permute.xlu0 0
          %3186 = vperm.xlu0 %3185, %v2992
          %v3187 = vpop.permute.xlu0 %3186
          %3190 = vset.pattern.permute.xlu0 0
          %3191 = vperm.xlu0 %3190, %v2993
          %v3192 = vpop.permute.xlu0 %3191
          %3195 = vset.pattern.permute.xlu0 0
          %3196 = vperm.xlu0 %3195, %v2994
          %v3197 = vpop.permute.xlu0 %3196
          %3200 = vset.pattern.permute.xlu0 0
          %3201 = vperm.xlu0 %3200, %v2995
          %v3202 = vpop.permute.xlu0 %3201
          %3205 = vset.pattern.permute.xlu0 0
          %3206 = vperm.xlu0 %3205, %v2996
          %v3207 = vpop.permute.xlu0 %3206
          %3210 = vset.pattern.permute.xlu0 0
          %3211 = vperm.xlu0 %3210, %v2997
          %v3212 = vpop.permute.xlu0 %3211
          %3215 = vset.pattern.permute.xlu0 0
          %3216 = vperm.xlu0 %3215, %v2998
          %v3217 = vpop.permute.xlu0 %3216
          %3220 = vset.pattern.permute.xlu0 0
          %3221 = vperm.xlu0 %3220, %v2999
          %v3222 = vpop.permute.xlu0 %3221
          %v3224 = vmul.f32 %v3032, %v3067
          %v3225 = vmul.f32 %v3033, %v3072
          %v3226 = vmul.f32 %v3034, %v3077
          %v3227 = vmul.f32 %v3035, %v3082
          %v3228 = vmul.f32 %v3036, %v3087
          %v3229 = vmul.f32 %v3037, %v3092
          %v3230 = vmul.f32 %v3038, %v3097
          %v3231 = vmul.f32 %v3039, %v3102
          %v3232 = vmul.f32 %v3040, %v3107
          %v3233 = vmul.f32 %v3041, %v3112
          %v3234 = vmul.f32 %v3042, %v3117
          %v3235 = vmul.f32 %v3043, %v3122
          %v3236 = vmul.f32 %v3044, %v3127
          %v3237 = vmul.f32 %v3045, %v3132
          %v3238 = vmul.f32 %v3046, %v3137
          %v3239 = vmul.f32 %v3047, %v3142
          %v3240 = vmul.f32 %v3048, %v3147
          %v3241 = vmul.f32 %v3049, %v3152
          %v3242 = vmul.f32 %v3050, %v3157
          %v3243 = vmul.f32 %v3051, %v3162
          %v3244 = vmul.f32 %v3052, %v3167
          %v3245 = vmul.f32 %v3053, %v3172
          %v3246 = vmul.f32 %v3054, %v3177
          %v3247 = vmul.f32 %v3055, %v3182
          %v3248 = vmul.f32 %v3056, %v3187
          %v3249 = vmul.f32 %v3057, %v3192
          %v3250 = vmul.f32 %v3058, %v3197
          %v3251 = vmul.f32 %v3059, %v3202
          %v3252 = vmul.f32 %v3060, %v3207
          %v3253 = vmul.f32 %v3061, %v3212
          %v3254 = vmul.f32 %v3062, %v3217
          %v3255 = vmul.f32 %v3063, %v3222
          %v3256 = vadd.f32 %v3000, %v3224
          %v3257 = vadd.f32 %v3001, %v3225
          %v3258 = vadd.f32 %v3002, %v3226
          %v3259 = vadd.f32 %v3003, %v3227
          %v3260 = vadd.f32 %v3004, %v3228
          %v3261 = vadd.f32 %v3005, %v3229
          %v3262 = vadd.f32 %v3006, %v3230
          %v3263 = vadd.f32 %v3007, %v3231
          %v3264 = vadd.f32 %v3008, %v3232
          %v3265 = vadd.f32 %v3009, %v3233
          %v3266 = vadd.f32 %v3010, %v3234
          %v3267 = vadd.f32 %v3011, %v3235
          %v3268 = vadd.f32 %v3012, %v3236
          %v3269 = vadd.f32 %v3013, %v3237
          %v3270 = vadd.f32 %v3014, %v3238
          %v3271 = vadd.f32 %v3015, %v3239
          %v3272 = vadd.f32 %v3016, %v3240
          %v3273 = vadd.f32 %v3017, %v3241
          %v3274 = vadd.f32 %v3018, %v3242
          %v3275 = vadd.f32 %v3019, %v3243
          %v3276 = vadd.f32 %v3020, %v3244
          %v3277 = vadd.f32 %v3021, %v3245
          %v3278 = vadd.f32 %v3022, %v3246
          %v3279 = vadd.f32 %v3023, %v3247
          %v3280 = vadd.f32 %v3024, %v3248
          %v3281 = vadd.f32 %v3025, %v3249
          %v3282 = vadd.f32 %v3026, %v3250
          %v3283 = vadd.f32 %v3027, %v3251
          %v3284 = vadd.f32 %v3028, %v3252
          %v3285 = vadd.f32 %v3029, %v3253
          %v3286 = vadd.f32 %v3030, %v3254
          %v3287 = vadd.f32 %v3031, %v3255
          %v3288 = vld [vmem:[#allocation3] sm:$0xff]
          %v3289 = vld [vmem:[#allocation3 + $0x8] sm:$0xff]
          %v3290 = vld [vmem:[#allocation3 + $0x10] sm:$0xff]
          %v3291 = vld [vmem:[#allocation3 + $0x18] sm:$0xff]
          %v3292 = vld [vmem:[#allocation3 + $0x20] sm:$0xff]
          %v3293 = vld [vmem:[#allocation3 + $0x28] sm:$0xff]
          %v3294 = vld [vmem:[#allocation3 + $0x30] sm:$0xff]
          %v3295 = vld [vmem:[#allocation3 + $0x38] sm:$0xff]
          %v3296 = vld [vmem:[#allocation3 + $0x40] sm:$0xff]
          %v3297 = vld [vmem:[#allocation3 + $0x48] sm:$0xff]
          %v3298 = vld [vmem:[#allocation3 + $0x50] sm:$0xff]
          %v3299 = vld [vmem:[#allocation3 + $0x58] sm:$0xff]
          %v3300 = vld [vmem:[#allocation3 + $0x60] sm:$0xff]
          %v3301 = vld [vmem:[#allocation3 + $0x68] sm:$0xff]
          %v3302 = vld [vmem:[#allocation3 + $0x70] sm:$0xff]
          %v3303 = vld [vmem:[#allocation3 + $0x78] sm:$0xff]
          %v3304 = vld [vmem:[#allocation3 + $0x80] sm:$0xff]
          %v3305 = vld [vmem:[#allocation3 + $0x88] sm:$0xff]
          %v3306 = vld [vmem:[#allocation3 + $0x90] sm:$0xff]
          %v3307 = vld [vmem:[#allocation3 + $0x98] sm:$0xff]
          %v3308 = vld [vmem:[#allocation3 + $0xa0] sm:$0xff]
          %v3309 = vld [vmem:[#allocation3 + $0xa8] sm:$0xff]
          %v3310 = vld [vmem:[#allocation3 + $0xb0] sm:$0xff]
          %v3311 = vld [vmem:[#allocation3 + $0xb8] sm:$0xff]
          %v3312 = vld [vmem:[#allocation3 + $0xc0] sm:$0xff]
          %v3313 = vld [vmem:[#allocation3 + $0xc8] sm:$0xff]
          %v3314 = vld [vmem:[#allocation3 + $0xd0] sm:$0xff]
          %v3315 = vld [vmem:[#allocation3 + $0xd8] sm:$0xff]
          %v3316 = vld [vmem:[#allocation3 + $0xe0] sm:$0xff]
          %v3317 = vld [vmem:[#allocation3 + $0xe8] sm:$0xff]
          %v3318 = vld [vmem:[#allocation3 + $0xf0] sm:$0xff]
          %v3319 = vld [vmem:[#allocation3 + $0xf8] sm:$0xff]
          %v3320 = vadd.f32 %v3256, %v3288
          %v3321 = vadd.f32 %v3257, %v3289
          %v3322 = vadd.f32 %v3258, %v3290
          %v3323 = vadd.f32 %v3259, %v3291
          %v3324 = vadd.f32 %v3260, %v3292
          %v3325 = vadd.f32 %v3261, %v3293
          %v3326 = vadd.f32 %v3262, %v3294
          %v3327 = vadd.f32 %v3263, %v3295
          %v3328 = vadd.f32 %v3264, %v3296
          %v3329 = vadd.f32 %v3265, %v3297
          %v3330 = vadd.f32 %v3266, %v3298
          %v3331 = vadd.f32 %v3267, %v3299
          %v3332 = vadd.f32 %v3268, %v3300
          %v3333 = vadd.f32 %v3269, %v3301
          %v3334 = vadd.f32 %v3270, %v3302
          %v3335 = vadd.f32 %v3271, %v3303
          %v3336 = vadd.f32 %v3272, %v3304
          %v3337 = vadd.f32 %v3273, %v3305
          %v3338 = vadd.f32 %v3274, %v3306
          %v3339 = vadd.f32 %v3275, %v3307
          %v3340 = vadd.f32 %v3276, %v3308
          %v3341 = vadd.f32 %v3277, %v3309
          %v3342 = vadd.f32 %v3278, %v3310
          %v3343 = vadd.f32 %v3279, %v3311
          %v3344 = vadd.f32 %v3280, %v3312
          %v3345 = vadd.f32 %v3281, %v3313
          %v3346 = vadd.f32 %v3282, %v3314
          %v3347 = vadd.f32 %v3283, %v3315
          %v3348 = vadd.f32 %v3284, %v3316
          %v3349 = vadd.f32 %v3285, %v3317
          %v3350 = vadd.f32 %v3286, %v3318
          %v3351 = vadd.f32 %v3287, %v3319
          %3352 = vst [vmem:[%s375] sm:$0xff] %v3320
          %3353 = vst [vmem:[%s375 + $0x8] sm:$0xff] %v3321
          %3354 = vst [vmem:[%s375 + $0x10] sm:$0xff] %v3322
          %3355 = vst [vmem:[%s375 + $0x18] sm:$0xff] %v3323
          %3356 = vst [vmem:[%s375 + $0x20] sm:$0xff] %v3324
          %3357 = vst [vmem:[%s375 + $0x28] sm:$0xff] %v3325
          %3358 = vst [vmem:[%s375 + $0x30] sm:$0xff] %v3326
          %3359 = vst [vmem:[%s375 + $0x38] sm:$0xff] %v3327
          %3360 = vst [vmem:[%s375 + $0x40] sm:$0xff] %v3328
          %3361 = vst [vmem:[%s375 + $0x48] sm:$0xff] %v3329
          %3362 = vst [vmem:[%s375 + $0x50] sm:$0xff] %v3330
          %3363 = vst [vmem:[%s375 + $0x58] sm:$0xff] %v3331
          %3364 = vst [vmem:[%s375 + $0x60] sm:$0xff] %v3332
          %3365 = vst [vmem:[%s375 + $0x68] sm:$0xff] %v3333
          %3366 = vst [vmem:[%s375 + $0x70] sm:$0xff] %v3334
          %3367 = vst [vmem:[%s375 + $0x78] sm:$0xff] %v3335
          %3368 = vst [vmem:[%s375 + $0x80] sm:$0xff] %v3336
          %3369 = vst [vmem:[%s375 + $0x88] sm:$0xff] %v3337
          %3370 = vst [vmem:[%s375 + $0x90] sm:$0xff] %v3338
          %3371 = vst [vmem:[%s375 + $0x98] sm:$0xff] %v3339
          %3372 = vst [vmem:[%s375 + $0xa0] sm:$0xff] %v3340
          %3373 = vst [vmem:[%s375 + $0xa8] sm:$0xff] %v3341
          %3374 = vst [vmem:[%s375 + $0xb0] sm:$0xff] %v3342
          %3375 = vst [vmem:[%s375 + $0xb8] sm:$0xff] %v3343
          %3376 = vst [vmem:[%s375 + $0xc0] sm:$0xff] %v3344
          %3377 = vst [vmem:[%s375 + $0xc8] sm:$0xff] %v3345
          %3378 = vst [vmem:[%s375 + $0xd0] sm:$0xff] %v3346
          %3379 = vst [vmem:[%s375 + $0xd8] sm:$0xff] %v3347
          %3380 = vst [vmem:[%s375 + $0xe0] sm:$0xff] %v3348
          %3381 = vst [vmem:[%s375 + $0xe8] sm:$0xff] %v3349
          %3382 = vst [vmem:[%s375 + $0xf0] sm:$0xff] %v3350
          %3383 = vst [vmem:[%s375 + $0xf8] sm:$0xff] %v3351
        $region68: #{tpu_custom_call.1} parent=43 // pred_fallthru
          _
        %s3384 = sand.u32 %s196, 1
        %s3385 = scalar_lea.sflag [#allocation9], %s3384
        %s3386 = sand.u32 %s196, 1
        %s3387 = smul.addr %s3386, 256
        %s3388 = scalar_lea.vmem [#allocation15], %s3387
        // Predicated region
        $region69: #{tpu_custom_call.1} parent=43 // pred_check
          %p3389 = pneg %p206
        $region70: #{tpu_custom_call.1} parent=43 // pred_check_branch
          %3391 = sbr.rel (%p3389) target = $region72
        $region71: #{tpu_custom_call.1} parent=43 // pred_region
          %s3392 = smul.u32 32, %s33
          %3394 = vsyncadd %s3385, 0
          %s3395 = smul.addr %s32, 32
          %s3396 = sadd.s32 %s3392, %s3395
          %s3397 = smul.addr %s3396, 8
          %s3398 = scalar_lea.hbm %s6, %s3397
          %s3399 = sshll.u32 %s3388, 4
          %s3400 = int_to_ptr.vmem [resolvable:$true] %s3399
          %s3401 = sshll.u32 %s3398, 4
          %s3402 = int_to_ptr.hbm [resolvable:$true] %s3401
          %3407 = dma.vmem_to_hbm [thread:$0]  %s3400, 4096, %s3402, %s3385, 128, 128, 8
        $region72: #{tpu_custom_call.1} parent=43 // pred_fallthru
          _
      $region44: #{tpu_custom_call.1} parent=5 // pred_fallthru
        _
      %p3408 = scmp.le.s32.totalorder 2, %s22
      // Predicated region
      $region73: #{tpu_custom_call.1} parent=5 // pred_check
        %p3409 = pneg %p3408
      $region74: #{tpu_custom_call.1} parent=5 // pred_check_branch
        %3411 = sbr.rel (%p3409) target = $region76
      $region75: #{tpu_custom_call.1} parent=5 // pred_region
        %s3412 = ssub.s32 %s22, 2
        // Predicated region
        $region77: #{tpu_custom_call.1} parent=75 // pred_check
          %p3413 = pneg %p212
        $region78: #{tpu_custom_call.1} parent=75 // pred_check_branch
          %3415 = sbr.rel (%p3413) target = $region80
        $region79: #{tpu_custom_call.1} parent=75 // pred_region
          %s3416 = sand.u32 %s197, 1
          %s3417 = scalar_lea.sflag [#allocation9], %s3416
          %s3418 = sand.u32 %s197, 1
          %s3419 = smul.addr %s3418, 256
          %s3420 = scalar_lea.vmem [#allocation15], %s3419
          %3422 = dma.done %s3417, 4096
        $region80: #{tpu_custom_call.1} parent=75 // pred_fallthru
          _
      $region76: #{tpu_custom_call.1} parent=5 // pred_fallthru
        _
    $region6: #{tpu_custom_call.1} parent=1 // loop_footer
      %s26 = sadd.s32 1, %s22
    $region7: #{tpu_custom_call.1} parent=1 // loop_footer_branch
      %21 = sbr.rel target = $region3
    $region8: #{tpu_custom_call.1} parent=1 // loop_exit
      _
    %3423 = vsyncpa [#allocation8], 1
    %s3424 = scalar_lea.sflag [#allocation8], 1
    %3425 = vsyncpa %s3424, 1
    %3426 = vsyncpa [#allocation11], 1
    %s3427 = scalar_lea.sflag [#allocation11], 1
    %3428 = vsyncpa %s3427, 1
    %3429 = vsyncpa [#allocation14], 1
    %3430 = vsyncpa [#allocation9], 1
    %s3431 = scalar_lea.sflag [#allocation9], 1
    %3432 = vsyncpa %s3431, 1

</llo_original>
